<compile_context>
chip_gen: v7x
topology: tpu7x:2x2x1
jax: 0.10.0
libtpu: 0.0.40
codegen_flags: <defaults>
</compile_context>

<pallas_src>
import functools

import jax
import jax.numpy as jnp
from jax.experimental import pallas as pl
from jax.experimental.pallas import tpu as pltpu

# ---- module hyperparameters -------------------------------------------------
BLOCK_SIZE = 16          # block_size (max sequence length / causal mask size)
N_EMBD     = 96          # n_embd
HEAD_NUM   = 6
HEAD_SIZE  = 16          # head_num * head_size == n_embd
B          = 2           # batch
T          = BLOCK_SIZE  # sequence length used in the example

LANE = 128               # TPU lane width; used for lane-aligned padding


def _mha_kernel(x_ref, wqkv_ref, wp_ref, bp_ref, o_ref, *,
                batch, seq, heads, head_dim, qkv_stride):
    """Single grid step: full forward for all batch elements.

    x_ref    : (B*T, C)        bf16 input tokens, batches stacked along rows
    wqkv_ref : (C, 3*LANE)     bf16 fused [Wq*scale | Wk | Wv], each block
                               lane-aligned (real columns 0..C-1 of each block)
    wp_ref   : (C, LANE)       bf16 output projection weight, zero-padded cols
    bp_ref   : (1, LANE)       f32 output projection bias, zero-padded
    o_ref    : (B*T, LANE)     f32 lane-dense output slab
    """
    C = heads * head_dim
    x = x_ref[...]                                             # (B*T, C) bf16

    # Fused Q/K/V projection for all heads and all batches: one MXU pass.
    qkv = jnp.dot(x, wqkv_ref[...],
                  preferred_element_type=jnp.float32)          # (B*T, 3*LANE) f32
    q_all = qkv[:, 0 * qkv_stride: 0 * qkv_stride + C]         # scale pre-folded
    k_all = qkv[:, 1 * qkv_stride: 1 * qkv_stride + C]
    v_all = qkv[:, 2 * qkv_stride: 2 * qkv_stride + C]

    # Causal mask (tril): keep s <= t.  Large finite negative (no inf-inf NaN).
    rows = jax.lax.broadcasted_iota(jnp.int32, (seq, seq), 0)
    cols = jax.lax.broadcasted_iota(jnp.int32, (seq, seq), 1)
    causal = cols <= rows
    neg_big = jnp.float32(-1e30)

    outs = []
    for b in range(batch):                                     # static unroll (B=2)
        lo, hi = b * seq, (b + 1) * seq
        q = q_all[lo:hi].reshape(seq, heads, head_dim)         # (T, H, D)
        k = k_all[lo:hi].reshape(seq, heads, head_dim)
        v = v_all[lo:hi].reshape(seq, heads, head_dim)

        # Scores per head (scale already folded into Wq).
        wei = jnp.einsum("thd,shd->hts", q, k,
                         preferred_element_type=jnp.float32)   # (H, T, T)
        wei = jnp.where(causal[None, :, :], wei, neg_big)

        # Softmax over keys; divide replaced by EUP reciprocal.
        wei_max = jnp.max(wei, axis=-1, keepdims=True)
        p = jnp.exp(wei - wei_max)
        denom = jnp.sum(p, axis=-1, keepdims=True)
        p = p * pl.reciprocal(denom, approx=True)

        # (attention dropout: identity at inference)

        # Weighted sum of values, then concat heads back to (T, C).
        out_b = jnp.einsum("hts,shd->thd", p, v,
                           preferred_element_type=jnp.float32)  # (T, H, D)
        outs.append(out_b.reshape(seq, C))

    out_all = jnp.concatenate(outs, axis=0)                    # (B*T, C) f32

    # Output projection + bias, lane-dense (128-wide) store.
    # (final dropout: identity at inference)
    y = jnp.dot(out_all.astype(jnp.bfloat16), wp_ref[...],
                preferred_element_type=jnp.float32) + bp_ref[...]
    o_ref[...] = y.astype(o_ref.dtype)


def multi_head_attention(x, wq, wk, wv, wp, bp):
    """x: (B, T, C) f32; wq/wk/wv/wp: (C, C) (in, out); bp: (C,)."""
    Bx, Tx, Cx = x.shape
    H, D = HEAD_NUM, HEAD_SIZE
    assert Cx == H * D
    scale = float(D) ** -0.5

    # Fuse Q/K/V weights into one lane-aligned slab; fold the score scale
    # into Wq so the kernel never multiplies the (H,T,T) scores.
    wqkv = jnp.zeros((Cx, 3 * LANE), jnp.float32)
    wqkv = wqkv.at[:, 0 * LANE: 0 * LANE + Cx].set(wq * scale)
    wqkv = wqkv.at[:, 1 * LANE: 1 * LANE + Cx].set(wk)
    wqkv = wqkv.at[:, 2 * LANE: 2 * LANE + Cx].set(wv)
    wqkv = wqkv.astype(jnp.bfloat16)

    # Pad the output projection to a lane-dense 128-wide output.
    wp_pad = jnp.zeros((Cx, LANE), jnp.float32).at[:, :Cx].set(wp)
    wp_pad = wp_pad.astype(jnp.bfloat16)
    bp_pad = jnp.zeros((1, LANE), jnp.float32).at[0, :Cx].set(bp)

    # Stack batches along rows so both projections see M = B*T rows at once.
    x2 = x.reshape(Bx * Tx, Cx).astype(jnp.bfloat16)

    kernel = functools.partial(_mha_kernel, batch=Bx, seq=Tx,
                               heads=H, head_dim=D, qkv_stride=LANE)

    y = pl.pallas_call(
        kernel,
        out_shape=jax.ShapeDtypeStruct((Bx * Tx, LANE), jnp.float32),
        grid=(1,),
        in_specs=[
            pl.BlockSpec((Bx * Tx, Cx), lambda i: (0, 0)),   # x (bf16)
            pl.BlockSpec((Cx, 3 * LANE), lambda i: (0, 0)),  # fused Wqkv (bf16)
            pl.BlockSpec((Cx, LANE),     lambda i: (0, 0)),  # Wproj padded (bf16)
            pl.BlockSpec((1, LANE),      lambda i: (0, 0)),  # bproj padded (f32)
        ],
        out_specs=pl.BlockSpec((Bx * Tx, LANE), lambda i: (0, 0)),
        compiler_params=pltpu.CompilerParams(
            dimension_semantics=("arbitrary",)),
    )(x2, wqkv, wp_pad, bp_pad)

    return y[:, :Cx].reshape(Bx, Tx, Cx)


def reference_mha(x, wq, wk, wv, wp, bp):
    """Pure-JAX f32 reference mirroring the PyTorch forward (eval mode)."""
    Bx, Tx, Cx = x.shape
    H, D = HEAD_NUM, HEAD_SIZE
    q = (x @ wq).reshape(Bx, Tx, H, D)
    k = (x @ wk).reshape(Bx, Tx, H, D)
    v = (x @ wv).reshape(Bx, Tx, H, D)
    wei = jnp.einsum("bthd,bshd->bhts", q, k) * (D ** -0.5)
    mask = jnp.tril(jnp.ones((Tx, Tx), dtype=bool))
    wei = jnp.where(mask[None, None], wei, -jnp.inf)
    wei = jax.nn.softmax(wei, axis=-1)
    out = jnp.einsum("bhts,bshd->bthd", wei, v).reshape(Bx, Tx, Cx)
    return out @ wp + bp


if __name__ == "__main__":
    key = jax.random.PRNGKey(0)
    kx, kq, kk, kv, kp, kb = jax.random.split(key, 6)

    x  = jax.random.normal(kx, (B, T, N_EMBD), dtype=jnp.float32)
    # Deterministic parameter init (math convention: (in, out)).
    wq = jax.random.normal(kq, (N_EMBD, N_EMBD), dtype=jnp.float32) * 0.05
    wk = jax.random.normal(kk, (N_EMBD, N_EMBD), dtype=jnp.float32) * 0.05
    wv = jax.random.normal(kv, (N_EMBD, N_EMBD), dtype=jnp.float32) * 0.05
    wp = jax.random.normal(kp, (N_EMBD, N_EMBD), dtype=jnp.float32) * 0.05
    bp = jax.random.normal(kb, (N_EMBD,), dtype=jnp.float32) * 0.05

    y = multi_head_attention(x, wq, wk, wv, wp, bp)
    y = jax.block_until_ready(y)

    y_ref = reference_mha(x, wq, wk, wv, wp, bp)
    assert y.shape == (B, T, N_EMBD)
    # bf16 matmul operands + approx reciprocal -> loosened tolerance vs f32 ref.
    assert jnp.allclose(y, y_ref, atol=2e-2, rtol=2e-2), \
        f"max abs err {jnp.max(jnp.abs(y - y_ref))}"

    print("KERNEL_OK")
</pallas_src>

<mosaic_0001>
module attributes {stable_mosaic.version = 11 : i64} {
  func.func @_mha_kernel(%arg0: i32, %arg1: memref<32x96xbf16, #tpu.memory_space<vmem>>, %arg2: memref<96x384xbf16, #tpu.memory_space<vmem>>, %arg3: memref<96x128xbf16, #tpu.memory_space<vmem>>, %arg4: memref<1x128xf32, #tpu.memory_space<vmem>>, %arg5: memref<32x128xf32, #tpu.memory_space<vmem>>) attributes {dimension_semantics = [#tpu.dimension_semantics<arbitrary>], iteration_bounds = array<i64: 1>, scalar_prefetch = 0 : i64, scratch_operands = 0 : i64, tpu.core_type = #tpu.core_type<tc>, window_params = [{pipeline_mode = #tpu.pipeline_mode<synchronous>, transform_indices = @transform_0, window_bounds = array<i64: 32, 96>}, {pipeline_mode = #tpu.pipeline_mode<synchronous>, transform_indices = @transform_1, window_bounds = array<i64: 96, 384>}, {pipeline_mode = #tpu.pipeline_mode<synchronous>, transform_indices = @transform_2, window_bounds = array<i64: 96, 128>}, {pipeline_mode = #tpu.pipeline_mode<synchronous>, transform_indices = @transform_3, window_bounds = array<i64: 1, 128>}, {pipeline_mode = #tpu.pipeline_mode<synchronous>, transform_indices = @transform_4, window_bounds = array<i64: 32, 128>}]} {
    %c0 = arith.constant 0 : index
    %c0_0 = arith.constant 0 : index
    %0 = vector.load %arg1[%c0, %c0_0] : memref<32x96xbf16, #tpu.memory_space<vmem>>, vector<32x96xbf16>
    %c0_1 = arith.constant 0 : index
    %c0_2 = arith.constant 0 : index
    %1 = vector.load %arg2[%c0_1, %c0_2] : memref<96x384xbf16, #tpu.memory_space<vmem>>, vector<96x384xbf16>
    %cst = arith.constant dense<0.000000e+00> : vector<32x384xf32>
    %2 = tpu.matmul %0, %1, %cst {dimension_numbers = #tpu.dot_dimension_numbers<[1], [0], [0], [1], [0, 0, 1, 1], [], []>} : vector<32x96xbf16>, vector<96x384xbf16>, vector<32x384xf32> -> vector<32x384xf32>
    %3 = vector.extract_strided_slice %2 {offsets = [0, 0], sizes = [32, 96], strides = [1, 1]} : vector<32x384xf32> to vector<32x96xf32>
    %4 = vector.extract_strided_slice %2 {offsets = [0, 128], sizes = [32, 96], strides = [1, 1]} : vector<32x384xf32> to vector<32x96xf32>
    %5 = vector.extract_strided_slice %2 {offsets = [0, 256], sizes = [32, 96], strides = [1, 1]} : vector<32x384xf32> to vector<32x96xf32>
    %6 = tpu.iota {dimensions = array<i32: 0>} : vector<16x16xi32>
    %7 = tpu.iota {dimensions = array<i32: 1>} : vector<16x16xi32>
    %8 = arith.cmpi sle, %7, %6 : vector<16x16xi32>
    %9 = vector.extract_strided_slice %3 {offsets = [0, 0], sizes = [16, 96], strides = [1, 1]} : vector<32x96xf32> to vector<16x96xf32>
    %10 = vector.shape_cast %9 : vector<16x96xf32> to vector<16x6x16xf32>
    %11 = vector.extract_strided_slice %4 {offsets = [0, 0], sizes = [16, 96], strides = [1, 1]} : vector<32x96xf32> to vector<16x96xf32>
    %12 = vector.shape_cast %11 : vector<16x96xf32> to vector<16x6x16xf32>
    %13 = vector.extract_strided_slice %5 {offsets = [0, 0], sizes = [16, 96], strides = [1, 1]} : vector<32x96xf32> to vector<16x96xf32>
    %14 = vector.shape_cast %13 : vector<16x96xf32> to vector<16x6x16xf32>
    "tpu.trace_start"() <{level = 10 : i32, message = "thd,shd->hts"}> : () -> ()
    %cst_3 = arith.constant dense<0.000000e+00> : vector<6x16x16xf32>
    %15 = tpu.matmul %10, %12, %cst_3 {dimension_numbers = #tpu.dot_dimension_numbers<[2], [2], [0], [0], [0, 1, 0, 0, 1, 0], [1], [1]>} : vector<16x6x16xf32>, vector<16x6x16xf32>, vector<6x16x16xf32> -> vector<6x16x16xf32>
    "tpu.trace_stop"() : () -> ()
    %16 = vector.shape_cast %8 : vector<16x16xi1> to vector<1x16x16xi1>
    %cst_4 = arith.constant -1.000000e+30 : f32
    %17 = vector.shape_cast %16 : vector<1x16x16xi1> to vector<1x16x16xi1>
    %18 = vector.broadcast %17 : vector<1x16x16xi1> to vector<6x16x16xi1>
    %19 = vector.broadcast %cst_4 : f32 to vector<6x16x16xf32>
    %20 = arith.select %18, %15, %19 : vector<6x16x16xi1>, vector<6x16x16xf32>
    %cst_5 = arith.constant dense<0xFF800000> : vector<6x16xf32>
    %21 = vector.multi_reduction <maximumf>, %20, %cst_5 [2] : vector<6x16x16xf32> to vector<6x16xf32>
    %22 = vector.shape_cast %21 : vector<6x16xf32> to vector<6x16x1xf32>
    %23 = vector.broadcast %22 : vector<6x16x1xf32> to vector<6x16x16xf32>
    %24 = arith.subf %20, %23 : vector<6x16x16xf32>
    %25 = math.exp %24 : vector<6x16x16xf32>
    %cst_6 = arith.constant dense<0.000000e+00> : vector<6x16xf32>
    %26 = vector.multi_reduction <add>, %25, %cst_6 [2] : vector<6x16x16xf32> to vector<6x16xf32>
    %27 = vector.shape_cast %26 : vector<6x16xf32> to vector<6x16x1xf32>
    %28 = tpu.reciprocal %27 {approx = true} : vector<6x16x1xf32> -> vector<6x16x1xf32>
    %29 = vector.broadcast %28 : vector<6x16x1xf32> to vector<6x16x16xf32>
    %30 = arith.mulf %25, %29 : vector<6x16x16xf32>
    "tpu.trace_start"() <{level = 10 : i32, message = "hts,shd->thd"}> : () -> ()
    %cst_7 = arith.constant dense<0.000000e+00> : vector<6x16x16xf32>
    %31 = tpu.matmul %14, %30, %cst_7 {dimension_numbers = #tpu.dot_dimension_numbers<[0], [2], [2], [1], [0, 1, 0, 2, 1, 1], [1], [0]>} : vector<16x6x16xf32>, vector<6x16x16xf32>, vector<6x16x16xf32> -> vector<6x16x16xf32>
    %32 = tpu.transpose %31, [2, 0, 1] : vector<6x16x16xf32> -> vector<16x6x16xf32>
    "tpu.trace_stop"() : () -> ()
    %33 = vector.shape_cast %32 : vector<16x6x16xf32> to vector<16x96xf32>
    %34 = vector.extract_strided_slice %3 {offsets = [16, 0], sizes = [16, 96], strides = [1, 1]} : vector<32x96xf32> to vector<16x96xf32>
    %35 = vector.shape_cast %34 : vector<16x96xf32> to vector<16x6x16xf32>
    %36 = vector.extract_strided_slice %4 {offsets = [16, 0], sizes = [16, 96], strides = [1, 1]} : vector<32x96xf32> to vector<16x96xf32>
    %37 = vector.shape_cast %36 : vector<16x96xf32> to vector<16x6x16xf32>
    %38 = vector.extract_strided_slice %5 {offsets = [16, 0], sizes = [16, 96], strides = [1, 1]} : vector<32x96xf32> to vector<16x96xf32>
    %39 = vector.shape_cast %38 : vector<16x96xf32> to vector<16x6x16xf32>
    "tpu.trace_start"() <{level = 10 : i32, message = "thd,shd->hts"}> : () -> ()
    %cst_8 = arith.constant dense<0.000000e+00> : vector<6x16x16xf32>
    %40 = tpu.matmul %35, %37, %cst_8 {dimension_numbers = #tpu.dot_dimension_numbers<[2], [2], [0], [0], [0, 1, 0, 0, 1, 0], [1], [1]>} : vector<16x6x16xf32>, vector<16x6x16xf32>, vector<6x16x16xf32> -> vector<6x16x16xf32>
    "tpu.trace_stop"() : () -> ()
    %41 = vector.shape_cast %8 : vector<16x16xi1> to vector<1x16x16xi1>
    %cst_9 = arith.constant -1.000000e+30 : f32
    %42 = vector.shape_cast %41 : vector<1x16x16xi1> to vector<1x16x16xi1>
    %43 = vector.broadcast %42 : vector<1x16x16xi1> to vector<6x16x16xi1>
    %44 = vector.broadcast %cst_9 : f32 to vector<6x16x16xf32>
    %45 = arith.select %43, %40, %44 : vector<6x16x16xi1>, vector<6x16x16xf32>
    %cst_10 = arith.constant dense<0xFF800000> : vector<6x16xf32>
    %46 = vector.multi_reduction <maximumf>, %45, %cst_10 [2] : vector<6x16x16xf32> to vector<6x16xf32>
    %47 = vector.shape_cast %46 : vector<6x16xf32> to vector<6x16x1xf32>
    %48 = vector.broadcast %47 : vector<6x16x1xf32> to vector<6x16x16xf32>
    %49 = arith.subf %45, %48 : vector<6x16x16xf32>
    %50 = math.exp %49 : vector<6x16x16xf32>
    %cst_11 = arith.constant dense<0.000000e+00> : vector<6x16xf32>
    %51 = vector.multi_reduction <add>, %50, %cst_11 [2] : vector<6x16x16xf32> to vector<6x16xf32>
    %52 = vector.shape_cast %51 : vector<6x16xf32> to vector<6x16x1xf32>
    %53 = tpu.reciprocal %52 {approx = true} : vector<6x16x1xf32> -> vector<6x16x1xf32>
    %54 = vector.broadcast %53 : vector<6x16x1xf32> to vector<6x16x16xf32>
    %55 = arith.mulf %50, %54 : vector<6x16x16xf32>
    "tpu.trace_start"() <{level = 10 : i32, message = "hts,shd->thd"}> : () -> ()
    %cst_12 = arith.constant dense<0.000000e+00> : vector<6x16x16xf32>
    %56 = tpu.matmul %39, %55, %cst_12 {dimension_numbers = #tpu.dot_dimension_numbers<[0], [2], [2], [1], [0, 1, 0, 2, 1, 1], [1], [0]>} : vector<16x6x16xf32>, vector<6x16x16xf32>, vector<6x16x16xf32> -> vector<6x16x16xf32>
    %57 = tpu.transpose %56, [2, 0, 1] : vector<6x16x16xf32> -> vector<16x6x16xf32>
    "tpu.trace_stop"() : () -> ()
    %58 = vector.shape_cast %57 : vector<16x6x16xf32> to vector<16x96xf32>
    %59 = tpu.concatenate %33, %58 in 0 : vector<16x96xf32>, vector<16x96xf32> -> vector<32x96xf32>
    %60 = arith.truncf %59 : vector<32x96xf32> to vector<32x96xbf16>
    %c0_13 = arith.constant 0 : index
    %c0_14 = arith.constant 0 : index
    %61 = vector.load %arg3[%c0_13, %c0_14] : memref<96x128xbf16, #tpu.memory_space<vmem>>, vector<96x128xbf16>
    %cst_15 = arith.constant dense<0.000000e+00> : vector<32x128xf32>
    %62 = tpu.matmul %60, %61, %cst_15 {dimension_numbers = #tpu.dot_dimension_numbers<[1], [0], [0], [1], [0, 0, 1, 1], [], []>} : vector<32x96xbf16>, vector<96x128xbf16>, vector<32x128xf32> -> vector<32x128xf32>
    %c0_16 = arith.constant 0 : index
    %c0_17 = arith.constant 0 : index
    %63 = vector.load %arg4[%c0_16, %c0_17] : memref<1x128xf32, #tpu.memory_space<vmem>>, vector<1x128xf32>
    %64 = vector.broadcast %63 : vector<1x128xf32> to vector<32x128xf32>
    %65 = arith.addf %62, %64 : vector<32x128xf32>
    %c0_18 = arith.constant 0 : index
    %c0_19 = arith.constant 0 : index
    %66 = vector.load %arg5[%c0_18, %c0_19] : memref<32x128xf32, #tpu.memory_space<vmem>>, vector<32x128xf32>
    tpu.vector_store %arg5[%c0_18, %c0_19], %65 {strides = array<i32>} : memref<32x128xf32, #tpu.memory_space<vmem>>, vector<32x128xf32>,
    return
  }
  func.func @transform_0(%arg0: i32) -> (i32, i32) {
    %c0_i32 = arith.constant 0 : i32
    %c0_i32_0 = arith.constant 0 : i32
    %c0_i32_1 = arith.constant 0 : i32
    return %c0_i32, %c0_i32_0 : i32, i32
  }
  func.func @transform_1(%arg0: i32) -> (i32, i32) {
    %c0_i32 = arith.constant 0 : i32
    %c0_i32_0 = arith.constant 0 : i32
    %c0_i32_1 = arith.constant 0 : i32
    return %c0_i32, %c0_i32_0 : i32, i32
  }
  func.func @transform_2(%arg0: i32) -> (i32, i32) {
    %c0_i32 = arith.constant 0 : i32
    %c0_i32_0 = arith.constant 0 : i32
    %c0_i32_1 = arith.constant 0 : i32
    return %c0_i32, %c0_i32_0 : i32, i32
  }
  func.func @transform_3(%arg0: i32) -> (i32, i32) {
    %c0_i32 = arith.constant 0 : i32
    %c0_i32_0 = arith.constant 0 : i32
    %c0_i32_1 = arith.constant 0 : i32
    return %c0_i32, %c0_i32_0 : i32, i32
  }
  func.func @transform_4(%arg0: i32) -> (i32, i32) {
    %c0_i32 = arith.constant 0 : i32
    %c0_i32_0 = arith.constant 0 : i32
    %c0_i32_1 = arith.constant 0 : i32
    return %c0_i32, %c0_i32_0 : i32, i32
  }
}

</mosaic_0001>

<llo_original>
// kernel: tpu_custom_call.1
$region0: #{tpu_custom_call.1}
  #allocation0 [shape = 'u32[]', space=smem, size = 0x4, offset = 0x4, fixed_abs, tag = 'smem constant byte address 0x4 - core index']
  #allocation1 [shape = 'u32[144,128]{1,0:T(1,128)}', space=vmem, size = 0x12000, scoped, tag = 'internal scratch']
  %s0 = inlined_call_operand.hbm [shape: bf16[32,96], index: 0, kind: input, shape index: {}]
  %s1 = inlined_call_operand.hbm [shape: bf16[96,384], index: 1, kind: input, shape index: {}]
  %s2 = inlined_call_operand.hbm [shape: bf16[96,128], index: 2, kind: input, shape index: {}]
  %s3 = inlined_call_operand.vmem [shape: f32[1,128], index: 3, kind: input, shape index: {}]
  %s4 = inlined_call_operand.hbm [shape: f32[32,128], index: 4, kind: output, shape index: {}]
  %s5 = sld [smem:[#allocation0]]
  $region38: #{tpu_custom_call.1} parent=0
    _
  %s7 = ssub.s32 1, %s5
  %s8 = scalar_select 0, %s7, %s5
  $region1: #{tpu_custom_call.1} parent=0
    #allocation2 [shape = 'u8[8192]{0}', space=vmem, size = 0x2000, scoped, tag = 'input window, operand 0, single buffered']
    #allocation3 [shape = 's32[1]{0}', space=sflag, size = 0x4, scoped, tag = 'scoped memory for tpu_custom_call.1']
    #allocation4 [shape = 's32[1]{0}', space=sflag, size = 0x4, scoped, tag = 'scoped memory for tpu_custom_call.1']
    #allocation5 [shape = 'u8[73728]{0}', space=vmem, size = 0x12000, scoped, tag = 'input window, operand 1, single buffered']
    #allocation6 [shape = 's32[1]{0}', space=sflag, size = 0x4, scoped, tag = 'scoped memory for tpu_custom_call.1']
    #allocation7 [shape = 'u8[24576]{0}', space=vmem, size = 0x6000, scoped, tag = 'input window, operand 2, single buffered']
    #allocation8 [shape = 'u8[16384]{0}', space=vmem, size = 0x4000, scoped, tag = 'output window, operand 0, single buffered']
    %9 = vsyncpa [#allocation3], 0
    %10 = vsyncpa [#allocation6], 0
    %11 = vsyncpa [#allocation4], 0
    // Predicated region
    $region2: #{tpu_custom_call.1} parent=1 // pred_check
      _
    $region3: #{tpu_custom_call.1} parent=1 // pred_check_branch
      %13 = sbr.rel (0) target = $region5
    $region4: #{tpu_custom_call.1} parent=1 // pred_region
      %s15 = ssub.s32 256, 256
      %16 = vsyncadd [#allocation3], %s15
      %s17 = sshll.u32 [#allocation2], 4
      %s18 = int_to_ptr.vmem [resolvable:$true] %s17
      %23 = dma.hbm_to_vmem [thread:$0]  %s0, 256, %s18, [#allocation3], 64, 64, 4
    $region5: #{tpu_custom_call.1} parent=1 // pred_fallthru
      _
    // Predicated region
    $region6: #{tpu_custom_call.1} parent=1 // pred_check
      _
    $region7: #{tpu_custom_call.1} parent=1 // pred_check_branch
      %25 = sbr.rel (0) target = $region9
    $region8: #{tpu_custom_call.1} parent=1 // pred_region
      %s27 = ssub.s32 2304, 2304
      %28 = vsyncadd [#allocation6], %s27
      %s29 = sshll.u32 [#allocation5], 4
      %s30 = int_to_ptr.vmem [resolvable:$true] %s29
      %35 = dma.hbm_to_vmem [thread:$0]  %s1, 2304, %s30, [#allocation6], 192, 192, 12
    $region9: #{tpu_custom_call.1} parent=1 // pred_fallthru
      _
    // Predicated region
    $region10: #{tpu_custom_call.1} parent=1 // pred_check
      _
    $region11: #{tpu_custom_call.1} parent=1 // pred_check_branch
      %37 = sbr.rel (0) target = $region13
    $region12: #{tpu_custom_call.1} parent=1 // pred_region
      %s39 = ssub.s32 768, 768
      %40 = vsyncadd [#allocation6], %s39
      %s41 = sshll.u32 [#allocation7], 4
      %s42 = int_to_ptr.vmem [resolvable:$true] %s41
      %47 = dma.hbm_to_vmem [thread:$0]  %s2, 768, %s42, [#allocation6], 64, 64, 4
    $region13: #{tpu_custom_call.1} parent=1 // pred_fallthru
      _
    // Predicated region
    $region14: #{tpu_custom_call.1} parent=1 // pred_check
      _
    $region15: #{tpu_custom_call.1} parent=1 // pred_check_branch
      %49 = sbr.rel (0) target = $region17
    $region16: #{tpu_custom_call.1} parent=1 // pred_region
      _
    $region17: #{tpu_custom_call.1} parent=1 // pred_fallthru
      _
    // Predicated region
    $region18: #{tpu_custom_call.1} parent=1 // pred_check
      _
    $region19: #{tpu_custom_call.1} parent=1 // pred_check_branch
      %51 = sbr.rel (0) target = $region21
    $region20: #{tpu_custom_call.1} parent=1 // pred_region
      %52 = dma.done [#allocation3], 256
    $region21: #{tpu_custom_call.1} parent=1 // pred_fallthru
      _
    // Predicated region
    $region22: #{tpu_custom_call.1} parent=1 // pred_check
      _
    $region23: #{tpu_custom_call.1} parent=1 // pred_check_branch
      %54 = sbr.rel (0) target = $region25
    $region24: #{tpu_custom_call.1} parent=1 // pred_region
      %55 = dma.done [#allocation6], 2304
    $region25: #{tpu_custom_call.1} parent=1 // pred_fallthru
      _
    // Predicated region
    $region26: #{tpu_custom_call.1} parent=1 // pred_check
      _
    $region27: #{tpu_custom_call.1} parent=1 // pred_check_branch
      %57 = sbr.rel (0) target = $region29
    $region28: #{tpu_custom_call.1} parent=1 // pred_region
      %58 = dma.done [#allocation6], 768
    $region29: #{tpu_custom_call.1} parent=1 // pred_fallthru
      _
    %v60 = vld [vmem:[#allocation2] sm:$0xf]
    %v61 = vld [vmem:[#allocation2 + $0x4] sm:$0xf]
    %v62 = vld [vmem:[#allocation2 + $0x8] sm:$0xf]
    %v63 = vld [vmem:[#allocation2 + $0xc] sm:$0xf]
    %v64 = vld [vmem:[#allocation5] sm:$0xff]
    %v65 = vld [vmem:[#allocation5 + $0x8] sm:$0xf]
    %v66 = vld [vmem:[#allocation5 + $0xc] sm:$0xff]
    %v67 = vld [vmem:[#allocation5 + $0x14] sm:$0xf]
    %v68 = vld [vmem:[#allocation5 + $0x18] sm:$0xff]
    %v69 = vld [vmem:[#allocation5 + $0x20] sm:$0xf]
    %v70 = vld [vmem:[#allocation5 + $0x24] sm:$0xff]
    %v71 = vld [vmem:[#allocation5 + $0x2c] sm:$0xf]
    %v72 = vld [vmem:[#allocation5 + $0x30] sm:$0xff]
    %v73 = vld [vmem:[#allocation5 + $0x38] sm:$0xf]
    %v74 = vld [vmem:[#allocation5 + $0x3c] sm:$0xff]
    %v75 = vld [vmem:[#allocation5 + $0x44] sm:$0xf]
    %v76 = vld [vmem:[#allocation5 + $0x48] sm:$0xff]
    %v77 = vld [vmem:[#allocation5 + $0x50] sm:$0xf]
    %v78 = vld [vmem:[#allocation5 + $0x54] sm:$0xff]
    %v79 = vld [vmem:[#allocation5 + $0x5c] sm:$0xf]
    %v80 = vld [vmem:[#allocation5 + $0x60] sm:$0xff]
    %v81 = vld [vmem:[#allocation5 + $0x68] sm:$0xf]
    %v82 = vld [vmem:[#allocation5 + $0x6c] sm:$0xff]
    %v83 = vld [vmem:[#allocation5 + $0x74] sm:$0xf]
    %v84 = vld [vmem:[#allocation5 + $0x78] sm:$0xff]
    %v85 = vld [vmem:[#allocation5 + $0x80] sm:$0xf]
    %v86 = vld [vmem:[#allocation5 + $0x84] sm:$0xff]
    %v87 = vld [vmem:[#allocation5 + $0x8c] sm:$0xf]
    %v92 = vunpack.c.l.b16 %v60
    %v93 = vunpack.c.l.b16 %v61
    %v94 = vunpack.c.l.b16 %v62
    %v95 = vunpack.c.l.b16 %v63
    %v96 = vpack.c.b16 %v93, %v92
    %v97 = vpack.c.b16 %v95, %v94
    %v122 = vunpack.c.l.b16 %v64
    %v123 = vunpack.c.h.b16 %v64
    %v124 = vunpack.c.l.b16 %v65
    %v125 = vunpack.c.l.b16 %v66
    %v126 = vunpack.c.h.b16 %v66
    %v127 = vunpack.c.l.b16 %v67
    %v128 = vunpack.c.l.b16 %v68
    %v129 = vunpack.c.h.b16 %v68
    %v130 = vunpack.c.l.b16 %v69
    %v131 = vunpack.c.l.b16 %v70
    %v132 = vunpack.c.h.b16 %v70
    %v133 = vunpack.c.l.b16 %v71
    %v134 = vunpack.c.l.b16 %v72
    %v135 = vunpack.c.h.b16 %v72
    %v136 = vunpack.c.l.b16 %v73
    %v137 = vunpack.c.l.b16 %v74
    %v138 = vunpack.c.h.b16 %v74
    %v139 = vunpack.c.l.b16 %v75
    %v140 = vunpack.c.l.b16 %v76
    %v141 = vunpack.c.h.b16 %v76
    %v142 = vunpack.c.l.b16 %v77
    %v143 = vunpack.c.l.b16 %v78
    %v144 = vunpack.c.h.b16 %v78
    %v145 = vunpack.c.l.b16 %v79
    %v146 = vunpack.c.l.b16 %v80
    %v147 = vunpack.c.h.b16 %v80
    %v148 = vunpack.c.l.b16 %v81
    %v149 = vunpack.c.l.b16 %v82
    %v150 = vunpack.c.h.b16 %v82
    %v151 = vunpack.c.l.b16 %v83
    %v152 = vunpack.c.l.b16 %v84
    %v153 = vunpack.c.h.b16 %v84
    %v154 = vunpack.c.l.b16 %v85
    %v155 = vunpack.c.l.b16 %v86
    %v156 = vunpack.c.h.b16 %v86
    %v157 = vunpack.c.l.b16 %v87
    %v158 = vpack.c.b16 %v125, %v122
    %v159 = vpack.c.b16 %v126, %v123
    %v160 = vpack.c.b16 %v127, %v124
    %v161 = vpack.c.b16 %v131, %v128
    %v162 = vpack.c.b16 %v132, %v129
    %v163 = vpack.c.b16 %v133, %v130
    %v164 = vpack.c.b16 %v137, %v134
    %v165 = vpack.c.b16 %v138, %v135
    %v166 = vpack.c.b16 %v139, %v136
    %v167 = vpack.c.b16 %v143, %v140
    %v168 = vpack.c.b16 %v144, %v141
    %v169 = vpack.c.b16 %v145, %v142
    %v170 = vpack.c.b16 %v149, %v146
    %v171 = vpack.c.b16 %v150, %v147
    %v172 = vpack.c.b16 %v151, %v148
    %v173 = vpack.c.b16 %v155, %v152
    %v174 = vpack.c.b16 %v156, %v153
    %v175 = vpack.c.b16 %v157, %v154
    %vm194 = vcmask 785408
    %v196 = vsel %vm194, %v96, 0
    %v199 = vsel %vm194, %v97, 0
    %201 = vmatprep.subr.bf16.mxu0 %v159
    %202 = vmatpush1.bf16.msra.mxu0 %v158
    %203 = vmatprep.subr.bf16.mxu0 %v162
    %204 = vmatpush1.bf16.msra.mxu0 %v161
    %205 = vmatprep.subr.bf16.mxu0 %v165
    %206 = vmatpush1.bf16.msra.mxu0 %v164
    %207 = vmatprep.subr.bf16.mxu0 %v168
    %208 = vmatpush1.bf16.msra.mxu0 %v167
    %209 = vmatprep.subr.bf16.mxu0 %v171
    %210 = vmatpush1.bf16.msra.mxu0 %v170
    %211 = vmatprep.subr.bf16.mxu0 %v174
    %212 = vmatpush1.bf16.msra.mxu0 %v173
    %213 = vmatprep.subr.bf16.mxu0 0
    %214 = vmatpush1.bf16.msra.mxu0 0
    %215 = vmatprep.subr.bf16.mxu0 0
    %216 = vmatpush1.bf16.msra.mxu0 0
    %217 = vmatprep.subr.bf16.mxu0 0
    %218 = vmatpush1.bf16.msra.mxu0 0
    %219 = vmatprep.subr.bf16.mxu0 0
    %220 = vmatpush1.bf16.msra.mxu0 0
    %221 = vmatprep.subr.bf16.mxu0 0
    %222 = vmatpush1.bf16.msra.mxu0 0
    %223 = vmatprep.subr.bf16.mxu0 0
    %224 = vmatpush1.bf16.msra.mxu0 0
    %225 = vmatprep.subr.bf16.mxu0 0
    %226 = vmatpush1.bf16.msra.mxu0 0
    %227 = vmatprep.subr.bf16.mxu0 0
    %228 = vmatpush1.bf16.msra.mxu0 0
    %229 = vmatprep.subr.bf16.mxu0 0
    %230 = vmatpush1.bf16.msra.mxu0 0
    %231 = vmatprep.subr.bf16.mxu0 0
    %232 = vmatpush1.bf16.msra.mxu0 0
    %233 = vmatprep.mubr.bf16.mxu0 0
    %234 = vmatmul.mubr.bf16.gmra.mrb[0].mxu0 %v196
    %v235 = vpop.f32.mrb[0].mxu0
    %v236 = vadd.f32 0.0, %v235
    %v237 = vpop.f32.mrb[0].mxu0
    %v238 = vadd.f32 0.0, %v237
    %v239 = vpop.f32.mrb[0].mxu0
    %v240 = vadd.f32 0.0, %v239
    %v241 = vpop.f32.mrb[0].mxu0
    %v242 = vadd.f32 0.0, %v241
    %243 = vmatprep.mubr.bf16.mxu0 0
    %244 = vmatmul.mubr.bf16.gmra.mrb[0].mxu0 %v199
    %v245 = vpop.f32.mrb[0].mxu0
    %v246 = vadd.f32 0.0, %v245
    %v247 = vpop.f32.mrb[0].mxu0
    %v248 = vadd.f32 0.0, %v247
    %v249 = vpop.f32.mrb[0].mxu0
    %v250 = vadd.f32 0.0, %v249
    %v251 = vpop.f32.mrb[0].mxu0
    %v252 = vadd.f32 0.0, %v251
    %253 = vdwg.mxu0
    %254 = vmatprep.subr.bf16.mxu0 0
    %255 = vmatpush1.bf16.msra.mxu0 %v160
    %256 = vmatprep.subr.bf16.mxu0 0
    %257 = vmatpush1.bf16.msra.mxu0 %v163
    %258 = vmatprep.subr.bf16.mxu0 0
    %259 = vmatpush1.bf16.msra.mxu0 %v166
    %260 = vmatprep.subr.bf16.mxu0 0
    %261 = vmatpush1.bf16.msra.mxu0 %v169
    %262 = vmatprep.subr.bf16.mxu0 0
    %263 = vmatpush1.bf16.msra.mxu0 %v172
    %264 = vmatprep.subr.bf16.mxu0 0
    %265 = vmatpush1.bf16.msra.mxu0 %v175
    %266 = vmatprep.subr.bf16.mxu0 0
    %267 = vmatpush1.bf16.msra.mxu0 0
    %268 = vmatprep.subr.bf16.mxu0 0
    %269 = vmatpush1.bf16.msra.mxu0 0
    %270 = vmatprep.subr.bf16.mxu0 0
    %271 = vmatpush1.bf16.msra.mxu0 0
    %272 = vmatprep.subr.bf16.mxu0 0
    %273 = vmatpush1.bf16.msra.mxu0 0
    %274 = vmatprep.subr.bf16.mxu0 0
    %275 = vmatpush1.bf16.msra.mxu0 0
    %276 = vmatprep.subr.bf16.mxu0 0
    %277 = vmatpush1.bf16.msra.mxu0 0
    %278 = vmatprep.subr.bf16.mxu0 0
    %279 = vmatpush1.bf16.msra.mxu0 0
    %280 = vmatprep.subr.bf16.mxu0 0
    %281 = vmatpush1.bf16.msra.mxu0 0
    %282 = vmatprep.subr.bf16.mxu0 0
    %283 = vmatpush1.bf16.msra.mxu0 0
    %284 = vmatprep.subr.bf16.mxu0 0
    %285 = vmatpush1.bf16.msra.mxu0 0
    %286 = vmatprep.mubr.bf16.mxu0 0
    %287 = vmatmul.mubr.bf16.gmra.mrb[0].mxu0 %v196
    %v288 = vpop.f32.mrb[0].mxu0
    %v289 = vadd.f32 0.0, %v288
    %v290 = vpop.f32.mrb[0].mxu0
    %v291 = vpop.f32.mrb[0].mxu0
    %v292 = vadd.f32 0.0, %v291
    %v293 = vpop.f32.mrb[0].mxu0
    %294 = vmatprep.mubr.bf16.mxu0 0
    %295 = vmatmul.mubr.bf16.gmra.mrb[0].mxu0 %v199
    %v296 = vpop.f32.mrb[0].mxu0
    %v297 = vadd.f32 0.0, %v296
    %v298 = vpop.f32.mrb[0].mxu0
    %v299 = vpop.f32.mrb[0].mxu0
    %v300 = vadd.f32 0.0, %v299
    %v301 = vpop.f32.mrb[0].mxu0
    %302 = vdwg.mxu0
    %v303 = vlaneseq
    %v304 = vshrl.u32 %v303, 7
    %v305 = vadd.s32 %v304, 8
    %v306 = vlaneseq
    %v307 = vand.u32 %v306, 127
    %vm308 = vcmp.le.s32.totalorder %v307, %v304
    %vm309 = vcmp.le.s32.totalorder %v307, %v305
    %312 = vrot.lane.b32.xlu0 %v236, 112
    %v313 = vpop.permute.xlu0 %312
    %314 = vrot.lane.b32.xlu0 %v240, 112
    %v315 = vpop.permute.xlu0 %314
    %316 = vrot.lane.b32.xlu0 %v236, 96
    %v317 = vpop.permute.xlu0 %316
    %318 = vrot.lane.b32.xlu0 %v240, 96
    %v319 = vpop.permute.xlu0 %318
    %320 = vrot.lane.b32.xlu0 %v236, 80
    %v321 = vpop.permute.xlu0 %320
    %322 = vrot.lane.b32.xlu0 %v240, 80
    %v323 = vpop.permute.xlu0 %322
    %324 = vrot.lane.b32.xlu0 %v236, 64
    %v325 = vpop.permute.xlu0 %324
    %326 = vrot.lane.b32.xlu0 %v240, 64
    %v327 = vpop.permute.xlu0 %326
    %328 = vrot.lane.b32.xlu0 %v236, 48
    %v329 = vpop.permute.xlu0 %328
    %330 = vrot.lane.b32.xlu0 %v240, 48
    %v331 = vpop.permute.xlu0 %330
    %334 = vrot.lane.b32.xlu0 %v238, 112
    %v335 = vpop.permute.xlu0 %334
    %336 = vrot.lane.b32.xlu0 %v242, 112
    %v337 = vpop.permute.xlu0 %336
    %340 = vrot.lane.b32.xlu0 %v238, 96
    %v341 = vpop.permute.xlu0 %340
    %342 = vrot.lane.b32.xlu0 %v242, 96
    %v343 = vpop.permute.xlu0 %342
    %346 = vrot.lane.b32.xlu0 %v238, 80
    %v347 = vpop.permute.xlu0 %346
    %348 = vrot.lane.b32.xlu0 %v242, 80
    %v349 = vpop.permute.xlu0 %348
    %352 = vrot.lane.b32.xlu0 %v238, 64
    %v353 = vpop.permute.xlu0 %352
    %354 = vrot.lane.b32.xlu0 %v242, 64
    %v355 = vpop.permute.xlu0 %354
    %358 = vrot.lane.b32.xlu0 %v238, 48
    %v359 = vpop.permute.xlu0 %358
    %360 = vrot.lane.b32.xlu0 %v242, 48
    %v361 = vpop.permute.xlu0 %360
    %366 = vrot.lane.b32.xlu0 %v289, 112
    %v367 = vpop.permute.xlu0 %366
    %368 = vrot.lane.b32.xlu0 %v292, 112
    %v369 = vpop.permute.xlu0 %368
    %372 = vrot.lane.b32.xlu0 %v289, 96
    %v373 = vpop.permute.xlu0 %372
    %374 = vrot.lane.b32.xlu0 %v292, 96
    %v375 = vpop.permute.xlu0 %374
    %378 = vrot.lane.b32.xlu0 %v289, 80
    %v379 = vpop.permute.xlu0 %378
    %380 = vrot.lane.b32.xlu0 %v292, 80
    %v381 = vpop.permute.xlu0 %380
    %384 = vrot.lane.b32.xlu0 %v289, 64
    %v385 = vpop.permute.xlu0 %384
    %386 = vrot.lane.b32.xlu0 %v292, 64
    %v387 = vpop.permute.xlu0 %386
    %390 = vrot.lane.b32.xlu0 %v289, 48
    %v391 = vpop.permute.xlu0 %390
    %392 = vrot.lane.b32.xlu0 %v292, 48
    %v393 = vpop.permute.xlu0 %392
    %396 = vxpose.xlu0.b32.start [1/16] %v238, 128
    %397 = vxpose.xlu0.b32.cont [2/16] %v242, 128
    %398 = vxpose.xlu0.b32.cont [3/16] 0.0, 128
    %399 = vxpose.xlu0.b32.cont [4/16] 0.0, 128
    %400 = vxpose.xlu0.b32.cont [5/16] 0.0, 128
    %401 = vxpose.xlu0.b32.cont [6/16] 0.0, 128
    %402 = vxpose.xlu0.b32.cont [7/16] 0.0, 128
    %403 = vxpose.xlu0.b32.cont [8/16] 0.0, 128
    %404 = vxpose.xlu0.b32.cont [9/16] 0.0, 128
    %405 = vxpose.xlu0.b32.cont [10/16] 0.0, 128
    %406 = vxpose.xlu0.b32.cont [11/16] 0.0, 128
    %407 = vxpose.xlu0.b32.cont [12/16] 0.0, 128
    %408 = vxpose.xlu0.b32.cont [13/16] 0.0, 128
    %409 = vxpose.xlu0.b32.cont [14/16] 0.0, 128
    %410 = vxpose.xlu0.b32.cont [15/16] 0.0, 128
    %411 = vxpose.xlu0.b32.end [16/16] 0.0, 128
    %v412 = vpop.trf.xlu0
    %v413 = vpop.trf.xlu0
    %v414 = vpop.trf.xlu0
    %v415 = vpop.trf.xlu0
    %v416 = vpop.trf.xlu0
    %v417 = vpop.trf.xlu0
    %v418 = vpop.trf.xlu0
    %v419 = vpop.trf.xlu0
    %v420 = vpop.trf.xlu0
    %v421 = vpop.trf.xlu0
    %v422 = vpop.trf.xlu0
    %v423 = vpop.trf.xlu0
    %v424 = vpop.trf.xlu0
    %v425 = vpop.trf.xlu0
    %v426 = vpop.trf.xlu0
    %v427 = vpop.trf.xlu0
    %428 = vxpose.xlu0.b32.start [1/16] %v335, 128
    %429 = vxpose.xlu0.b32.cont [2/16] %v337, 128
    %430 = vxpose.xlu0.b32.cont [3/16] 0.0, 128
    %431 = vxpose.xlu0.b32.cont [4/16] 0.0, 128
    %432 = vxpose.xlu0.b32.cont [5/16] 0.0, 128
    %433 = vxpose.xlu0.b32.cont [6/16] 0.0, 128
    %434 = vxpose.xlu0.b32.cont [7/16] 0.0, 128
    %435 = vxpose.xlu0.b32.cont [8/16] 0.0, 128
    %436 = vxpose.xlu0.b32.cont [9/16] 0.0, 128
    %437 = vxpose.xlu0.b32.cont [10/16] 0.0, 128
    %438 = vxpose.xlu0.b32.cont [11/16] 0.0, 128
    %439 = vxpose.xlu0.b32.cont [12/16] 0.0, 128
    %440 = vxpose.xlu0.b32.cont [13/16] 0.0, 128
    %441 = vxpose.xlu0.b32.cont [14/16] 0.0, 128
    %442 = vxpose.xlu0.b32.cont [15/16] 0.0, 128
    %443 = vxpose.xlu0.b32.end [16/16] 0.0, 128
    %v444 = vpop.trf.xlu0
    %v445 = vpop.trf.xlu0
    %v446 = vpop.trf.xlu0
    %v447 = vpop.trf.xlu0
    %v448 = vpop.trf.xlu0
    %v449 = vpop.trf.xlu0
    %v450 = vpop.trf.xlu0
    %v451 = vpop.trf.xlu0
    %v452 = vpop.trf.xlu0
    %v453 = vpop.trf.xlu0
    %v454 = vpop.trf.xlu0
    %v455 = vpop.trf.xlu0
    %v456 = vpop.trf.xlu0
    %v457 = vpop.trf.xlu0
    %v458 = vpop.trf.xlu0
    %v459 = vpop.trf.xlu0
    %460 = vxpose.xlu0.b32.start [1/16] %v341, 128
    %461 = vxpose.xlu0.b32.cont [2/16] %v343, 128
    %462 = vxpose.xlu0.b32.cont [3/16] 0.0, 128
    %463 = vxpose.xlu0.b32.cont [4/16] 0.0, 128
    %464 = vxpose.xlu0.b32.cont [5/16] 0.0, 128
    %465 = vxpose.xlu0.b32.cont [6/16] 0.0, 128
    %466 = vxpose.xlu0.b32.cont [7/16] 0.0, 128
    %467 = vxpose.xlu0.b32.cont [8/16] 0.0, 128
    %468 = vxpose.xlu0.b32.cont [9/16] 0.0, 128
    %469 = vxpose.xlu0.b32.cont [10/16] 0.0, 128
    %470 = vxpose.xlu0.b32.cont [11/16] 0.0, 128
    %471 = vxpose.xlu0.b32.cont [12/16] 0.0, 128
    %472 = vxpose.xlu0.b32.cont [13/16] 0.0, 128
    %473 = vxpose.xlu0.b32.cont [14/16] 0.0, 128
    %474 = vxpose.xlu0.b32.cont [15/16] 0.0, 128
    %475 = vxpose.xlu0.b32.end [16/16] 0.0, 128
    %v476 = vpop.trf.xlu0
    %v477 = vpop.trf.xlu0
    %v478 = vpop.trf.xlu0
    %v479 = vpop.trf.xlu0
    %v480 = vpop.trf.xlu0
    %v481 = vpop.trf.xlu0
    %v482 = vpop.trf.xlu0
    %v483 = vpop.trf.xlu0
    %v484 = vpop.trf.xlu0
    %v485 = vpop.trf.xlu0
    %v486 = vpop.trf.xlu0
    %v487 = vpop.trf.xlu0
    %v488 = vpop.trf.xlu0
    %v489 = vpop.trf.xlu0
    %v490 = vpop.trf.xlu0
    %v491 = vpop.trf.xlu0
    %492 = vxpose.xlu0.b32.start [1/16] %v347, 128
    %493 = vxpose.xlu0.b32.cont [2/16] %v349, 128
    %494 = vxpose.xlu0.b32.cont [3/16] 0.0, 128
    %495 = vxpose.xlu0.b32.cont [4/16] 0.0, 128
    %496 = vxpose.xlu0.b32.cont [5/16] 0.0, 128
    %497 = vxpose.xlu0.b32.cont [6/16] 0.0, 128
    %498 = vxpose.xlu0.b32.cont [7/16] 0.0, 128
    %499 = vxpose.xlu0.b32.cont [8/16] 0.0, 128
    %500 = vxpose.xlu0.b32.cont [9/16] 0.0, 128
    %501 = vxpose.xlu0.b32.cont [10/16] 0.0, 128
    %502 = vxpose.xlu0.b32.cont [11/16] 0.0, 128
    %503 = vxpose.xlu0.b32.cont [12/16] 0.0, 128
    %504 = vxpose.xlu0.b32.cont [13/16] 0.0, 128
    %505 = vxpose.xlu0.b32.cont [14/16] 0.0, 128
    %506 = vxpose.xlu0.b32.cont [15/16] 0.0, 128
    %507 = vxpose.xlu0.b32.end [16/16] 0.0, 128
    %v508 = vpop.trf.xlu0
    %v509 = vpop.trf.xlu0
    %v510 = vpop.trf.xlu0
    %v511 = vpop.trf.xlu0
    %v512 = vpop.trf.xlu0
    %v513 = vpop.trf.xlu0
    %v514 = vpop.trf.xlu0
    %v515 = vpop.trf.xlu0
    %v516 = vpop.trf.xlu0
    %v517 = vpop.trf.xlu0
    %v518 = vpop.trf.xlu0
    %v519 = vpop.trf.xlu0
    %v520 = vpop.trf.xlu0
    %v521 = vpop.trf.xlu0
    %v522 = vpop.trf.xlu0
    %v523 = vpop.trf.xlu0
    %524 = vxpose.xlu0.b32.start [1/16] %v353, 128
    %525 = vxpose.xlu0.b32.cont [2/16] %v355, 128
    %526 = vxpose.xlu0.b32.cont [3/16] 0.0, 128
    %527 = vxpose.xlu0.b32.cont [4/16] 0.0, 128
    %528 = vxpose.xlu0.b32.cont [5/16] 0.0, 128
    %529 = vxpose.xlu0.b32.cont [6/16] 0.0, 128
    %530 = vxpose.xlu0.b32.cont [7/16] 0.0, 128
    %531 = vxpose.xlu0.b32.cont [8/16] 0.0, 128
    %532 = vxpose.xlu0.b32.cont [9/16] 0.0, 128
    %533 = vxpose.xlu0.b32.cont [10/16] 0.0, 128
    %534 = vxpose.xlu0.b32.cont [11/16] 0.0, 128
    %535 = vxpose.xlu0.b32.cont [12/16] 0.0, 128
    %536 = vxpose.xlu0.b32.cont [13/16] 0.0, 128
    %537 = vxpose.xlu0.b32.cont [14/16] 0.0, 128
    %538 = vxpose.xlu0.b32.cont [15/16] 0.0, 128
    %539 = vxpose.xlu0.b32.end [16/16] 0.0, 128
    %v540 = vpop.trf.xlu0
    %v541 = vpop.trf.xlu0
    %v542 = vpop.trf.xlu0
    %v543 = vpop.trf.xlu0
    %v544 = vpop.trf.xlu0
    %v545 = vpop.trf.xlu0
    %v546 = vpop.trf.xlu0
    %v547 = vpop.trf.xlu0
    %v548 = vpop.trf.xlu0
    %v549 = vpop.trf.xlu0
    %v550 = vpop.trf.xlu0
    %v551 = vpop.trf.xlu0
    %v552 = vpop.trf.xlu0
    %v553 = vpop.trf.xlu0
    %v554 = vpop.trf.xlu0
    %v555 = vpop.trf.xlu0
    %556 = vxpose.xlu0.b32.start [1/16] %v359, 128
    %557 = vxpose.xlu0.b32.cont [2/16] %v361, 128
    %558 = vxpose.xlu0.b32.cont [3/16] 0.0, 128
    %559 = vxpose.xlu0.b32.cont [4/16] 0.0, 128
    %560 = vxpose.xlu0.b32.cont [5/16] 0.0, 128
    %561 = vxpose.xlu0.b32.cont [6/16] 0.0, 128
    %562 = vxpose.xlu0.b32.cont [7/16] 0.0, 128
    %563 = vxpose.xlu0.b32.cont [8/16] 0.0, 128
    %564 = vxpose.xlu0.b32.cont [9/16] 0.0, 128
    %565 = vxpose.xlu0.b32.cont [10/16] 0.0, 128
    %566 = vxpose.xlu0.b32.cont [11/16] 0.0, 128
    %567 = vxpose.xlu0.b32.cont [12/16] 0.0, 128
    %568 = vxpose.xlu0.b32.cont [13/16] 0.0, 128
    %569 = vxpose.xlu0.b32.cont [14/16] 0.0, 128
    %570 = vxpose.xlu0.b32.cont [15/16] 0.0, 128
    %571 = vxpose.xlu0.b32.end [16/16] 0.0, 128
    %v572 = vpop.trf.xlu0
    %v573 = vpop.trf.xlu0
    %v574 = vpop.trf.xlu0
    %v575 = vpop.trf.xlu0
    %v576 = vpop.trf.xlu0
    %v577 = vpop.trf.xlu0
    %v578 = vpop.trf.xlu0
    %v579 = vpop.trf.xlu0
    %v580 = vpop.trf.xlu0
    %v581 = vpop.trf.xlu0
    %v582 = vpop.trf.xlu0
    %v583 = vpop.trf.xlu0
    %v584 = vpop.trf.xlu0
    %v585 = vpop.trf.xlu0
    %v586 = vpop.trf.xlu0
    %v587 = vpop.trf.xlu0
    %vm588 = vcmask 130048
    %v589 = vsel %vm588, %v236, 0
    %v591 = vsel %vm588, %v240, 0
    %593 = vmatprep.subr.mxu0 0.0
    %594 = vmatpush1.msra.mxu0 %v412
    %595 = vmatprep.subr.mxu0 0.0
    %596 = vmatpush1.msra.mxu0 %v413
    %597 = vmatprep.subr.mxu0 0.0
    %598 = vmatpush1.msra.mxu0 0.0
    %599 = vmatprep.subr.mxu0 0.0
    %600 = vmatpush1.msra.mxu0 0.0
    %601 = vmatprep.subr.mxu0 0.0
    %602 = vmatpush1.msra.mxu0 0.0
    %603 = vmatprep.subr.mxu0 0.0
    %604 = vmatpush1.msra.mxu0 0.0
    %605 = vmatprep.subr.mxu0 0.0
    %606 = vmatpush1.msra.mxu0 0.0
    %607 = vmatprep.subr.mxu0 0.0
    %608 = vmatpush1.msra.mxu0 0.0
    %609 = vmatprep.subr.mxu0 0.0
    %610 = vmatpush1.msra.mxu0 0.0
    %611 = vmatprep.subr.mxu0 0.0
    %612 = vmatpush1.msra.mxu0 0.0
    %613 = vmatprep.subr.mxu0 0.0
    %614 = vmatpush1.msra.mxu0 0.0
    %615 = vmatprep.subr.mxu0 0.0
    %616 = vmatpush1.msra.mxu0 0.0
    %617 = vmatprep.subr.mxu0 0.0
    %618 = vmatpush1.msra.mxu0 0.0
    %619 = vmatprep.subr.mxu0 0.0
    %620 = vmatpush1.msra.mxu0 0.0
    %621 = vmatprep.subr.mxu0 0.0
    %622 = vmatpush1.msra.mxu0 0.0
    %623 = vmatprep.subr.mxu0 0.0
    %624 = vmatpush1.msra.mxu0 0.0
    %625 = vmatprep.subr.mxu0 0.0
    %626 = vmatpush1.msra.mxu0 0.0
    %627 = vmatprep.subr.mxu0 0.0
    %628 = vmatpush1.msra.mxu0 0.0
    %629 = vmatprep.subr.mxu0 0.0
    %630 = vmatpush1.msra.mxu0 0.0
    %631 = vmatprep.subr.mxu0 0.0
    %632 = vmatpush1.msra.mxu0 0.0
    %633 = vmatprep.subr.mxu0 0.0
    %634 = vmatpush1.msra.mxu0 0.0
    %635 = vmatprep.subr.mxu0 0.0
    %636 = vmatpush1.msra.mxu0 0.0
    %637 = vmatprep.subr.mxu0 0.0
    %638 = vmatpush1.msra.mxu0 0.0
    %639 = vmatprep.subr.mxu0 0.0
    %640 = vmatpush1.msra.mxu0 0.0
    %641 = vmatprep.subr.mxu0 0.0
    %642 = vmatpush1.msra.mxu0 0.0
    %643 = vmatprep.subr.mxu0 0.0
    %644 = vmatpush1.msra.mxu0 0.0
    %645 = vmatprep.subr.mxu0 0.0
    %646 = vmatpush1.msra.mxu0 0.0
    %647 = vmatprep.subr.mxu0 0.0
    %648 = vmatpush1.msra.mxu0 0.0
    %649 = vmatprep.subr.mxu0 0.0
    %650 = vmatpush1.msra.mxu0 0.0
    %651 = vmatprep.subr.mxu0 0.0
    %652 = vmatpush1.msra.mxu0 0.0
    %653 = vmatprep.subr.mxu0 0.0
    %654 = vmatpush1.msra.mxu0 0.0
    %655 = vmatprep.subr.mxu0 0.0
    %656 = vmatpush1.msra.mxu0 0.0
    %657 = vmatprep.mubr.f32.mxu0 0.0
    %658 = vmatmul.mubr.f32.gmra.mrb[0].mxu0 %v589
    %v659 = vpop.f32.mrb[0].mxu0
    %v660 = vadd.f32 0.0, %v659
    %v661 = vpop.f32.mrb[0].mxu0
    %662 = vmatprep.mubr.f32.mxu0 0.0
    %663 = vmatmul.mubr.f32.gmra.mrb[0].mxu0 %v591
    %v664 = vpop.f32.mrb[0].mxu0
    %v665 = vadd.f32 0.0, %v664
    %v666 = vpop.f32.mrb[0].mxu0
    %667 = vdwg.mxu0
    %v668 = vsel %vm588, %v313, 0
    %v670 = vsel %vm588, %v315, 0
    %672 = vmatprep.subr.mxu0 0.0
    %673 = vmatpush1.msra.mxu0 %v444
    %674 = vmatprep.subr.mxu0 0.0
    %675 = vmatpush1.msra.mxu0 %v445
    %676 = vmatprep.subr.mxu0 0.0
    %677 = vmatpush1.msra.mxu0 0.0
    %678 = vmatprep.subr.mxu0 0.0
    %679 = vmatpush1.msra.mxu0 0.0
    %680 = vmatprep.subr.mxu0 0.0
    %681 = vmatpush1.msra.mxu0 0.0
    %682 = vmatprep.subr.mxu0 0.0
    %683 = vmatpush1.msra.mxu0 0.0
    %684 = vmatprep.subr.mxu0 0.0
    %685 = vmatpush1.msra.mxu0 0.0
    %686 = vmatprep.subr.mxu0 0.0
    %687 = vmatpush1.msra.mxu0 0.0
    %688 = vmatprep.subr.mxu0 0.0
    %689 = vmatpush1.msra.mxu0 0.0
    %690 = vmatprep.subr.mxu0 0.0
    %691 = vmatpush1.msra.mxu0 0.0
    %692 = vmatprep.subr.mxu0 0.0
    %693 = vmatpush1.msra.mxu0 0.0
    %694 = vmatprep.subr.mxu0 0.0
    %695 = vmatpush1.msra.mxu0 0.0
    %696 = vmatprep.subr.mxu0 0.0
    %697 = vmatpush1.msra.mxu0 0.0
    %698 = vmatprep.subr.mxu0 0.0
    %699 = vmatpush1.msra.mxu0 0.0
    %700 = vmatprep.subr.mxu0 0.0
    %701 = vmatpush1.msra.mxu0 0.0
    %702 = vmatprep.subr.mxu0 0.0
    %703 = vmatpush1.msra.mxu0 0.0
    %704 = vmatprep.subr.mxu0 0.0
    %705 = vmatpush1.msra.mxu0 0.0
    %706 = vmatprep.subr.mxu0 0.0
    %707 = vmatpush1.msra.mxu0 0.0
    %708 = vmatprep.subr.mxu0 0.0
    %709 = vmatpush1.msra.mxu0 0.0
    %710 = vmatprep.subr.mxu0 0.0
    %711 = vmatpush1.msra.mxu0 0.0
    %712 = vmatprep.subr.mxu0 0.0
    %713 = vmatpush1.msra.mxu0 0.0
    %714 = vmatprep.subr.mxu0 0.0
    %715 = vmatpush1.msra.mxu0 0.0
    %716 = vmatprep.subr.mxu0 0.0
    %717 = vmatpush1.msra.mxu0 0.0
    %718 = vmatprep.subr.mxu0 0.0
    %719 = vmatpush1.msra.mxu0 0.0
    %720 = vmatprep.subr.mxu0 0.0
    %721 = vmatpush1.msra.mxu0 0.0
    %722 = vmatprep.subr.mxu0 0.0
    %723 = vmatpush1.msra.mxu0 0.0
    %724 = vmatprep.subr.mxu0 0.0
    %725 = vmatpush1.msra.mxu0 0.0
    %726 = vmatprep.subr.mxu0 0.0
    %727 = vmatpush1.msra.mxu0 0.0
    %728 = vmatprep.subr.mxu0 0.0
    %729 = vmatpush1.msra.mxu0 0.0
    %730 = vmatprep.subr.mxu0 0.0
    %731 = vmatpush1.msra.mxu0 0.0
    %732 = vmatprep.subr.mxu0 0.0
    %733 = vmatpush1.msra.mxu0 0.0
    %734 = vmatprep.subr.mxu0 0.0
    %735 = vmatpush1.msra.mxu0 0.0
    %736 = vmatprep.mubr.f32.mxu0 0.0
    %737 = vmatmul.mubr.f32.gmra.mrb[0].mxu0 %v668
    %v738 = vpop.f32.mrb[0].mxu0
    %v739 = vadd.f32 0.0, %v738
    %v740 = vpop.f32.mrb[0].mxu0
    %741 = vmatprep.mubr.f32.mxu0 0.0
    %742 = vmatmul.mubr.f32.gmra.mrb[0].mxu0 %v670
    %v743 = vpop.f32.mrb[0].mxu0
    %v744 = vadd.f32 0.0, %v743
    %v745 = vpop.f32.mrb[0].mxu0
    %746 = vdwg.mxu0
    %v747 = vsel %vm588, %v317, 0
    %v749 = vsel %vm588, %v319, 0
    %751 = vmatprep.subr.mxu0 0.0
    %752 = vmatpush1.msra.mxu0 %v476
    %753 = vmatprep.subr.mxu0 0.0
    %754 = vmatpush1.msra.mxu0 %v477
    %755 = vmatprep.subr.mxu0 0.0
    %756 = vmatpush1.msra.mxu0 0.0
    %757 = vmatprep.subr.mxu0 0.0
    %758 = vmatpush1.msra.mxu0 0.0
    %759 = vmatprep.subr.mxu0 0.0
    %760 = vmatpush1.msra.mxu0 0.0
    %761 = vmatprep.subr.mxu0 0.0
    %762 = vmatpush1.msra.mxu0 0.0
    %763 = vmatprep.subr.mxu0 0.0
    %764 = vmatpush1.msra.mxu0 0.0
    %765 = vmatprep.subr.mxu0 0.0
    %766 = vmatpush1.msra.mxu0 0.0
    %767 = vmatprep.subr.mxu0 0.0
    %768 = vmatpush1.msra.mxu0 0.0
    %769 = vmatprep.subr.mxu0 0.0
    %770 = vmatpush1.msra.mxu0 0.0
    %771 = vmatprep.subr.mxu0 0.0
    %772 = vmatpush1.msra.mxu0 0.0
    %773 = vmatprep.subr.mxu0 0.0
    %774 = vmatpush1.msra.mxu0 0.0
    %775 = vmatprep.subr.mxu0 0.0
    %776 = vmatpush1.msra.mxu0 0.0
    %777 = vmatprep.subr.mxu0 0.0
    %778 = vmatpush1.msra.mxu0 0.0
    %779 = vmatprep.subr.mxu0 0.0
    %780 = vmatpush1.msra.mxu0 0.0
    %781 = vmatprep.subr.mxu0 0.0
    %782 = vmatpush1.msra.mxu0 0.0
    %783 = vmatprep.subr.mxu0 0.0
    %784 = vmatpush1.msra.mxu0 0.0
    %785 = vmatprep.subr.mxu0 0.0
    %786 = vmatpush1.msra.mxu0 0.0
    %787 = vmatprep.subr.mxu0 0.0
    %788 = vmatpush1.msra.mxu0 0.0
    %789 = vmatprep.subr.mxu0 0.0
    %790 = vmatpush1.msra.mxu0 0.0
    %791 = vmatprep.subr.mxu0 0.0
    %792 = vmatpush1.msra.mxu0 0.0
    %793 = vmatprep.subr.mxu0 0.0
    %794 = vmatpush1.msra.mxu0 0.0
    %795 = vmatprep.subr.mxu0 0.0
    %796 = vmatpush1.msra.mxu0 0.0
    %797 = vmatprep.subr.mxu0 0.0
    %798 = vmatpush1.msra.mxu0 0.0
    %799 = vmatprep.subr.mxu0 0.0
    %800 = vmatpush1.msra.mxu0 0.0
    %801 = vmatprep.subr.mxu0 0.0
    %802 = vmatpush1.msra.mxu0 0.0
    %803 = vmatprep.subr.mxu0 0.0
    %804 = vmatpush1.msra.mxu0 0.0
    %805 = vmatprep.subr.mxu0 0.0
    %806 = vmatpush1.msra.mxu0 0.0
    %807 = vmatprep.subr.mxu0 0.0
    %808 = vmatpush1.msra.mxu0 0.0
    %809 = vmatprep.subr.mxu0 0.0
    %810 = vmatpush1.msra.mxu0 0.0
    %811 = vmatprep.subr.mxu0 0.0
    %812 = vmatpush1.msra.mxu0 0.0
    %813 = vmatprep.subr.mxu0 0.0
    %814 = vmatpush1.msra.mxu0 0.0
    %815 = vmatprep.mubr.f32.mxu0 0.0
    %816 = vmatmul.mubr.f32.gmra.mrb[0].mxu0 %v747
    %v817 = vpop.f32.mrb[0].mxu0
    %v818 = vadd.f32 0.0, %v817
    %v819 = vpop.f32.mrb[0].mxu0
    %820 = vmatprep.mubr.f32.mxu0 0.0
    %821 = vmatmul.mubr.f32.gmra.mrb[0].mxu0 %v749
    %v822 = vpop.f32.mrb[0].mxu0
    %v823 = vadd.f32 0.0, %v822
    %v824 = vpop.f32.mrb[0].mxu0
    %825 = vdwg.mxu0
    %v826 = vsel %vm588, %v321, 0
    %v828 = vsel %vm588, %v323, 0
    %830 = vmatprep.subr.mxu0 0.0
    %831 = vmatpush1.msra.mxu0 %v508
    %832 = vmatprep.subr.mxu0 0.0
    %833 = vmatpush1.msra.mxu0 %v509
    %834 = vmatprep.subr.mxu0 0.0
    %835 = vmatpush1.msra.mxu0 0.0
    %836 = vmatprep.subr.mxu0 0.0
    %837 = vmatpush1.msra.mxu0 0.0
    %838 = vmatprep.subr.mxu0 0.0
    %839 = vmatpush1.msra.mxu0 0.0
    %840 = vmatprep.subr.mxu0 0.0
    %841 = vmatpush1.msra.mxu0 0.0
    %842 = vmatprep.subr.mxu0 0.0
    %843 = vmatpush1.msra.mxu0 0.0
    %844 = vmatprep.subr.mxu0 0.0
    %845 = vmatpush1.msra.mxu0 0.0
    %846 = vmatprep.subr.mxu0 0.0
    %847 = vmatpush1.msra.mxu0 0.0
    %848 = vmatprep.subr.mxu0 0.0
    %849 = vmatpush1.msra.mxu0 0.0
    %850 = vmatprep.subr.mxu0 0.0
    %851 = vmatpush1.msra.mxu0 0.0
    %852 = vmatprep.subr.mxu0 0.0
    %853 = vmatpush1.msra.mxu0 0.0
    %854 = vmatprep.subr.mxu0 0.0
    %855 = vmatpush1.msra.mxu0 0.0
    %856 = vmatprep.subr.mxu0 0.0
    %857 = vmatpush1.msra.mxu0 0.0
    %858 = vmatprep.subr.mxu0 0.0
    %859 = vmatpush1.msra.mxu0 0.0
    %860 = vmatprep.subr.mxu0 0.0
    %861 = vmatpush1.msra.mxu0 0.0
    %862 = vmatprep.subr.mxu0 0.0
    %863 = vmatpush1.msra.mxu0 0.0
    %864 = vmatprep.subr.mxu0 0.0
    %865 = vmatpush1.msra.mxu0 0.0
    %866 = vmatprep.subr.mxu0 0.0
    %867 = vmatpush1.msra.mxu0 0.0
    %868 = vmatprep.subr.mxu0 0.0
    %869 = vmatpush1.msra.mxu0 0.0
    %870 = vmatprep.subr.mxu0 0.0
    %871 = vmatpush1.msra.mxu0 0.0
    %872 = vmatprep.subr.mxu0 0.0
    %873 = vmatpush1.msra.mxu0 0.0
    %874 = vmatprep.subr.mxu0 0.0
    %875 = vmatpush1.msra.mxu0 0.0
    %876 = vmatprep.subr.mxu0 0.0
    %877 = vmatpush1.msra.mxu0 0.0
    %878 = vmatprep.subr.mxu0 0.0
    %879 = vmatpush1.msra.mxu0 0.0
    %880 = vmatprep.subr.mxu0 0.0
    %881 = vmatpush1.msra.mxu0 0.0
    %882 = vmatprep.subr.mxu0 0.0
    %883 = vmatpush1.msra.mxu0 0.0
    %884 = vmatprep.subr.mxu0 0.0
    %885 = vmatpush1.msra.mxu0 0.0
    %886 = vmatprep.subr.mxu0 0.0
    %887 = vmatpush1.msra.mxu0 0.0
    %888 = vmatprep.subr.mxu0 0.0
    %889 = vmatpush1.msra.mxu0 0.0
    %890 = vmatprep.subr.mxu0 0.0
    %891 = vmatpush1.msra.mxu0 0.0
    %892 = vmatprep.subr.mxu0 0.0
    %893 = vmatpush1.msra.mxu0 0.0
    %894 = vmatprep.mubr.f32.mxu0 0.0
    %895 = vmatmul.mubr.f32.gmra.mrb[0].mxu0 %v826
    %v896 = vpop.f32.mrb[0].mxu0
    %v897 = vadd.f32 0.0, %v896
    %v898 = vpop.f32.mrb[0].mxu0
    %899 = vmatprep.mubr.f32.mxu0 0.0
    %900 = vmatmul.mubr.f32.gmra.mrb[0].mxu0 %v828
    %v901 = vpop.f32.mrb[0].mxu0
    %v902 = vadd.f32 0.0, %v901
    %v903 = vpop.f32.mrb[0].mxu0
    %904 = vdwg.mxu0
    %v905 = vsel %vm588, %v325, 0
    %v907 = vsel %vm588, %v327, 0
    %909 = vmatprep.subr.mxu0 0.0
    %910 = vmatpush1.msra.mxu0 %v540
    %911 = vmatprep.subr.mxu0 0.0
    %912 = vmatpush1.msra.mxu0 %v541
    %913 = vmatprep.subr.mxu0 0.0
    %914 = vmatpush1.msra.mxu0 0.0
    %915 = vmatprep.subr.mxu0 0.0
    %916 = vmatpush1.msra.mxu0 0.0
    %917 = vmatprep.subr.mxu0 0.0
    %918 = vmatpush1.msra.mxu0 0.0
    %919 = vmatprep.subr.mxu0 0.0
    %920 = vmatpush1.msra.mxu0 0.0
    %921 = vmatprep.subr.mxu0 0.0
    %922 = vmatpush1.msra.mxu0 0.0
    %923 = vmatprep.subr.mxu0 0.0
    %924 = vmatpush1.msra.mxu0 0.0
    %925 = vmatprep.subr.mxu0 0.0
    %926 = vmatpush1.msra.mxu0 0.0
    %927 = vmatprep.subr.mxu0 0.0
    %928 = vmatpush1.msra.mxu0 0.0
    %929 = vmatprep.subr.mxu0 0.0
    %930 = vmatpush1.msra.mxu0 0.0
    %931 = vmatprep.subr.mxu0 0.0
    %932 = vmatpush1.msra.mxu0 0.0
    %933 = vmatprep.subr.mxu0 0.0
    %934 = vmatpush1.msra.mxu0 0.0
    %935 = vmatprep.subr.mxu0 0.0
    %936 = vmatpush1.msra.mxu0 0.0
    %937 = vmatprep.subr.mxu0 0.0
    %938 = vmatpush1.msra.mxu0 0.0
    %939 = vmatprep.subr.mxu0 0.0
    %940 = vmatpush1.msra.mxu0 0.0
    %941 = vmatprep.subr.mxu0 0.0
    %942 = vmatpush1.msra.mxu0 0.0
    %943 = vmatprep.subr.mxu0 0.0
    %944 = vmatpush1.msra.mxu0 0.0
    %945 = vmatprep.subr.mxu0 0.0
    %946 = vmatpush1.msra.mxu0 0.0
    %947 = vmatprep.subr.mxu0 0.0
    %948 = vmatpush1.msra.mxu0 0.0
    %949 = vmatprep.subr.mxu0 0.0
    %950 = vmatpush1.msra.mxu0 0.0
    %951 = vmatprep.subr.mxu0 0.0
    %952 = vmatpush1.msra.mxu0 0.0
    %953 = vmatprep.subr.mxu0 0.0
    %954 = vmatpush1.msra.mxu0 0.0
    %955 = vmatprep.subr.mxu0 0.0
    %956 = vmatpush1.msra.mxu0 0.0
    %957 = vmatprep.subr.mxu0 0.0
    %958 = vmatpush1.msra.mxu0 0.0
    %959 = vmatprep.subr.mxu0 0.0
    %960 = vmatpush1.msra.mxu0 0.0
    %961 = vmatprep.subr.mxu0 0.0
    %962 = vmatpush1.msra.mxu0 0.0
    %963 = vmatprep.subr.mxu0 0.0
    %964 = vmatpush1.msra.mxu0 0.0
    %965 = vmatprep.subr.mxu0 0.0
    %966 = vmatpush1.msra.mxu0 0.0
    %967 = vmatprep.subr.mxu0 0.0
    %968 = vmatpush1.msra.mxu0 0.0
    %969 = vmatprep.subr.mxu0 0.0
    %970 = vmatpush1.msra.mxu0 0.0
    %971 = vmatprep.subr.mxu0 0.0
    %972 = vmatpush1.msra.mxu0 0.0
    %973 = vmatprep.mubr.f32.mxu0 0.0
    %974 = vmatmul.mubr.f32.gmra.mrb[0].mxu0 %v905
    %v975 = vpop.f32.mrb[0].mxu0
    %v976 = vadd.f32 0.0, %v975
    %v977 = vpop.f32.mrb[0].mxu0
    %978 = vmatprep.mubr.f32.mxu0 0.0
    %979 = vmatmul.mubr.f32.gmra.mrb[0].mxu0 %v907
    %v980 = vpop.f32.mrb[0].mxu0
    %v981 = vadd.f32 0.0, %v980
    %v982 = vpop.f32.mrb[0].mxu0
    %983 = vdwg.mxu0
    %v984 = vsel %vm588, %v329, 0
    %v986 = vsel %vm588, %v331, 0
    %988 = vmatprep.subr.mxu0 0.0
    %989 = vmatpush1.msra.mxu0 %v572
    %990 = vmatprep.subr.mxu0 0.0
    %991 = vmatpush1.msra.mxu0 %v573
    %992 = vmatprep.subr.mxu0 0.0
    %993 = vmatpush1.msra.mxu0 0.0
    %994 = vmatprep.subr.mxu0 0.0
    %995 = vmatpush1.msra.mxu0 0.0
    %996 = vmatprep.subr.mxu0 0.0
    %997 = vmatpush1.msra.mxu0 0.0
    %998 = vmatprep.subr.mxu0 0.0
    %999 = vmatpush1.msra.mxu0 0.0
    %1000 = vmatprep.subr.mxu0 0.0
    %1001 = vmatpush1.msra.mxu0 0.0
    %1002 = vmatprep.subr.mxu0 0.0
    %1003 = vmatpush1.msra.mxu0 0.0
    %1004 = vmatprep.subr.mxu0 0.0
    %1005 = vmatpush1.msra.mxu0 0.0
    %1006 = vmatprep.subr.mxu0 0.0
    %1007 = vmatpush1.msra.mxu0 0.0
    %1008 = vmatprep.subr.mxu0 0.0
    %1009 = vmatpush1.msra.mxu0 0.0
    %1010 = vmatprep.subr.mxu0 0.0
    %1011 = vmatpush1.msra.mxu0 0.0
    %1012 = vmatprep.subr.mxu0 0.0
    %1013 = vmatpush1.msra.mxu0 0.0
    %1014 = vmatprep.subr.mxu0 0.0
    %1015 = vmatpush1.msra.mxu0 0.0
    %1016 = vmatprep.subr.mxu0 0.0
    %1017 = vmatpush1.msra.mxu0 0.0
    %1018 = vmatprep.subr.mxu0 0.0
    %1019 = vmatpush1.msra.mxu0 0.0
    %1020 = vmatprep.subr.mxu0 0.0
    %1021 = vmatpush1.msra.mxu0 0.0
    %1022 = vmatprep.subr.mxu0 0.0
    %1023 = vmatpush1.msra.mxu0 0.0
    %1024 = vmatprep.subr.mxu0 0.0
    %1025 = vmatpush1.msra.mxu0 0.0
    %1026 = vmatprep.subr.mxu0 0.0
    %1027 = vmatpush1.msra.mxu0 0.0
    %1028 = vmatprep.subr.mxu0 0.0
    %1029 = vmatpush1.msra.mxu0 0.0
    %1030 = vmatprep.subr.mxu0 0.0
    %1031 = vmatpush1.msra.mxu0 0.0
    %1032 = vmatprep.subr.mxu0 0.0
    %1033 = vmatpush1.msra.mxu0 0.0
    %1034 = vmatprep.subr.mxu0 0.0
    %1035 = vmatpush1.msra.mxu0 0.0
    %1036 = vmatprep.subr.mxu0 0.0
    %1037 = vmatpush1.msra.mxu0 0.0
    %1038 = vmatprep.subr.mxu0 0.0
    %1039 = vmatpush1.msra.mxu0 0.0
    %1040 = vmatprep.subr.mxu0 0.0
    %1041 = vmatpush1.msra.mxu0 0.0
    %1042 = vmatprep.subr.mxu0 0.0
    %1043 = vmatpush1.msra.mxu0 0.0
    %1044 = vmatprep.subr.mxu0 0.0
    %1045 = vmatpush1.msra.mxu0 0.0
    %1046 = vmatprep.subr.mxu0 0.0
    %1047 = vmatpush1.msra.mxu0 0.0
    %1048 = vmatprep.subr.mxu0 0.0
    %1049 = vmatpush1.msra.mxu0 0.0
    %1050 = vmatprep.subr.mxu0 0.0
    %1051 = vmatpush1.msra.mxu0 0.0
    %1052 = vmatprep.mubr.f32.mxu0 0.0
    %1053 = vmatmul.mubr.f32.gmra.mrb[0].mxu0 %v984
    %v1054 = vpop.f32.mrb[0].mxu0
    %v1055 = vadd.f32 0.0, %v1054
    %v1056 = vpop.f32.mrb[0].mxu0
    %1057 = vmatprep.mubr.f32.mxu0 0.0
    %1058 = vmatmul.mubr.f32.gmra.mrb[0].mxu0 %v986
    %v1059 = vpop.f32.mrb[0].mxu0
    %v1060 = vadd.f32 0.0, %v1059
    %v1061 = vpop.f32.mrb[0].mxu0
    %1062 = vdwg.mxu0
    %v1063 = vsel %vm308, 1, 0
    %v1064 = vsel %vm309, 1, 0
    %vm1065 = vcmp.eq.s32.totalorder %v1063, 1
    %vm1066 = vcmp.eq.s32.totalorder %v1064, 1
    %v1067 = vsel %vm1065, %v660, -1e+30
    %v1068 = vsel %vm1066, %v665, -1e+30
    %v1069 = vsel %vm1065, %v739, -1e+30
    %v1070 = vsel %vm1066, %v744, -1e+30
    %v1071 = vsel %vm1065, %v818, -1e+30
    %v1072 = vsel %vm1066, %v823, -1e+30
    %v1073 = vsel %vm1065, %v897, -1e+30
    %v1074 = vsel %vm1066, %v902, -1e+30
    %v1075 = vsel %vm1065, %v976, -1e+30
    %v1076 = vsel %vm1066, %v981, -1e+30
    %v1077 = vsel %vm1065, %v1055, -1e+30
    %v1078 = vsel %vm1066, %v1060, -1e+30
    %v1079 = vsel %vm588, %v1067, -inf
    %1080 = vmax.xlane.f32.xlu0 %v1079
    %v1081 = vpop.xlane.xlu0 %1080
    %v1082 = vsel %vm588, %v1068, -inf
    %1083 = vmax.xlane.f32.xlu0 %v1082
    %v1084 = vpop.xlane.xlu0 %1083
    %v1085 = vsel %vm588, %v1069, -inf
    %1086 = vmax.xlane.f32.xlu0 %v1085
    %v1087 = vpop.xlane.xlu0 %1086
    %v1088 = vsel %vm588, %v1070, -inf
    %1089 = vmax.xlane.f32.xlu0 %v1088
    %v1090 = vpop.xlane.xlu0 %1089
    %v1091 = vsel %vm588, %v1071, -inf
    %1092 = vmax.xlane.f32.xlu0 %v1091
    %v1093 = vpop.xlane.xlu0 %1092
    %v1094 = vsel %vm588, %v1072, -inf
    %1095 = vmax.xlane.f32.xlu0 %v1094
    %v1096 = vpop.xlane.xlu0 %1095
    %v1097 = vsel %vm588, %v1073, -inf
    %1098 = vmax.xlane.f32.xlu0 %v1097
    %v1099 = vpop.xlane.xlu0 %1098
    %v1100 = vsel %vm588, %v1074, -inf
    %1101 = vmax.xlane.f32.xlu0 %v1100
    %v1102 = vpop.xlane.xlu0 %1101
    %v1103 = vsel %vm588, %v1075, -inf
    %1104 = vmax.xlane.f32.xlu0 %v1103
    %v1105 = vpop.xlane.xlu0 %1104
    %v1106 = vsel %vm588, %v1076, -inf
    %1107 = vmax.xlane.f32.xlu0 %v1106
    %v1108 = vpop.xlane.xlu0 %1107
    %v1109 = vsel %vm588, %v1077, -inf
    %1110 = vmax.xlane.f32.xlu0 %v1109
    %v1111 = vpop.xlane.xlu0 %1110
    %v1112 = vsel %vm588, %v1078, -inf
    %1113 = vmax.xlane.f32.xlu0 %v1112
    %v1114 = vpop.xlane.xlu0 %1113
    %v1115 = vsub.f32 %v1067, %v1081
    %v1116 = vsub.f32 %v1068, %v1084
    %v1117 = vsub.f32 %v1069, %v1087
    %v1118 = vsub.f32 %v1070, %v1090
    %v1119 = vsub.f32 %v1071, %v1093
    %v1120 = vsub.f32 %v1072, %v1096
    %v1121 = vsub.f32 %v1073, %v1099
    %v1122 = vsub.f32 %v1074, %v1102
    %v1123 = vsub.f32 %v1075, %v1105
    %v1124 = vsub.f32 %v1076, %v1108
    %v1125 = vsub.f32 %v1077, %v1111
    %v1126 = vsub.f32 %v1078, %v1114
    %v1127 = vmul.f32 %v1115, 1.442695
    %v1128 = vpow.pop %v1127
    %v1129 = vmul.f32 %v1116, 1.442695
    %v1130 = vpow.pop %v1129
    %v1131 = vmul.f32 %v1117, 1.442695
    %v1132 = vpow.pop %v1131
    %v1133 = vmul.f32 %v1118, 1.442695
    %v1134 = vpow.pop %v1133
    %v1135 = vmul.f32 %v1119, 1.442695
    %v1136 = vpow.pop %v1135
    %v1137 = vmul.f32 %v1120, 1.442695
    %v1138 = vpow.pop %v1137
    %v1139 = vmul.f32 %v1121, 1.442695
    %v1140 = vpow.pop %v1139
    %v1141 = vmul.f32 %v1122, 1.442695
    %v1142 = vpow.pop %v1141
    %v1143 = vmul.f32 %v1123, 1.442695
    %v1144 = vpow.pop %v1143
    %v1145 = vmul.f32 %v1124, 1.442695
    %v1146 = vpow.pop %v1145
    %v1147 = vmul.f32 %v1125, 1.442695
    %v1148 = vpow.pop %v1147
    %v1149 = vmul.f32 %v1126, 1.442695
    %v1150 = vpow.pop %v1149
    %v1151 = vsel %vm588, %v1128, 0.0
    %1152 = vadd.xlane.f32.xlu0 %v1151
    %v1153 = vpop.xlane.xlu0 %1152
    %v1154 = vsel %vm588, %v1130, 0.0
    %1155 = vadd.xlane.f32.xlu0 %v1154
    %v1156 = vpop.xlane.xlu0 %1155
    %v1157 = vsel %vm588, %v1132, 0.0
    %1158 = vadd.xlane.f32.xlu0 %v1157
    %v1159 = vpop.xlane.xlu0 %1158
    %v1160 = vsel %vm588, %v1134, 0.0
    %1161 = vadd.xlane.f32.xlu0 %v1160
    %v1162 = vpop.xlane.xlu0 %1161
    %v1163 = vsel %vm588, %v1136, 0.0
    %1164 = vadd.xlane.f32.xlu0 %v1163
    %v1165 = vpop.xlane.xlu0 %1164
    %v1166 = vsel %vm588, %v1138, 0.0
    %1167 = vadd.xlane.f32.xlu0 %v1166
    %v1168 = vpop.xlane.xlu0 %1167
    %v1169 = vsel %vm588, %v1140, 0.0
    %1170 = vadd.xlane.f32.xlu0 %v1169
    %v1171 = vpop.xlane.xlu0 %1170
    %v1172 = vsel %vm588, %v1142, 0.0
    %1173 = vadd.xlane.f32.xlu0 %v1172
    %v1174 = vpop.xlane.xlu0 %1173
    %v1175 = vsel %vm588, %v1144, 0.0
    %1176 = vadd.xlane.f32.xlu0 %v1175
    %v1177 = vpop.xlane.xlu0 %1176
    %v1178 = vsel %vm588, %v1146, 0.0
    %1179 = vadd.xlane.f32.xlu0 %v1178
    %v1180 = vpop.xlane.xlu0 %1179
    %v1181 = vsel %vm588, %v1148, 0.0
    %1182 = vadd.xlane.f32.xlu0 %v1181
    %v1183 = vpop.xlane.xlu0 %1182
    %v1184 = vsel %vm588, %v1150, 0.0
    %1185 = vadd.xlane.f32.xlu0 %v1184
    %v1186 = vpop.xlane.xlu0 %1185
    %v1187 = vrcp.pop %v1153
    %v1188 = vrcp.pop %v1156
    %v1189 = vrcp.pop %v1159
    %v1190 = vrcp.pop %v1162
    %v1191 = vrcp.pop %v1165
    %v1192 = vrcp.pop %v1168
    %v1193 = vrcp.pop %v1171
    %v1194 = vrcp.pop %v1174
    %v1195 = vrcp.pop %v1177
    %v1196 = vrcp.pop %v1180
    %v1197 = vrcp.pop %v1183
    %v1198 = vrcp.pop %v1186
    %v1199 = vmul.f32 %v1128, %v1187
    %v1200 = vmul.f32 %v1130, %v1188
    %v1201 = vmul.f32 %v1132, %v1189
    %v1202 = vmul.f32 %v1134, %v1190
    %v1203 = vmul.f32 %v1136, %v1191
    %v1204 = vmul.f32 %v1138, %v1192
    %v1205 = vmul.f32 %v1140, %v1193
    %v1206 = vmul.f32 %v1142, %v1194
    %v1207 = vmul.f32 %v1144, %v1195
    %v1208 = vmul.f32 %v1146, %v1196
    %v1209 = vmul.f32 %v1148, %v1197
    %v1210 = vmul.f32 %v1150, %v1198
    %1211 = vxpose.xlu0.b32.start [1/16] %v289, 128
    %1212 = vxpose.xlu0.b32.cont [2/16] %v292, 128
    %1213 = vxpose.xlu0.b32.cont [3/16] 0.0, 128
    %1214 = vxpose.xlu0.b32.cont [4/16] 0.0, 128
    %1215 = vxpose.xlu0.b32.cont [5/16] 0.0, 128
    %1216 = vxpose.xlu0.b32.cont [6/16] 0.0, 128
    %1217 = vxpose.xlu0.b32.cont [7/16] 0.0, 128
    %1218 = vxpose.xlu0.b32.cont [8/16] 0.0, 128
    %1219 = vxpose.xlu0.b32.cont [9/16] 0.0, 128
    %1220 = vxpose.xlu0.b32.cont [10/16] 0.0, 128
    %1221 = vxpose.xlu0.b32.cont [11/16] 0.0, 128
    %1222 = vxpose.xlu0.b32.cont [12/16] 0.0, 128
    %1223 = vxpose.xlu0.b32.cont [13/16] 0.0, 128
    %1224 = vxpose.xlu0.b32.cont [14/16] 0.0, 128
    %1225 = vxpose.xlu0.b32.cont [15/16] 0.0, 128
    %1226 = vxpose.xlu0.b32.end [16/16] 0.0, 128
    %v1227 = vpop.trf.xlu0
    %v1228 = vpop.trf.xlu0
    %v1229 = vpop.trf.xlu0
    %v1230 = vpop.trf.xlu0
    %v1231 = vpop.trf.xlu0
    %v1232 = vpop.trf.xlu0
    %v1233 = vpop.trf.xlu0
    %v1234 = vpop.trf.xlu0
    %v1235 = vpop.trf.xlu0
    %v1236 = vpop.trf.xlu0
    %v1237 = vpop.trf.xlu0
    %v1238 = vpop.trf.xlu0
    %v1239 = vpop.trf.xlu0
    %v1240 = vpop.trf.xlu0
    %v1241 = vpop.trf.xlu0
    %v1242 = vpop.trf.xlu0
    %1243 = vxpose.xlu0.b32.start [1/16] %v367, 128
    %1244 = vxpose.xlu0.b32.cont [2/16] %v369, 128
    %1245 = vxpose.xlu0.b32.cont [3/16] 0.0, 128
    %1246 = vxpose.xlu0.b32.cont [4/16] 0.0, 128
    %1247 = vxpose.xlu0.b32.cont [5/16] 0.0, 128
    %1248 = vxpose.xlu0.b32.cont [6/16] 0.0, 128
    %1249 = vxpose.xlu0.b32.cont [7/16] 0.0, 128
    %1250 = vxpose.xlu0.b32.cont [8/16] 0.0, 128
    %1251 = vxpose.xlu0.b32.cont [9/16] 0.0, 128
    %1252 = vxpose.xlu0.b32.cont [10/16] 0.0, 128
    %1253 = vxpose.xlu0.b32.cont [11/16] 0.0, 128
    %1254 = vxpose.xlu0.b32.cont [12/16] 0.0, 128
    %1255 = vxpose.xlu0.b32.cont [13/16] 0.0, 128
    %1256 = vxpose.xlu0.b32.cont [14/16] 0.0, 128
    %1257 = vxpose.xlu0.b32.cont [15/16] 0.0, 128
    %1258 = vxpose.xlu0.b32.end [16/16] 0.0, 128
    %v1259 = vpop.trf.xlu0
    %v1260 = vpop.trf.xlu0
    %v1261 = vpop.trf.xlu0
    %v1262 = vpop.trf.xlu0
    %v1263 = vpop.trf.xlu0
    %v1264 = vpop.trf.xlu0
    %v1265 = vpop.trf.xlu0
    %v1266 = vpop.trf.xlu0
    %v1267 = vpop.trf.xlu0
    %v1268 = vpop.trf.xlu0
    %v1269 = vpop.trf.xlu0
    %v1270 = vpop.trf.xlu0
    %v1271 = vpop.trf.xlu0
    %v1272 = vpop.trf.xlu0
    %v1273 = vpop.trf.xlu0
    %v1274 = vpop.trf.xlu0
    %1275 = vxpose.xlu0.b32.start [1/16] %v373, 128
    %1276 = vxpose.xlu0.b32.cont [2/16] %v375, 128
    %1277 = vxpose.xlu0.b32.cont [3/16] 0.0, 128
    %1278 = vxpose.xlu0.b32.cont [4/16] 0.0, 128
    %1279 = vxpose.xlu0.b32.cont [5/16] 0.0, 128
    %1280 = vxpose.xlu0.b32.cont [6/16] 0.0, 128
    %1281 = vxpose.xlu0.b32.cont [7/16] 0.0, 128
    %1282 = vxpose.xlu0.b32.cont [8/16] 0.0, 128
    %1283 = vxpose.xlu0.b32.cont [9/16] 0.0, 128
    %1284 = vxpose.xlu0.b32.cont [10/16] 0.0, 128
    %1285 = vxpose.xlu0.b32.cont [11/16] 0.0, 128
    %1286 = vxpose.xlu0.b32.cont [12/16] 0.0, 128
    %1287 = vxpose.xlu0.b32.cont [13/16] 0.0, 128
    %1288 = vxpose.xlu0.b32.cont [14/16] 0.0, 128
    %1289 = vxpose.xlu0.b32.cont [15/16] 0.0, 128
    %1290 = vxpose.xlu0.b32.end [16/16] 0.0, 128
    %v1291 = vpop.trf.xlu0
    %v1292 = vpop.trf.xlu0
    %v1293 = vpop.trf.xlu0
    %v1294 = vpop.trf.xlu0
    %v1295 = vpop.trf.xlu0
    %v1296 = vpop.trf.xlu0
    %v1297 = vpop.trf.xlu0
    %v1298 = vpop.trf.xlu0
    %v1299 = vpop.trf.xlu0
    %v1300 = vpop.trf.xlu0
    %v1301 = vpop.trf.xlu0
    %v1302 = vpop.trf.xlu0
    %v1303 = vpop.trf.xlu0
    %v1304 = vpop.trf.xlu0
    %v1305 = vpop.trf.xlu0
    %v1306 = vpop.trf.xlu0
    %1307 = vxpose.xlu0.b32.start [1/16] %v379, 128
    %1308 = vxpose.xlu0.b32.cont [2/16] %v381, 128
    %1309 = vxpose.xlu0.b32.cont [3/16] 0.0, 128
    %1310 = vxpose.xlu0.b32.cont [4/16] 0.0, 128
    %1311 = vxpose.xlu0.b32.cont [5/16] 0.0, 128
    %1312 = vxpose.xlu0.b32.cont [6/16] 0.0, 128
    %1313 = vxpose.xlu0.b32.cont [7/16] 0.0, 128
    %1314 = vxpose.xlu0.b32.cont [8/16] 0.0, 128
    %1315 = vxpose.xlu0.b32.cont [9/16] 0.0, 128
    %1316 = vxpose.xlu0.b32.cont [10/16] 0.0, 128
    %1317 = vxpose.xlu0.b32.cont [11/16] 0.0, 128
    %1318 = vxpose.xlu0.b32.cont [12/16] 0.0, 128
    %1319 = vxpose.xlu0.b32.cont [13/16] 0.0, 128
    %1320 = vxpose.xlu0.b32.cont [14/16] 0.0, 128
    %1321 = vxpose.xlu0.b32.cont [15/16] 0.0, 128
    %1322 = vxpose.xlu0.b32.end [16/16] 0.0, 128
    %v1323 = vpop.trf.xlu0
    %v1324 = vpop.trf.xlu0
    %v1325 = vpop.trf.xlu0
    %v1326 = vpop.trf.xlu0
    %v1327 = vpop.trf.xlu0
    %v1328 = vpop.trf.xlu0
    %v1329 = vpop.trf.xlu0
    %v1330 = vpop.trf.xlu0
    %v1331 = vpop.trf.xlu0
    %v1332 = vpop.trf.xlu0
    %v1333 = vpop.trf.xlu0
    %v1334 = vpop.trf.xlu0
    %v1335 = vpop.trf.xlu0
    %v1336 = vpop.trf.xlu0
    %v1337 = vpop.trf.xlu0
    %v1338 = vpop.trf.xlu0
    %1339 = vxpose.xlu0.b32.start [1/16] %v385, 128
    %1340 = vxpose.xlu0.b32.cont [2/16] %v387, 128
    %1341 = vxpose.xlu0.b32.cont [3/16] 0.0, 128
    %1342 = vxpose.xlu0.b32.cont [4/16] 0.0, 128
    %1343 = vxpose.xlu0.b32.cont [5/16] 0.0, 128
    %1344 = vxpose.xlu0.b32.cont [6/16] 0.0, 128
    %1345 = vxpose.xlu0.b32.cont [7/16] 0.0, 128
    %1346 = vxpose.xlu0.b32.cont [8/16] 0.0, 128
    %1347 = vxpose.xlu0.b32.cont [9/16] 0.0, 128
    %1348 = vxpose.xlu0.b32.cont [10/16] 0.0, 128
    %1349 = vxpose.xlu0.b32.cont [11/16] 0.0, 128
    %1350 = vxpose.xlu0.b32.cont [12/16] 0.0, 128
    %1351 = vxpose.xlu0.b32.cont [13/16] 0.0, 128
    %1352 = vxpose.xlu0.b32.cont [14/16] 0.0, 128
    %1353 = vxpose.xlu0.b32.cont [15/16] 0.0, 128
    %1354 = vxpose.xlu0.b32.end [16/16] 0.0, 128
    %v1355 = vpop.trf.xlu0
    %v1356 = vpop.trf.xlu0
    %v1357 = vpop.trf.xlu0
    %v1358 = vpop.trf.xlu0
    %v1359 = vpop.trf.xlu0
    %v1360 = vpop.trf.xlu0
    %v1361 = vpop.trf.xlu0
    %v1362 = vpop.trf.xlu0
    %v1363 = vpop.trf.xlu0
    %v1364 = vpop.trf.xlu0
    %v1365 = vpop.trf.xlu0
    %v1366 = vpop.trf.xlu0
    %v1367 = vpop.trf.xlu0
    %v1368 = vpop.trf.xlu0
    %v1369 = vpop.trf.xlu0
    %v1370 = vpop.trf.xlu0
    %1371 = vxpose.xlu0.b32.start [1/16] %v391, 128
    %1372 = vxpose.xlu0.b32.cont [2/16] %v393, 128
    %1373 = vxpose.xlu0.b32.cont [3/16] 0.0, 128
    %1374 = vxpose.xlu0.b32.cont [4/16] 0.0, 128
    %1375 = vxpose.xlu0.b32.cont [5/16] 0.0, 128
    %1376 = vxpose.xlu0.b32.cont [6/16] 0.0, 128
    %1377 = vxpose.xlu0.b32.cont [7/16] 0.0, 128
    %1378 = vxpose.xlu0.b32.cont [8/16] 0.0, 128
    %1379 = vxpose.xlu0.b32.cont [9/16] 0.0, 128
    %1380 = vxpose.xlu0.b32.cont [10/16] 0.0, 128
    %1381 = vxpose.xlu0.b32.cont [11/16] 0.0, 128
    %1382 = vxpose.xlu0.b32.cont [12/16] 0.0, 128
    %1383 = vxpose.xlu0.b32.cont [13/16] 0.0, 128
    %1384 = vxpose.xlu0.b32.cont [14/16] 0.0, 128
    %1385 = vxpose.xlu0.b32.cont [15/16] 0.0, 128
    %1386 = vxpose.xlu0.b32.end [16/16] 0.0, 128
    %v1387 = vpop.trf.xlu0
    %v1388 = vpop.trf.xlu0
    %v1389 = vpop.trf.xlu0
    %v1390 = vpop.trf.xlu0
    %v1391 = vpop.trf.xlu0
    %v1392 = vpop.trf.xlu0
    %v1393 = vpop.trf.xlu0
    %v1394 = vpop.trf.xlu0
    %v1395 = vpop.trf.xlu0
    %v1396 = vpop.trf.xlu0
    %v1397 = vpop.trf.xlu0
    %v1398 = vpop.trf.xlu0
    %v1399 = vpop.trf.xlu0
    %v1400 = vpop.trf.xlu0
    %v1401 = vpop.trf.xlu0
    %v1402 = vpop.trf.xlu0
    %v1404 = vsel %vm588, %v1227, 0
    %v1407 = vsel %vm588, %v1228, 0
    %v1410 = vsel %vm588, %v1199, 0
    %v1413 = vsel %vm588, %v1200, 0
    %1415 = vmatprep.subr.mxu0 0.0
    %1416 = vmatpush1.xpose.msra.mxu0 %v1410
    %1417 = vmatprep.subr.mxu0 0.0
    %1418 = vmatpush1.xpose.msra.mxu0 %v1413
    %1419 = vmatprep.subr.mxu0 0.0
    %1420 = vmatpush1.xpose.msra.mxu0 0.0
    %1421 = vmatprep.subr.mxu0 0.0
    %1422 = vmatpush1.xpose.msra.mxu0 0.0
    %1423 = vmatprep.subr.mxu0 0.0
    %1424 = vmatpush1.xpose.msra.mxu0 0.0
    %1425 = vmatprep.subr.mxu0 0.0
    %1426 = vmatpush1.xpose.msra.mxu0 0.0
    %1427 = vmatprep.subr.mxu0 0.0
    %1428 = vmatpush1.xpose.msra.mxu0 0.0
    %1429 = vmatprep.subr.mxu0 0.0
    %1430 = vmatpush1.xpose.msra.mxu0 0.0
    %1431 = vmatprep.subr.mxu0 0.0
    %1432 = vmatpush1.xpose.msra.mxu0 0.0
    %1433 = vmatprep.subr.mxu0 0.0
    %1434 = vmatpush1.xpose.msra.mxu0 0.0
    %1435 = vmatprep.subr.mxu0 0.0
    %1436 = vmatpush1.xpose.msra.mxu0 0.0
    %1437 = vmatprep.subr.mxu0 0.0
    %1438 = vmatpush1.xpose.msra.mxu0 0.0
    %1439 = vmatprep.subr.mxu0 0.0
    %1440 = vmatpush1.xpose.msra.mxu0 0.0
    %1441 = vmatprep.subr.mxu0 0.0
    %1442 = vmatpush1.xpose.msra.mxu0 0.0
    %1443 = vmatprep.subr.mxu0 0.0
    %1444 = vmatpush1.xpose.msra.mxu0 0.0
    %1445 = vmatprep.subr.mxu0 0.0
    %1446 = vmatpush1.xpose.msra.mxu0 0.0
    %1447 = vmatprep.subr.mxu0 0.0
    %1448 = vmatpush1.xpose.msra.mxu0 0.0
    %1449 = vmatprep.subr.mxu0 0.0
    %1450 = vmatpush1.xpose.msra.mxu0 0.0
    %1451 = vmatprep.subr.mxu0 0.0
    %1452 = vmatpush1.xpose.msra.mxu0 0.0
    %1453 = vmatprep.subr.mxu0 0.0
    %1454 = vmatpush1.xpose.msra.mxu0 0.0
    %1455 = vmatprep.subr.mxu0 0.0
    %1456 = vmatpush1.xpose.msra.mxu0 0.0
    %1457 = vmatprep.subr.mxu0 0.0
    %1458 = vmatpush1.xpose.msra.mxu0 0.0
    %1459 = vmatprep.subr.mxu0 0.0
    %1460 = vmatpush1.xpose.msra.mxu0 0.0
    %1461 = vmatprep.subr.mxu0 0.0
    %1462 = vmatpush1.xpose.msra.mxu0 0.0
    %1463 = vmatprep.subr.mxu0 0.0
    %1464 = vmatpush1.xpose.msra.mxu0 0.0
    %1465 = vmatprep.subr.mxu0 0.0
    %1466 = vmatpush1.xpose.msra.mxu0 0.0
    %1467 = vmatprep.subr.mxu0 0.0
    %1468 = vmatpush1.xpose.msra.mxu0 0.0
    %1469 = vmatprep.subr.mxu0 0.0
    %1470 = vmatpush1.xpose.msra.mxu0 0.0
    %1471 = vmatprep.subr.mxu0 0.0
    %1472 = vmatpush1.xpose.msra.mxu0 0.0
    %1473 = vmatprep.subr.mxu0 0.0
    %1474 = vmatpush1.xpose.msra.mxu0 0.0
    %1475 = vmatprep.subr.mxu0 0.0
    %1476 = vmatpush1.xpose.msra.mxu0 0.0
    %1477 = vmatprep.subr.mxu0 0.0
    %1478 = vmatpush1.xpose.msra.mxu0 0.0
    %1479 = vmatprep.mubr.f32.mxu0 0.0
    %1480 = vmatmul.mubr.f32.gmra.mrb[0].mxu0 %v1404
    %v1481 = vpop.f32.mrb[0].mxu0
    %v1482 = vadd.f32 0.0, %v1481
    %v1483 = vpop.f32.mrb[0].mxu0
    %1484 = vmatprep.mubr.f32.mxu0 0.0
    %1485 = vmatmul.mubr.f32.gmra.mrb[0].mxu0 %v1407
    %v1486 = vpop.f32.mrb[0].mxu0
    %v1487 = vadd.f32 0.0, %v1486
    %v1488 = vpop.f32.mrb[0].mxu0
    %1489 = vdwg.mxu0
    %v1491 = vsel %vm588, %v1259, 0
    %v1494 = vsel %vm588, %v1260, 0
    %v1497 = vsel %vm588, %v1201, 0
    %v1500 = vsel %vm588, %v1202, 0
    %1502 = vmatprep.subr.mxu0 0.0
    %1503 = vmatpush1.xpose.msra.mxu0 %v1497
    %1504 = vmatprep.subr.mxu0 0.0
    %1505 = vmatpush1.xpose.msra.mxu0 %v1500
    %1506 = vmatprep.subr.mxu0 0.0
    %1507 = vmatpush1.xpose.msra.mxu0 0.0
    %1508 = vmatprep.subr.mxu0 0.0
    %1509 = vmatpush1.xpose.msra.mxu0 0.0
    %1510 = vmatprep.subr.mxu0 0.0
    %1511 = vmatpush1.xpose.msra.mxu0 0.0
    %1512 = vmatprep.subr.mxu0 0.0
    %1513 = vmatpush1.xpose.msra.mxu0 0.0
    %1514 = vmatprep.subr.mxu0 0.0
    %1515 = vmatpush1.xpose.msra.mxu0 0.0
    %1516 = vmatprep.subr.mxu0 0.0
    %1517 = vmatpush1.xpose.msra.mxu0 0.0
    %1518 = vmatprep.subr.mxu0 0.0
    %1519 = vmatpush1.xpose.msra.mxu0 0.0
    %1520 = vmatprep.subr.mxu0 0.0
    %1521 = vmatpush1.xpose.msra.mxu0 0.0
    %1522 = vmatprep.subr.mxu0 0.0
    %1523 = vmatpush1.xpose.msra.mxu0 0.0
    %1524 = vmatprep.subr.mxu0 0.0
    %1525 = vmatpush1.xpose.msra.mxu0 0.0
    %1526 = vmatprep.subr.mxu0 0.0
    %1527 = vmatpush1.xpose.msra.mxu0 0.0
    %1528 = vmatprep.subr.mxu0 0.0
    %1529 = vmatpush1.xpose.msra.mxu0 0.0
    %1530 = vmatprep.subr.mxu0 0.0
    %1531 = vmatpush1.xpose.msra.mxu0 0.0
    %1532 = vmatprep.subr.mxu0 0.0
    %1533 = vmatpush1.xpose.msra.mxu0 0.0
    %1534 = vmatprep.subr.mxu0 0.0
    %1535 = vmatpush1.xpose.msra.mxu0 0.0
    %1536 = vmatprep.subr.mxu0 0.0
    %1537 = vmatpush1.xpose.msra.mxu0 0.0
    %1538 = vmatprep.subr.mxu0 0.0
    %1539 = vmatpush1.xpose.msra.mxu0 0.0
    %1540 = vmatprep.subr.mxu0 0.0
    %1541 = vmatpush1.xpose.msra.mxu0 0.0
    %1542 = vmatprep.subr.mxu0 0.0
    %1543 = vmatpush1.xpose.msra.mxu0 0.0
    %1544 = vmatprep.subr.mxu0 0.0
    %1545 = vmatpush1.xpose.msra.mxu0 0.0
    %1546 = vmatprep.subr.mxu0 0.0
    %1547 = vmatpush1.xpose.msra.mxu0 0.0
    %1548 = vmatprep.subr.mxu0 0.0
    %1549 = vmatpush1.xpose.msra.mxu0 0.0
    %1550 = vmatprep.subr.mxu0 0.0
    %1551 = vmatpush1.xpose.msra.mxu0 0.0
    %1552 = vmatprep.subr.mxu0 0.0
    %1553 = vmatpush1.xpose.msra.mxu0 0.0
    %1554 = vmatprep.subr.mxu0 0.0
    %1555 = vmatpush1.xpose.msra.mxu0 0.0
    %1556 = vmatprep.subr.mxu0 0.0
    %1557 = vmatpush1.xpose.msra.mxu0 0.0
    %1558 = vmatprep.subr.mxu0 0.0
    %1559 = vmatpush1.xpose.msra.mxu0 0.0
    %1560 = vmatprep.subr.mxu0 0.0
    %1561 = vmatpush1.xpose.msra.mxu0 0.0
    %1562 = vmatprep.subr.mxu0 0.0
    %1563 = vmatpush1.xpose.msra.mxu0 0.0
    %1564 = vmatprep.subr.mxu0 0.0
    %1565 = vmatpush1.xpose.msra.mxu0 0.0
    %1566 = vmatprep.mubr.f32.mxu0 0.0
    %1567 = vmatmul.mubr.f32.gmra.mrb[0].mxu0 %v1491
    %v1568 = vpop.f32.mrb[0].mxu0
    %v1569 = vadd.f32 0.0, %v1568
    %v1570 = vpop.f32.mrb[0].mxu0
    %1571 = vmatprep.mubr.f32.mxu0 0.0
    %1572 = vmatmul.mubr.f32.gmra.mrb[0].mxu0 %v1494
    %v1573 = vpop.f32.mrb[0].mxu0
    %v1574 = vadd.f32 0.0, %v1573
    %v1575 = vpop.f32.mrb[0].mxu0
    %1576 = vdwg.mxu0
    %v1578 = vsel %vm588, %v1291, 0
    %v1581 = vsel %vm588, %v1292, 0
    %v1584 = vsel %vm588, %v1203, 0
    %v1587 = vsel %vm588, %v1204, 0
    %1589 = vmatprep.subr.mxu0 0.0
    %1590 = vmatpush1.xpose.msra.mxu0 %v1584
    %1591 = vmatprep.subr.mxu0 0.0
    %1592 = vmatpush1.xpose.msra.mxu0 %v1587
    %1593 = vmatprep.subr.mxu0 0.0
    %1594 = vmatpush1.xpose.msra.mxu0 0.0
    %1595 = vmatprep.subr.mxu0 0.0
    %1596 = vmatpush1.xpose.msra.mxu0 0.0
    %1597 = vmatprep.subr.mxu0 0.0
    %1598 = vmatpush1.xpose.msra.mxu0 0.0
    %1599 = vmatprep.subr.mxu0 0.0
    %1600 = vmatpush1.xpose.msra.mxu0 0.0
    %1601 = vmatprep.subr.mxu0 0.0
    %1602 = vmatpush1.xpose.msra.mxu0 0.0
    %1603 = vmatprep.subr.mxu0 0.0
    %1604 = vmatpush1.xpose.msra.mxu0 0.0
    %1605 = vmatprep.subr.mxu0 0.0
    %1606 = vmatpush1.xpose.msra.mxu0 0.0
    %1607 = vmatprep.subr.mxu0 0.0
    %1608 = vmatpush1.xpose.msra.mxu0 0.0
    %1609 = vmatprep.subr.mxu0 0.0
    %1610 = vmatpush1.xpose.msra.mxu0 0.0
    %1611 = vmatprep.subr.mxu0 0.0
    %1612 = vmatpush1.xpose.msra.mxu0 0.0
    %1613 = vmatprep.subr.mxu0 0.0
    %1614 = vmatpush1.xpose.msra.mxu0 0.0
    %1615 = vmatprep.subr.mxu0 0.0
    %1616 = vmatpush1.xpose.msra.mxu0 0.0
    %1617 = vmatprep.subr.mxu0 0.0
    %1618 = vmatpush1.xpose.msra.mxu0 0.0
    %1619 = vmatprep.subr.mxu0 0.0
    %1620 = vmatpush1.xpose.msra.mxu0 0.0
    %1621 = vmatprep.subr.mxu0 0.0
    %1622 = vmatpush1.xpose.msra.mxu0 0.0
    %1623 = vmatprep.subr.mxu0 0.0
    %1624 = vmatpush1.xpose.msra.mxu0 0.0
    %1625 = vmatprep.subr.mxu0 0.0
    %1626 = vmatpush1.xpose.msra.mxu0 0.0
    %1627 = vmatprep.subr.mxu0 0.0
    %1628 = vmatpush1.xpose.msra.mxu0 0.0
    %1629 = vmatprep.subr.mxu0 0.0
    %1630 = vmatpush1.xpose.msra.mxu0 0.0
    %1631 = vmatprep.subr.mxu0 0.0
    %1632 = vmatpush1.xpose.msra.mxu0 0.0
    %1633 = vmatprep.subr.mxu0 0.0
    %1634 = vmatpush1.xpose.msra.mxu0 0.0
    %1635 = vmatprep.subr.mxu0 0.0
    %1636 = vmatpush1.xpose.msra.mxu0 0.0
    %1637 = vmatprep.subr.mxu0 0.0
    %1638 = vmatpush1.xpose.msra.mxu0 0.0
    %1639 = vmatprep.subr.mxu0 0.0
    %1640 = vmatpush1.xpose.msra.mxu0 0.0
    %1641 = vmatprep.subr.mxu0 0.0
    %1642 = vmatpush1.xpose.msra.mxu0 0.0
    %1643 = vmatprep.subr.mxu0 0.0
    %1644 = vmatpush1.xpose.msra.mxu0 0.0
    %1645 = vmatprep.subr.mxu0 0.0
    %1646 = vmatpush1.xpose.msra.mxu0 0.0
    %1647 = vmatprep.subr.mxu0 0.0
    %1648 = vmatpush1.xpose.msra.mxu0 0.0
    %1649 = vmatprep.subr.mxu0 0.0
    %1650 = vmatpush1.xpose.msra.mxu0 0.0
    %1651 = vmatprep.subr.mxu0 0.0
    %1652 = vmatpush1.xpose.msra.mxu0 0.0
    %1653 = vmatprep.mubr.f32.mxu0 0.0
    %1654 = vmatmul.mubr.f32.gmra.mrb[0].mxu0 %v1578
    %v1655 = vpop.f32.mrb[0].mxu0
    %v1656 = vadd.f32 0.0, %v1655
    %v1657 = vpop.f32.mrb[0].mxu0
    %1658 = vmatprep.mubr.f32.mxu0 0.0
    %1659 = vmatmul.mubr.f32.gmra.mrb[0].mxu0 %v1581
    %v1660 = vpop.f32.mrb[0].mxu0
    %v1661 = vadd.f32 0.0, %v1660
    %v1662 = vpop.f32.mrb[0].mxu0
    %1663 = vdwg.mxu0
    %v1665 = vsel %vm588, %v1323, 0
    %v1668 = vsel %vm588, %v1324, 0
    %v1671 = vsel %vm588, %v1205, 0
    %v1674 = vsel %vm588, %v1206, 0
    %1676 = vmatprep.subr.mxu0 0.0
    %1677 = vmatpush1.xpose.msra.mxu0 %v1671
    %1678 = vmatprep.subr.mxu0 0.0
    %1679 = vmatpush1.xpose.msra.mxu0 %v1674
    %1680 = vmatprep.subr.mxu0 0.0
    %1681 = vmatpush1.xpose.msra.mxu0 0.0
    %1682 = vmatprep.subr.mxu0 0.0
    %1683 = vmatpush1.xpose.msra.mxu0 0.0
    %1684 = vmatprep.subr.mxu0 0.0
    %1685 = vmatpush1.xpose.msra.mxu0 0.0
    %1686 = vmatprep.subr.mxu0 0.0
    %1687 = vmatpush1.xpose.msra.mxu0 0.0
    %1688 = vmatprep.subr.mxu0 0.0
    %1689 = vmatpush1.xpose.msra.mxu0 0.0
    %1690 = vmatprep.subr.mxu0 0.0
    %1691 = vmatpush1.xpose.msra.mxu0 0.0
    %1692 = vmatprep.subr.mxu0 0.0
    %1693 = vmatpush1.xpose.msra.mxu0 0.0
    %1694 = vmatprep.subr.mxu0 0.0
    %1695 = vmatpush1.xpose.msra.mxu0 0.0
    %1696 = vmatprep.subr.mxu0 0.0
    %1697 = vmatpush1.xpose.msra.mxu0 0.0
    %1698 = vmatprep.subr.mxu0 0.0
    %1699 = vmatpush1.xpose.msra.mxu0 0.0
    %1700 = vmatprep.subr.mxu0 0.0
    %1701 = vmatpush1.xpose.msra.mxu0 0.0
    %1702 = vmatprep.subr.mxu0 0.0
    %1703 = vmatpush1.xpose.msra.mxu0 0.0
    %1704 = vmatprep.subr.mxu0 0.0
    %1705 = vmatpush1.xpose.msra.mxu0 0.0
    %1706 = vmatprep.subr.mxu0 0.0
    %1707 = vmatpush1.xpose.msra.mxu0 0.0
    %1708 = vmatprep.subr.mxu0 0.0
    %1709 = vmatpush1.xpose.msra.mxu0 0.0
    %1710 = vmatprep.subr.mxu0 0.0
    %1711 = vmatpush1.xpose.msra.mxu0 0.0
    %1712 = vmatprep.subr.mxu0 0.0
    %1713 = vmatpush1.xpose.msra.mxu0 0.0
    %1714 = vmatprep.subr.mxu0 0.0
    %1715 = vmatpush1.xpose.msra.mxu0 0.0
    %1716 = vmatprep.subr.mxu0 0.0
    %1717 = vmatpush1.xpose.msra.mxu0 0.0
    %1718 = vmatprep.subr.mxu0 0.0
    %1719 = vmatpush1.xpose.msra.mxu0 0.0
    %1720 = vmatprep.subr.mxu0 0.0
    %1721 = vmatpush1.xpose.msra.mxu0 0.0
    %1722 = vmatprep.subr.mxu0 0.0
    %1723 = vmatpush1.xpose.msra.mxu0 0.0
    %1724 = vmatprep.subr.mxu0 0.0
    %1725 = vmatpush1.xpose.msra.mxu0 0.0
    %1726 = vmatprep.subr.mxu0 0.0
    %1727 = vmatpush1.xpose.msra.mxu0 0.0
    %1728 = vmatprep.subr.mxu0 0.0
    %1729 = vmatpush1.xpose.msra.mxu0 0.0
    %1730 = vmatprep.subr.mxu0 0.0
    %1731 = vmatpush1.xpose.msra.mxu0 0.0
    %1732 = vmatprep.subr.mxu0 0.0
    %1733 = vmatpush1.xpose.msra.mxu0 0.0
    %1734 = vmatprep.subr.mxu0 0.0
    %1735 = vmatpush1.xpose.msra.mxu0 0.0
    %1736 = vmatprep.subr.mxu0 0.0
    %1737 = vmatpush1.xpose.msra.mxu0 0.0
    %1738 = vmatprep.subr.mxu0 0.0
    %1739 = vmatpush1.xpose.msra.mxu0 0.0
    %1740 = vmatprep.mubr.f32.mxu0 0.0
    %1741 = vmatmul.mubr.f32.gmra.mrb[0].mxu0 %v1665
    %v1742 = vpop.f32.mrb[0].mxu0
    %v1743 = vadd.f32 0.0, %v1742
    %v1744 = vpop.f32.mrb[0].mxu0
    %1745 = vmatprep.mubr.f32.mxu0 0.0
    %1746 = vmatmul.mubr.f32.gmra.mrb[0].mxu0 %v1668
    %v1747 = vpop.f32.mrb[0].mxu0
    %v1748 = vadd.f32 0.0, %v1747
    %v1749 = vpop.f32.mrb[0].mxu0
    %1750 = vdwg.mxu0
    %v1752 = vsel %vm588, %v1355, 0
    %v1755 = vsel %vm588, %v1356, 0
    %v1758 = vsel %vm588, %v1207, 0
    %v1761 = vsel %vm588, %v1208, 0
    %1763 = vmatprep.subr.mxu0 0.0
    %1764 = vmatpush1.xpose.msra.mxu0 %v1758
    %1765 = vmatprep.subr.mxu0 0.0
    %1766 = vmatpush1.xpose.msra.mxu0 %v1761
    %1767 = vmatprep.subr.mxu0 0.0
    %1768 = vmatpush1.xpose.msra.mxu0 0.0
    %1769 = vmatprep.subr.mxu0 0.0
    %1770 = vmatpush1.xpose.msra.mxu0 0.0
    %1771 = vmatprep.subr.mxu0 0.0
    %1772 = vmatpush1.xpose.msra.mxu0 0.0
    %1773 = vmatprep.subr.mxu0 0.0
    %1774 = vmatpush1.xpose.msra.mxu0 0.0
    %1775 = vmatprep.subr.mxu0 0.0
    %1776 = vmatpush1.xpose.msra.mxu0 0.0
    %1777 = vmatprep.subr.mxu0 0.0
    %1778 = vmatpush1.xpose.msra.mxu0 0.0
    %1779 = vmatprep.subr.mxu0 0.0
    %1780 = vmatpush1.xpose.msra.mxu0 0.0
    %1781 = vmatprep.subr.mxu0 0.0
    %1782 = vmatpush1.xpose.msra.mxu0 0.0
    %1783 = vmatprep.subr.mxu0 0.0
    %1784 = vmatpush1.xpose.msra.mxu0 0.0
    %1785 = vmatprep.subr.mxu0 0.0
    %1786 = vmatpush1.xpose.msra.mxu0 0.0
    %1787 = vmatprep.subr.mxu0 0.0
    %1788 = vmatpush1.xpose.msra.mxu0 0.0
    %1789 = vmatprep.subr.mxu0 0.0
    %1790 = vmatpush1.xpose.msra.mxu0 0.0
    %1791 = vmatprep.subr.mxu0 0.0
    %1792 = vmatpush1.xpose.msra.mxu0 0.0
    %1793 = vmatprep.subr.mxu0 0.0
    %1794 = vmatpush1.xpose.msra.mxu0 0.0
    %1795 = vmatprep.subr.mxu0 0.0
    %1796 = vmatpush1.xpose.msra.mxu0 0.0
    %1797 = vmatprep.subr.mxu0 0.0
    %1798 = vmatpush1.xpose.msra.mxu0 0.0
    %1799 = vmatprep.subr.mxu0 0.0
    %1800 = vmatpush1.xpose.msra.mxu0 0.0
    %1801 = vmatprep.subr.mxu0 0.0
    %1802 = vmatpush1.xpose.msra.mxu0 0.0
    %1803 = vmatprep.subr.mxu0 0.0
    %1804 = vmatpush1.xpose.msra.mxu0 0.0
    %1805 = vmatprep.subr.mxu0 0.0
    %1806 = vmatpush1.xpose.msra.mxu0 0.0
    %1807 = vmatprep.subr.mxu0 0.0
    %1808 = vmatpush1.xpose.msra.mxu0 0.0
    %1809 = vmatprep.subr.mxu0 0.0
    %1810 = vmatpush1.xpose.msra.mxu0 0.0
    %1811 = vmatprep.subr.mxu0 0.0
    %1812 = vmatpush1.xpose.msra.mxu0 0.0
    %1813 = vmatprep.subr.mxu0 0.0
    %1814 = vmatpush1.xpose.msra.mxu0 0.0
    %1815 = vmatprep.subr.mxu0 0.0
    %1816 = vmatpush1.xpose.msra.mxu0 0.0
    %1817 = vmatprep.subr.mxu0 0.0
    %1818 = vmatpush1.xpose.msra.mxu0 0.0
    %1819 = vmatprep.subr.mxu0 0.0
    %1820 = vmatpush1.xpose.msra.mxu0 0.0
    %1821 = vmatprep.subr.mxu0 0.0
    %1822 = vmatpush1.xpose.msra.mxu0 0.0
    %1823 = vmatprep.subr.mxu0 0.0
    %1824 = vmatpush1.xpose.msra.mxu0 0.0
    %1825 = vmatprep.subr.mxu0 0.0
    %1826 = vmatpush1.xpose.msra.mxu0 0.0
    %1827 = vmatprep.mubr.f32.mxu0 0.0
    %1828 = vmatmul.mubr.f32.gmra.mrb[0].mxu0 %v1752
    %v1829 = vpop.f32.mrb[0].mxu0
    %v1830 = vadd.f32 0.0, %v1829
    %v1831 = vpop.f32.mrb[0].mxu0
    %1832 = vmatprep.mubr.f32.mxu0 0.0
    %1833 = vmatmul.mubr.f32.gmra.mrb[0].mxu0 %v1755
    %v1834 = vpop.f32.mrb[0].mxu0
    %v1835 = vadd.f32 0.0, %v1834
    %v1836 = vpop.f32.mrb[0].mxu0
    %1837 = vdwg.mxu0
    %v1839 = vsel %vm588, %v1387, 0
    %v1842 = vsel %vm588, %v1388, 0
    %v1845 = vsel %vm588, %v1209, 0
    %v1848 = vsel %vm588, %v1210, 0
    %1850 = vmatprep.subr.mxu0 0.0
    %1851 = vmatpush1.xpose.msra.mxu0 %v1845
    %1852 = vmatprep.subr.mxu0 0.0
    %1853 = vmatpush1.xpose.msra.mxu0 %v1848
    %1854 = vmatprep.subr.mxu0 0.0
    %1855 = vmatpush1.xpose.msra.mxu0 0.0
    %1856 = vmatprep.subr.mxu0 0.0
    %1857 = vmatpush1.xpose.msra.mxu0 0.0
    %1858 = vmatprep.subr.mxu0 0.0
    %1859 = vmatpush1.xpose.msra.mxu0 0.0
    %1860 = vmatprep.subr.mxu0 0.0
    %1861 = vmatpush1.xpose.msra.mxu0 0.0
    %1862 = vmatprep.subr.mxu0 0.0
    %1863 = vmatpush1.xpose.msra.mxu0 0.0
    %1864 = vmatprep.subr.mxu0 0.0
    %1865 = vmatpush1.xpose.msra.mxu0 0.0
    %1866 = vmatprep.subr.mxu0 0.0
    %1867 = vmatpush1.xpose.msra.mxu0 0.0
    %1868 = vmatprep.subr.mxu0 0.0
    %1869 = vmatpush1.xpose.msra.mxu0 0.0
    %1870 = vmatprep.subr.mxu0 0.0
    %1871 = vmatpush1.xpose.msra.mxu0 0.0
    %1872 = vmatprep.subr.mxu0 0.0
    %1873 = vmatpush1.xpose.msra.mxu0 0.0
    %1874 = vmatprep.subr.mxu0 0.0
    %1875 = vmatpush1.xpose.msra.mxu0 0.0
    %1876 = vmatprep.subr.mxu0 0.0
    %1877 = vmatpush1.xpose.msra.mxu0 0.0
    %1878 = vmatprep.subr.mxu0 0.0
    %1879 = vmatpush1.xpose.msra.mxu0 0.0
    %1880 = vmatprep.subr.mxu0 0.0
    %1881 = vmatpush1.xpose.msra.mxu0 0.0
    %1882 = vmatprep.subr.mxu0 0.0
    %1883 = vmatpush1.xpose.msra.mxu0 0.0
    %1884 = vmatprep.subr.mxu0 0.0
    %1885 = vmatpush1.xpose.msra.mxu0 0.0
    %1886 = vmatprep.subr.mxu0 0.0
    %1887 = vmatpush1.xpose.msra.mxu0 0.0
    %1888 = vmatprep.subr.mxu0 0.0
    %1889 = vmatpush1.xpose.msra.mxu0 0.0
    %1890 = vmatprep.subr.mxu0 0.0
    %1891 = vmatpush1.xpose.msra.mxu0 0.0
    %1892 = vmatprep.subr.mxu0 0.0
    %1893 = vmatpush1.xpose.msra.mxu0 0.0
    %1894 = vmatprep.subr.mxu0 0.0
    %1895 = vmatpush1.xpose.msra.mxu0 0.0
    %1896 = vmatprep.subr.mxu0 0.0
    %1897 = vmatpush1.xpose.msra.mxu0 0.0
    %1898 = vmatprep.subr.mxu0 0.0
    %1899 = vmatpush1.xpose.msra.mxu0 0.0
    %1900 = vmatprep.subr.mxu0 0.0
    %1901 = vmatpush1.xpose.msra.mxu0 0.0
    %1902 = vmatprep.subr.mxu0 0.0
    %1903 = vmatpush1.xpose.msra.mxu0 0.0
    %1904 = vmatprep.subr.mxu0 0.0
    %1905 = vmatpush1.xpose.msra.mxu0 0.0
    %1906 = vmatprep.subr.mxu0 0.0
    %1907 = vmatpush1.xpose.msra.mxu0 0.0
    %1908 = vmatprep.subr.mxu0 0.0
    %1909 = vmatpush1.xpose.msra.mxu0 0.0
    %1910 = vmatprep.subr.mxu0 0.0
    %1911 = vmatpush1.xpose.msra.mxu0 0.0
    %1912 = vmatprep.subr.mxu0 0.0
    %1913 = vmatpush1.xpose.msra.mxu0 0.0
    %1914 = vmatprep.mubr.f32.mxu0 0.0
    %1915 = vmatmul.mubr.f32.gmra.mrb[0].mxu0 %v1839
    %v1916 = vpop.f32.mrb[0].mxu0
    %v1917 = vadd.f32 0.0, %v1916
    %v1918 = vpop.f32.mrb[0].mxu0
    %1919 = vmatprep.mubr.f32.mxu0 0.0
    %1920 = vmatmul.mubr.f32.gmra.mrb[0].mxu0 %v1842
    %v1921 = vpop.f32.mrb[0].mxu0
    %v1922 = vadd.f32 0.0, %v1921
    %v1923 = vpop.f32.mrb[0].mxu0
    %1924 = vdwg.mxu0
    %1925 = vxpose.xlu0.b32.start [1/16] %v1482, 128
    %1926 = vxpose.xlu0.b32.cont [2/16] %v1487, 128
    %1927 = vxpose.xlu0.b32.cont [3/16] 0.0, 128
    %1928 = vxpose.xlu0.b32.cont [4/16] 0.0, 128
    %1929 = vxpose.xlu0.b32.cont [5/16] 0.0, 128
    %1930 = vxpose.xlu0.b32.cont [6/16] 0.0, 128
    %1931 = vxpose.xlu0.b32.cont [7/16] 0.0, 128
    %1932 = vxpose.xlu0.b32.cont [8/16] 0.0, 128
    %1933 = vxpose.xlu0.b32.cont [9/16] 0.0, 128
    %1934 = vxpose.xlu0.b32.cont [10/16] 0.0, 128
    %1935 = vxpose.xlu0.b32.cont [11/16] 0.0, 128
    %1936 = vxpose.xlu0.b32.cont [12/16] 0.0, 128
    %1937 = vxpose.xlu0.b32.cont [13/16] 0.0, 128
    %1938 = vxpose.xlu0.b32.cont [14/16] 0.0, 128
    %1939 = vxpose.xlu0.b32.cont [15/16] 0.0, 128
    %1940 = vxpose.xlu0.b32.end [16/16] 0.0, 128
    %v1941 = vpop.trf.xlu0
    %v1942 = vpop.trf.xlu0
    %v1943 = vpop.trf.xlu0
    %v1944 = vpop.trf.xlu0
    %v1945 = vpop.trf.xlu0
    %v1946 = vpop.trf.xlu0
    %v1947 = vpop.trf.xlu0
    %v1948 = vpop.trf.xlu0
    %v1949 = vpop.trf.xlu0
    %v1950 = vpop.trf.xlu0
    %v1951 = vpop.trf.xlu0
    %v1952 = vpop.trf.xlu0
    %v1953 = vpop.trf.xlu0
    %v1954 = vpop.trf.xlu0
    %v1955 = vpop.trf.xlu0
    %v1956 = vpop.trf.xlu0
    %1957 = vxpose.xlu0.b32.start [1/16] %v1569, 128
    %1958 = vxpose.xlu0.b32.cont [2/16] %v1574, 128
    %1959 = vxpose.xlu0.b32.cont [3/16] 0.0, 128
    %1960 = vxpose.xlu0.b32.cont [4/16] 0.0, 128
    %1961 = vxpose.xlu0.b32.cont [5/16] 0.0, 128
    %1962 = vxpose.xlu0.b32.cont [6/16] 0.0, 128
    %1963 = vxpose.xlu0.b32.cont [7/16] 0.0, 128
    %1964 = vxpose.xlu0.b32.cont [8/16] 0.0, 128
    %1965 = vxpose.xlu0.b32.cont [9/16] 0.0, 128
    %1966 = vxpose.xlu0.b32.cont [10/16] 0.0, 128
    %1967 = vxpose.xlu0.b32.cont [11/16] 0.0, 128
    %1968 = vxpose.xlu0.b32.cont [12/16] 0.0, 128
    %1969 = vxpose.xlu0.b32.cont [13/16] 0.0, 128
    %1970 = vxpose.xlu0.b32.cont [14/16] 0.0, 128
    %1971 = vxpose.xlu0.b32.cont [15/16] 0.0, 128
    %1972 = vxpose.xlu0.b32.end [16/16] 0.0, 128
    %v1973 = vpop.trf.xlu0
    %v1974 = vpop.trf.xlu0
    %v1975 = vpop.trf.xlu0
    %v1976 = vpop.trf.xlu0
    %v1977 = vpop.trf.xlu0
    %v1978 = vpop.trf.xlu0
    %v1979 = vpop.trf.xlu0
    %v1980 = vpop.trf.xlu0
    %v1981 = vpop.trf.xlu0
    %v1982 = vpop.trf.xlu0
    %v1983 = vpop.trf.xlu0
    %v1984 = vpop.trf.xlu0
    %v1985 = vpop.trf.xlu0
    %v1986 = vpop.trf.xlu0
    %v1987 = vpop.trf.xlu0
    %v1988 = vpop.trf.xlu0
    %1989 = vxpose.xlu0.b32.start [1/16] %v1656, 128
    %1990 = vxpose.xlu0.b32.cont [2/16] %v1661, 128
    %1991 = vxpose.xlu0.b32.cont [3/16] 0.0, 128
    %1992 = vxpose.xlu0.b32.cont [4/16] 0.0, 128
    %1993 = vxpose.xlu0.b32.cont [5/16] 0.0, 128
    %1994 = vxpose.xlu0.b32.cont [6/16] 0.0, 128
    %1995 = vxpose.xlu0.b32.cont [7/16] 0.0, 128
    %1996 = vxpose.xlu0.b32.cont [8/16] 0.0, 128
    %1997 = vxpose.xlu0.b32.cont [9/16] 0.0, 128
    %1998 = vxpose.xlu0.b32.cont [10/16] 0.0, 128
    %1999 = vxpose.xlu0.b32.cont [11/16] 0.0, 128
    %2000 = vxpose.xlu0.b32.cont [12/16] 0.0, 128
    %2001 = vxpose.xlu0.b32.cont [13/16] 0.0, 128
    %2002 = vxpose.xlu0.b32.cont [14/16] 0.0, 128
    %2003 = vxpose.xlu0.b32.cont [15/16] 0.0, 128
    %2004 = vxpose.xlu0.b32.end [16/16] 0.0, 128
    %v2005 = vpop.trf.xlu0
    %v2006 = vpop.trf.xlu0
    %v2007 = vpop.trf.xlu0
    %v2008 = vpop.trf.xlu0
    %v2009 = vpop.trf.xlu0
    %v2010 = vpop.trf.xlu0
    %v2011 = vpop.trf.xlu0
    %v2012 = vpop.trf.xlu0
    %v2013 = vpop.trf.xlu0
    %v2014 = vpop.trf.xlu0
    %v2015 = vpop.trf.xlu0
    %v2016 = vpop.trf.xlu0
    %v2017 = vpop.trf.xlu0
    %v2018 = vpop.trf.xlu0
    %v2019 = vpop.trf.xlu0
    %v2020 = vpop.trf.xlu0
    %2021 = vxpose.xlu0.b32.start [1/16] %v1743, 128
    %2022 = vxpose.xlu0.b32.cont [2/16] %v1748, 128
    %2023 = vxpose.xlu0.b32.cont [3/16] 0.0, 128
    %2024 = vxpose.xlu0.b32.cont [4/16] 0.0, 128
    %2025 = vxpose.xlu0.b32.cont [5/16] 0.0, 128
    %2026 = vxpose.xlu0.b32.cont [6/16] 0.0, 128
    %2027 = vxpose.xlu0.b32.cont [7/16] 0.0, 128
    %2028 = vxpose.xlu0.b32.cont [8/16] 0.0, 128
    %2029 = vxpose.xlu0.b32.cont [9/16] 0.0, 128
    %2030 = vxpose.xlu0.b32.cont [10/16] 0.0, 128
    %2031 = vxpose.xlu0.b32.cont [11/16] 0.0, 128
    %2032 = vxpose.xlu0.b32.cont [12/16] 0.0, 128
    %2033 = vxpose.xlu0.b32.cont [13/16] 0.0, 128
    %2034 = vxpose.xlu0.b32.cont [14/16] 0.0, 128
    %2035 = vxpose.xlu0.b32.cont [15/16] 0.0, 128
    %2036 = vxpose.xlu0.b32.end [16/16] 0.0, 128
    %v2037 = vpop.trf.xlu0
    %v2038 = vpop.trf.xlu0
    %v2039 = vpop.trf.xlu0
    %v2040 = vpop.trf.xlu0
    %v2041 = vpop.trf.xlu0
    %v2042 = vpop.trf.xlu0
    %v2043 = vpop.trf.xlu0
    %v2044 = vpop.trf.xlu0
    %v2045 = vpop.trf.xlu0
    %v2046 = vpop.trf.xlu0
    %v2047 = vpop.trf.xlu0
    %v2048 = vpop.trf.xlu0
    %v2049 = vpop.trf.xlu0
    %v2050 = vpop.trf.xlu0
    %v2051 = vpop.trf.xlu0
    %v2052 = vpop.trf.xlu0
    %2053 = vxpose.xlu0.b32.start [1/16] %v1830, 128
    %2054 = vxpose.xlu0.b32.cont [2/16] %v1835, 128
    %2055 = vxpose.xlu0.b32.cont [3/16] 0.0, 128
    %2056 = vxpose.xlu0.b32.cont [4/16] 0.0, 128
    %2057 = vxpose.xlu0.b32.cont [5/16] 0.0, 128
    %2058 = vxpose.xlu0.b32.cont [6/16] 0.0, 128
    %2059 = vxpose.xlu0.b32.cont [7/16] 0.0, 128
    %2060 = vxpose.xlu0.b32.cont [8/16] 0.0, 128
    %2061 = vxpose.xlu0.b32.cont [9/16] 0.0, 128
    %2062 = vxpose.xlu0.b32.cont [10/16] 0.0, 128
    %2063 = vxpose.xlu0.b32.cont [11/16] 0.0, 128
    %2064 = vxpose.xlu0.b32.cont [12/16] 0.0, 128
    %2065 = vxpose.xlu0.b32.cont [13/16] 0.0, 128
    %2066 = vxpose.xlu0.b32.cont [14/16] 0.0, 128
    %2067 = vxpose.xlu0.b32.cont [15/16] 0.0, 128
    %2068 = vxpose.xlu0.b32.end [16/16] 0.0, 128
    %v2069 = vpop.trf.xlu0
    %v2070 = vpop.trf.xlu0
    %v2071 = vpop.trf.xlu0
    %v2072 = vpop.trf.xlu0
    %v2073 = vpop.trf.xlu0
    %v2074 = vpop.trf.xlu0
    %v2075 = vpop.trf.xlu0
    %v2076 = vpop.trf.xlu0
    %v2077 = vpop.trf.xlu0
    %v2078 = vpop.trf.xlu0
    %v2079 = vpop.trf.xlu0
    %v2080 = vpop.trf.xlu0
    %v2081 = vpop.trf.xlu0
    %v2082 = vpop.trf.xlu0
    %v2083 = vpop.trf.xlu0
    %v2084 = vpop.trf.xlu0
    %2085 = vxpose.xlu0.b32.start [1/16] %v1917, 128
    %2086 = vxpose.xlu0.b32.cont [2/16] %v1922, 128
    %2087 = vxpose.xlu0.b32.cont [3/16] 0.0, 128
    %2088 = vxpose.xlu0.b32.cont [4/16] 0.0, 128
    %2089 = vxpose.xlu0.b32.cont [5/16] 0.0, 128
    %2090 = vxpose.xlu0.b32.cont [6/16] 0.0, 128
    %2091 = vxpose.xlu0.b32.cont [7/16] 0.0, 128
    %2092 = vxpose.xlu0.b32.cont [8/16] 0.0, 128
    %2093 = vxpose.xlu0.b32.cont [9/16] 0.0, 128
    %2094 = vxpose.xlu0.b32.cont [10/16] 0.0, 128
    %2095 = vxpose.xlu0.b32.cont [11/16] 0.0, 128
    %2096 = vxpose.xlu0.b32.cont [12/16] 0.0, 128
    %2097 = vxpose.xlu0.b32.cont [13/16] 0.0, 128
    %2098 = vxpose.xlu0.b32.cont [14/16] 0.0, 128
    %2099 = vxpose.xlu0.b32.cont [15/16] 0.0, 128
    %2100 = vxpose.xlu0.b32.end [16/16] 0.0, 128
    %v2101 = vpop.trf.xlu0
    %v2102 = vpop.trf.xlu0
    %v2103 = vpop.trf.xlu0
    %v2104 = vpop.trf.xlu0
    %v2105 = vpop.trf.xlu0
    %v2106 = vpop.trf.xlu0
    %v2107 = vpop.trf.xlu0
    %v2108 = vpop.trf.xlu0
    %v2109 = vpop.trf.xlu0
    %v2110 = vpop.trf.xlu0
    %v2111 = vpop.trf.xlu0
    %v2112 = vpop.trf.xlu0
    %v2113 = vpop.trf.xlu0
    %v2114 = vpop.trf.xlu0
    %v2115 = vpop.trf.xlu0
    %v2116 = vpop.trf.xlu0
    %v2117 = vcombine.low %v1941, %v2005
    %v2118 = vcombine.high %v1941, %v2005
    %v2120 = vunpack.c.l.s4 1983009808
    %v2121 = vunpack.c.0.s8 %v2120
    %v2122 = vlaneseq
    %v2123 = vshrl.u32 %v2122, 7
    %v2124 = vsub.s32 %v2121, %v2123
    %v2125 = vrot.slane %v2117, %v2124
    %v2127 = vunpack.c.l.s4 1983009808
    %v2128 = vunpack.c.0.s8 %v2127
    %v2129 = vlaneseq
    %v2130 = vshrl.u32 %v2129, 7
    %v2131 = vsub.s32 %v2128, %v2130
    %v2132 = vrot.slane %v2118, %v2131
    %v2133 = vcombine.low %v1973, %v2037
    %v2134 = vcombine.high %v1973, %v2037
    %v2136 = vunpack.c.l.s4 1983009808
    %v2137 = vunpack.c.0.s8 %v2136
    %v2138 = vlaneseq
    %v2139 = vshrl.u32 %v2138, 7
    %v2140 = vsub.s32 %v2137, %v2139
    %v2141 = vrot.slane %v2133, %v2140
    %v2143 = vunpack.c.l.s4 1983009808
    %v2144 = vunpack.c.0.s8 %v2143
    %v2145 = vlaneseq
    %v2146 = vshrl.u32 %v2145, 7
    %v2147 = vsub.s32 %v2144, %v2146
    %v2148 = vrot.slane %v2134, %v2147
    %v2149 = vcombine.high %v2069, 0.0
    %v2151 = vunpack.c.l.s4 1983009808
    %v2152 = vunpack.c.0.s8 %v2151
    %v2153 = vlaneseq
    %v2154 = vshrl.u32 %v2153, 7
    %v2155 = vsub.s32 %v2152, %v2154
    %v2156 = vrot.slane %v2069, %v2155
    %v2158 = vunpack.c.l.s4 1983009808
    %v2159 = vunpack.c.0.s8 %v2158
    %v2160 = vlaneseq
    %v2161 = vshrl.u32 %v2160, 7
    %v2162 = vsub.s32 %v2159, %v2161
    %v2163 = vrot.slane %v2149, %v2162
    %v2164 = vcombine.high %v2101, 0.0
    %v2166 = vunpack.c.l.s4 1983009808
    %v2167 = vunpack.c.0.s8 %v2166
    %v2168 = vlaneseq
    %v2169 = vshrl.u32 %v2168, 7
    %v2170 = vsub.s32 %v2167, %v2169
    %v2171 = vrot.slane %v2101, %v2170
    %v2173 = vunpack.c.l.s4 1983009808
    %v2174 = vunpack.c.0.s8 %v2173
    %v2175 = vlaneseq
    %v2176 = vshrl.u32 %v2175, 7
    %v2177 = vsub.s32 %v2174, %v2176
    %v2178 = vrot.slane %v2164, %v2177
    %v2179 = vcombine.low %v2125, %v2141
    %v2180 = vcombine.high %v2125, %v2141
    %v2182 = vunpack.c.l.s4 1934713408
    %v2183 = vunpack.c.0.s8 %v2182
    %v2184 = vlaneseq
    %v2185 = vshrl.u32 %v2184, 7
    %v2186 = vsub.s32 %v2183, %v2185
    %v2187 = vrot.slane %v2179, %v2186
    %v2189 = vunpack.c.l.s4 1934713408
    %v2190 = vunpack.c.0.s8 %v2189
    %v2191 = vlaneseq
    %v2192 = vshrl.u32 %v2191, 7
    %v2193 = vsub.s32 %v2190, %v2192
    %v2194 = vrot.slane %v2180, %v2193
    %v2195 = vcombine.low %v2132, %v2148
    %v2196 = vcombine.high %v2132, %v2148
    %v2198 = vunpack.c.l.s4 1934713408
    %v2199 = vunpack.c.0.s8 %v2198
    %v2200 = vlaneseq
    %v2201 = vshrl.u32 %v2200, 7
    %v2202 = vsub.s32 %v2199, %v2201
    %v2203 = vrot.slane %v2195, %v2202
    %v2205 = vunpack.c.l.s4 1934713408
    %v2206 = vunpack.c.0.s8 %v2205
    %v2207 = vlaneseq
    %v2208 = vshrl.u32 %v2207, 7
    %v2209 = vsub.s32 %v2206, %v2208
    %v2210 = vrot.slane %v2196, %v2209
    %v2211 = vcombine.low %v2156, %v2171
    %v2212 = vcombine.high %v2156, %v2171
    %v2214 = vunpack.c.l.s4 1934713408
    %v2215 = vunpack.c.0.s8 %v2214
    %v2216 = vlaneseq
    %v2217 = vshrl.u32 %v2216, 7
    %v2218 = vsub.s32 %v2215, %v2217
    %v2219 = vrot.slane %v2211, %v2218
    %v2221 = vunpack.c.l.s4 1934713408
    %v2222 = vunpack.c.0.s8 %v2221
    %v2223 = vlaneseq
    %v2224 = vshrl.u32 %v2223, 7
    %v2225 = vsub.s32 %v2222, %v2224
    %v2226 = vrot.slane %v2212, %v2225
    %v2227 = vcombine.low %v2163, %v2178
    %v2228 = vcombine.high %v2163, %v2178
    %v2230 = vunpack.c.l.s4 1934713408
    %v2231 = vunpack.c.0.s8 %v2230
    %v2232 = vlaneseq
    %v2233 = vshrl.u32 %v2232, 7
    %v2234 = vsub.s32 %v2231, %v2233
    %v2235 = vrot.slane %v2227, %v2234
    %v2237 = vunpack.c.l.s4 1934713408
    %v2238 = vunpack.c.0.s8 %v2237
    %v2239 = vlaneseq
    %v2240 = vshrl.u32 %v2239, 7
    %v2241 = vsub.s32 %v2238, %v2240
    %v2242 = vrot.slane %v2228, %v2241
    %v2243 = vcombine.low %v2187, %v2219
    %v2244 = vcombine.high %v2187, %v2219
    %v2245 = vcombine.low %v2194, %v2226
    %v2246 = vcombine.high %v2194, %v2226
    %v2247 = vcombine.low %v2203, %v2235
    %v2248 = vcombine.high %v2203, %v2235
    %v2249 = vcombine.low %v2210, %v2242
    %v2250 = vcombine.high %v2210, %v2242
    %v2251 = vcombine.low %v1942, %v2006
    %v2252 = vcombine.high %v1942, %v2006
    %v2254 = vunpack.c.l.s4 1983009808
    %v2255 = vunpack.c.0.s8 %v2254
    %v2256 = vlaneseq
    %v2257 = vshrl.u32 %v2256, 7
    %v2258 = vsub.s32 %v2255, %v2257
    %v2259 = vrot.slane %v2251, %v2258
    %v2261 = vunpack.c.l.s4 1983009808
    %v2262 = vunpack.c.0.s8 %v2261
    %v2263 = vlaneseq
    %v2264 = vshrl.u32 %v2263, 7
    %v2265 = vsub.s32 %v2262, %v2264
    %v2266 = vrot.slane %v2252, %v2265
    %v2267 = vcombine.low %v1974, %v2038
    %v2268 = vcombine.high %v1974, %v2038
    %v2270 = vunpack.c.l.s4 1983009808
    %v2271 = vunpack.c.0.s8 %v2270
    %v2272 = vlaneseq
    %v2273 = vshrl.u32 %v2272, 7
    %v2274 = vsub.s32 %v2271, %v2273
    %v2275 = vrot.slane %v2267, %v2274
    %v2277 = vunpack.c.l.s4 1983009808
    %v2278 = vunpack.c.0.s8 %v2277
    %v2279 = vlaneseq
    %v2280 = vshrl.u32 %v2279, 7
    %v2281 = vsub.s32 %v2278, %v2280
    %v2282 = vrot.slane %v2268, %v2281
    %v2283 = vcombine.high %v2070, 0.0
    %v2285 = vunpack.c.l.s4 1983009808
    %v2286 = vunpack.c.0.s8 %v2285
    %v2287 = vlaneseq
    %v2288 = vshrl.u32 %v2287, 7
    %v2289 = vsub.s32 %v2286, %v2288
    %v2290 = vrot.slane %v2070, %v2289
    %v2292 = vunpack.c.l.s4 1983009808
    %v2293 = vunpack.c.0.s8 %v2292
    %v2294 = vlaneseq
    %v2295 = vshrl.u32 %v2294, 7
    %v2296 = vsub.s32 %v2293, %v2295
    %v2297 = vrot.slane %v2283, %v2296
    %v2298 = vcombine.high %v2102, 0.0
    %v2300 = vunpack.c.l.s4 1983009808
    %v2301 = vunpack.c.0.s8 %v2300
    %v2302 = vlaneseq
    %v2303 = vshrl.u32 %v2302, 7
    %v2304 = vsub.s32 %v2301, %v2303
    %v2305 = vrot.slane %v2102, %v2304
    %v2307 = vunpack.c.l.s4 1983009808
    %v2308 = vunpack.c.0.s8 %v2307
    %v2309 = vlaneseq
    %v2310 = vshrl.u32 %v2309, 7
    %v2311 = vsub.s32 %v2308, %v2310
    %v2312 = vrot.slane %v2298, %v2311
    %v2313 = vcombine.low %v2259, %v2275
    %v2314 = vcombine.high %v2259, %v2275
    %v2316 = vunpack.c.l.s4 1934713408
    %v2317 = vunpack.c.0.s8 %v2316
    %v2318 = vlaneseq
    %v2319 = vshrl.u32 %v2318, 7
    %v2320 = vsub.s32 %v2317, %v2319
    %v2321 = vrot.slane %v2313, %v2320
    %v2323 = vunpack.c.l.s4 1934713408
    %v2324 = vunpack.c.0.s8 %v2323
    %v2325 = vlaneseq
    %v2326 = vshrl.u32 %v2325, 7
    %v2327 = vsub.s32 %v2324, %v2326
    %v2328 = vrot.slane %v2314, %v2327
    %v2329 = vcombine.low %v2266, %v2282
    %v2330 = vcombine.high %v2266, %v2282
    %v2332 = vunpack.c.l.s4 1934713408
    %v2333 = vunpack.c.0.s8 %v2332
    %v2334 = vlaneseq
    %v2335 = vshrl.u32 %v2334, 7
    %v2336 = vsub.s32 %v2333, %v2335
    %v2337 = vrot.slane %v2329, %v2336
    %v2339 = vunpack.c.l.s4 1934713408
    %v2340 = vunpack.c.0.s8 %v2339
    %v2341 = vlaneseq
    %v2342 = vshrl.u32 %v2341, 7
    %v2343 = vsub.s32 %v2340, %v2342
    %v2344 = vrot.slane %v2330, %v2343
    %v2345 = vcombine.low %v2290, %v2305
    %v2346 = vcombine.high %v2290, %v2305
    %v2348 = vunpack.c.l.s4 1934713408
    %v2349 = vunpack.c.0.s8 %v2348
    %v2350 = vlaneseq
    %v2351 = vshrl.u32 %v2350, 7
    %v2352 = vsub.s32 %v2349, %v2351
    %v2353 = vrot.slane %v2345, %v2352
    %v2355 = vunpack.c.l.s4 1934713408
    %v2356 = vunpack.c.0.s8 %v2355
    %v2357 = vlaneseq
    %v2358 = vshrl.u32 %v2357, 7
    %v2359 = vsub.s32 %v2356, %v2358
    %v2360 = vrot.slane %v2346, %v2359
    %v2361 = vcombine.low %v2297, %v2312
    %v2362 = vcombine.high %v2297, %v2312
    %v2364 = vunpack.c.l.s4 1934713408
    %v2365 = vunpack.c.0.s8 %v2364
    %v2366 = vlaneseq
    %v2367 = vshrl.u32 %v2366, 7
    %v2368 = vsub.s32 %v2365, %v2367
    %v2369 = vrot.slane %v2361, %v2368
    %v2371 = vunpack.c.l.s4 1934713408
    %v2372 = vunpack.c.0.s8 %v2371
    %v2373 = vlaneseq
    %v2374 = vshrl.u32 %v2373, 7
    %v2375 = vsub.s32 %v2372, %v2374
    %v2376 = vrot.slane %v2362, %v2375
    %v2377 = vcombine.low %v2321, %v2353
    %v2378 = vcombine.high %v2321, %v2353
    %v2379 = vcombine.low %v2328, %v2360
    %v2380 = vcombine.high %v2328, %v2360
    %v2381 = vcombine.low %v2337, %v2369
    %v2382 = vcombine.high %v2337, %v2369
    %v2383 = vcombine.low %v2344, %v2376
    %v2384 = vcombine.high %v2344, %v2376
    %v2385 = vcombine.low %v2243, %v2245
    %v2386 = vcombine.high %v2243, %v2245
    %v2388 = vunpack.c.l.s4 1983009808
    %v2389 = vunpack.c.0.s8 %v2388
    %v2390 = vlaneseq
    %v2391 = vshrl.u32 %v2390, 7
    %v2392 = vsub.s32 %v2389, %v2391
    %v2393 = vrot.slane %v2385, %v2392
    %v2395 = vunpack.c.l.s4 1983009808
    %v2396 = vunpack.c.0.s8 %v2395
    %v2397 = vlaneseq
    %v2398 = vshrl.u32 %v2397, 7
    %v2399 = vsub.s32 %v2396, %v2398
    %v2400 = vrot.slane %v2386, %v2399
    %v2401 = vcombine.low %v2244, %v2246
    %v2402 = vcombine.high %v2244, %v2246
    %v2404 = vunpack.c.l.s4 1983009808
    %v2405 = vunpack.c.0.s8 %v2404
    %v2406 = vlaneseq
    %v2407 = vshrl.u32 %v2406, 7
    %v2408 = vsub.s32 %v2405, %v2407
    %v2409 = vrot.slane %v2401, %v2408
    %v2411 = vunpack.c.l.s4 1983009808
    %v2412 = vunpack.c.0.s8 %v2411
    %v2413 = vlaneseq
    %v2414 = vshrl.u32 %v2413, 7
    %v2415 = vsub.s32 %v2412, %v2414
    %v2416 = vrot.slane %v2402, %v2415
    %v2417 = vcombine.low %v2247, %v2249
    %v2418 = vcombine.high %v2247, %v2249
    %v2420 = vunpack.c.l.s4 1983009808
    %v2421 = vunpack.c.0.s8 %v2420
    %v2422 = vlaneseq
    %v2423 = vshrl.u32 %v2422, 7
    %v2424 = vsub.s32 %v2421, %v2423
    %v2425 = vrot.slane %v2417, %v2424
    %v2427 = vunpack.c.l.s4 1983009808
    %v2428 = vunpack.c.0.s8 %v2427
    %v2429 = vlaneseq
    %v2430 = vshrl.u32 %v2429, 7
    %v2431 = vsub.s32 %v2428, %v2430
    %v2432 = vrot.slane %v2418, %v2431
    %v2433 = vcombine.low %v2248, %v2250
    %v2434 = vcombine.high %v2248, %v2250
    %v2436 = vunpack.c.l.s4 1983009808
    %v2437 = vunpack.c.0.s8 %v2436
    %v2438 = vlaneseq
    %v2439 = vshrl.u32 %v2438, 7
    %v2440 = vsub.s32 %v2437, %v2439
    %v2441 = vrot.slane %v2433, %v2440
    %v2443 = vunpack.c.l.s4 1983009808
    %v2444 = vunpack.c.0.s8 %v2443
    %v2445 = vlaneseq
    %v2446 = vshrl.u32 %v2445, 7
    %v2447 = vsub.s32 %v2444, %v2446
    %v2448 = vrot.slane %v2434, %v2447
    %v2449 = vcombine.low %v2393, %v2409
    %v2450 = vcombine.high %v2393, %v2409
    %v2452 = vunpack.c.l.s4 1934713408
    %v2453 = vunpack.c.0.s8 %v2452
    %v2454 = vlaneseq
    %v2455 = vshrl.u32 %v2454, 7
    %v2456 = vsub.s32 %v2453, %v2455
    %v2457 = vrot.slane %v2449, %v2456
    %v2459 = vunpack.c.l.s4 1934713408
    %v2460 = vunpack.c.0.s8 %v2459
    %v2461 = vlaneseq
    %v2462 = vshrl.u32 %v2461, 7
    %v2463 = vsub.s32 %v2460, %v2462
    %v2464 = vrot.slane %v2450, %v2463
    %v2465 = vcombine.low %v2400, %v2416
    %v2467 = vunpack.c.l.s4 1934713408
    %v2468 = vunpack.c.0.s8 %v2467
    %v2469 = vlaneseq
    %v2470 = vshrl.u32 %v2469, 7
    %v2471 = vsub.s32 %v2468, %v2470
    %v2472 = vrot.slane %v2465, %v2471
    %v2473 = vcombine.low %v2425, %v2441
    %v2474 = vcombine.high %v2425, %v2441
    %v2476 = vunpack.c.l.s4 1934713408
    %v2477 = vunpack.c.0.s8 %v2476
    %v2478 = vlaneseq
    %v2479 = vshrl.u32 %v2478, 7
    %v2480 = vsub.s32 %v2477, %v2479
    %v2481 = vrot.slane %v2473, %v2480
    %v2483 = vunpack.c.l.s4 1934713408
    %v2484 = vunpack.c.0.s8 %v2483
    %v2485 = vlaneseq
    %v2486 = vshrl.u32 %v2485, 7
    %v2487 = vsub.s32 %v2484, %v2486
    %v2488 = vrot.slane %v2474, %v2487
    %v2489 = vcombine.low %v2432, %v2448
    %v2491 = vunpack.c.l.s4 1934713408
    %v2492 = vunpack.c.0.s8 %v2491
    %v2493 = vlaneseq
    %v2494 = vshrl.u32 %v2493, 7
    %v2495 = vsub.s32 %v2492, %v2494
    %v2496 = vrot.slane %v2489, %v2495
    %v2497 = vcombine.low %v2457, %v2481
    %v2498 = vcombine.high %v2457, %v2481
    %v2499 = vcombine.low %v2464, %v2488
    %v2500 = vcombine.high %v2464, %v2488
    %v2501 = vcombine.low %v2472, %v2496
    %v2502 = vcombine.high %v2472, %v2496
    %v2503 = vcombine.low %v2377, %v2379
    %v2504 = vcombine.high %v2377, %v2379
    %v2506 = vunpack.c.l.s4 1983009808
    %v2507 = vunpack.c.0.s8 %v2506
    %v2508 = vlaneseq
    %v2509 = vshrl.u32 %v2508, 7
    %v2510 = vsub.s32 %v2507, %v2509
    %v2511 = vrot.slane %v2503, %v2510
    %v2513 = vunpack.c.l.s4 1983009808
    %v2514 = vunpack.c.0.s8 %v2513
    %v2515 = vlaneseq
    %v2516 = vshrl.u32 %v2515, 7
    %v2517 = vsub.s32 %v2514, %v2516
    %v2518 = vrot.slane %v2504, %v2517
    %v2519 = vcombine.low %v2378, %v2380
    %v2520 = vcombine.high %v2378, %v2380
    %v2522 = vunpack.c.l.s4 1983009808
    %v2523 = vunpack.c.0.s8 %v2522
    %v2524 = vlaneseq
    %v2525 = vshrl.u32 %v2524, 7
    %v2526 = vsub.s32 %v2523, %v2525
    %v2527 = vrot.slane %v2519, %v2526
    %v2529 = vunpack.c.l.s4 1983009808
    %v2530 = vunpack.c.0.s8 %v2529
    %v2531 = vlaneseq
    %v2532 = vshrl.u32 %v2531, 7
    %v2533 = vsub.s32 %v2530, %v2532
    %v2534 = vrot.slane %v2520, %v2533
    %v2535 = vcombine.low %v2381, %v2383
    %v2536 = vcombine.high %v2381, %v2383
    %v2538 = vunpack.c.l.s4 1983009808
    %v2539 = vunpack.c.0.s8 %v2538
    %v2540 = vlaneseq
    %v2541 = vshrl.u32 %v2540, 7
    %v2542 = vsub.s32 %v2539, %v2541
    %v2543 = vrot.slane %v2535, %v2542
    %v2545 = vunpack.c.l.s4 1983009808
    %v2546 = vunpack.c.0.s8 %v2545
    %v2547 = vlaneseq
    %v2548 = vshrl.u32 %v2547, 7
    %v2549 = vsub.s32 %v2546, %v2548
    %v2550 = vrot.slane %v2536, %v2549
    %v2551 = vcombine.low %v2382, %v2384
    %v2552 = vcombine.high %v2382, %v2384
    %v2554 = vunpack.c.l.s4 1983009808
    %v2555 = vunpack.c.0.s8 %v2554
    %v2556 = vlaneseq
    %v2557 = vshrl.u32 %v2556, 7
    %v2558 = vsub.s32 %v2555, %v2557
    %v2559 = vrot.slane %v2551, %v2558
    %v2561 = vunpack.c.l.s4 1983009808
    %v2562 = vunpack.c.0.s8 %v2561
    %v2563 = vlaneseq
    %v2564 = vshrl.u32 %v2563, 7
    %v2565 = vsub.s32 %v2562, %v2564
    %v2566 = vrot.slane %v2552, %v2565
    %v2567 = vcombine.low %v2511, %v2527
    %v2568 = vcombine.high %v2511, %v2527
    %v2570 = vunpack.c.l.s4 1934713408
    %v2571 = vunpack.c.0.s8 %v2570
    %v2572 = vlaneseq
    %v2573 = vshrl.u32 %v2572, 7
    %v2574 = vsub.s32 %v2571, %v2573
    %v2575 = vrot.slane %v2567, %v2574
    %v2577 = vunpack.c.l.s4 1934713408
    %v2578 = vunpack.c.0.s8 %v2577
    %v2579 = vlaneseq
    %v2580 = vshrl.u32 %v2579, 7
    %v2581 = vsub.s32 %v2578, %v2580
    %v2582 = vrot.slane %v2568, %v2581
    %v2583 = vcombine.low %v2518, %v2534
    %v2585 = vunpack.c.l.s4 1934713408
    %v2586 = vunpack.c.0.s8 %v2585
    %v2587 = vlaneseq
    %v2588 = vshrl.u32 %v2587, 7
    %v2589 = vsub.s32 %v2586, %v2588
    %v2590 = vrot.slane %v2583, %v2589
    %v2591 = vcombine.low %v2543, %v2559
    %v2592 = vcombine.high %v2543, %v2559
    %v2594 = vunpack.c.l.s4 1934713408
    %v2595 = vunpack.c.0.s8 %v2594
    %v2596 = vlaneseq
    %v2597 = vshrl.u32 %v2596, 7
    %v2598 = vsub.s32 %v2595, %v2597
    %v2599 = vrot.slane %v2591, %v2598
    %v2601 = vunpack.c.l.s4 1934713408
    %v2602 = vunpack.c.0.s8 %v2601
    %v2603 = vlaneseq
    %v2604 = vshrl.u32 %v2603, 7
    %v2605 = vsub.s32 %v2602, %v2604
    %v2606 = vrot.slane %v2592, %v2605
    %v2607 = vcombine.low %v2550, %v2566
    %v2609 = vunpack.c.l.s4 1934713408
    %v2610 = vunpack.c.0.s8 %v2609
    %v2611 = vlaneseq
    %v2612 = vshrl.u32 %v2611, 7
    %v2613 = vsub.s32 %v2610, %v2612
    %v2614 = vrot.slane %v2607, %v2613
    %v2615 = vcombine.low %v2575, %v2599
    %v2616 = vcombine.high %v2575, %v2599
    %v2617 = vcombine.low %v2582, %v2606
    %v2618 = vcombine.high %v2582, %v2606
    %v2619 = vcombine.low %v2590, %v2614
    %v2620 = vcombine.high %v2590, %v2614
    %2623 = vrot.lane.b32.xlu0 %v2498, 16
    %v2624 = vpop.permute.xlu0 %2623
    %2625 = vrot.lane.b32.xlu0 %v2616, 16
    %v2626 = vpop.permute.xlu0 %2625
    %2631 = vrot.lane.b32.xlu0 %v2499, 32
    %v2632 = vpop.permute.xlu0 %2631
    %2633 = vrot.lane.b32.xlu0 %v2617, 32
    %v2634 = vpop.permute.xlu0 %2633
    %2639 = vrot.lane.b32.xlu0 %v2500, 48
    %v2640 = vpop.permute.xlu0 %2639
    %2641 = vrot.lane.b32.xlu0 %v2618, 48
    %v2642 = vpop.permute.xlu0 %2641
    %2647 = vrot.lane.b32.xlu0 %v2501, 64
    %v2648 = vpop.permute.xlu0 %2647
    %2649 = vrot.lane.b32.xlu0 %v2619, 64
    %v2650 = vpop.permute.xlu0 %2649
    %2655 = vrot.lane.b32.xlu0 %v2502, 80
    %v2656 = vpop.permute.xlu0 %2655
    %2657 = vrot.lane.b32.xlu0 %v2620, 80
    %v2658 = vpop.permute.xlu0 %2657
    %v2661 = vsel %vm588, %v2497, %v2624
    %v2662 = vsel %vm588, %v2615, %v2626
    %vm2663 = vcmask 261120
    %v2664 = vsel %vm2663, %v2661, %v2632
    %v2665 = vsel %vm2663, %v2662, %v2634
    %vm2666 = vcmask 392192
    %v2667 = vsel %vm2666, %v2664, %v2640
    %v2668 = vsel %vm2666, %v2665, %v2642
    %vm2669 = vcmask 523264
    %v2670 = vsel %vm2669, %v2667, %v2648
    %v2671 = vsel %vm2669, %v2668, %v2650
    %vm2672 = vcmask 654336
    %v2673 = vsel %vm2672, %v2670, %v2656
    %v2674 = vsel %vm2672, %v2671, %v2658
    %2677 = vrot.lane.b32.xlu0 %v246, 112
    %v2678 = vpop.permute.xlu0 %2677
    %2679 = vrot.lane.b32.xlu0 %v250, 112
    %v2680 = vpop.permute.xlu0 %2679
    %2681 = vrot.lane.b32.xlu0 %v246, 96
    %v2682 = vpop.permute.xlu0 %2681
    %2683 = vrot.lane.b32.xlu0 %v250, 96
    %v2684 = vpop.permute.xlu0 %2683
    %2685 = vrot.lane.b32.xlu0 %v246, 80
    %v2686 = vpop.permute.xlu0 %2685
    %2687 = vrot.lane.b32.xlu0 %v250, 80
    %v2688 = vpop.permute.xlu0 %2687
    %2689 = vrot.lane.b32.xlu0 %v246, 64
    %v2690 = vpop.permute.xlu0 %2689
    %2691 = vrot.lane.b32.xlu0 %v250, 64
    %v2692 = vpop.permute.xlu0 %2691
    %2693 = vrot.lane.b32.xlu0 %v246, 48
    %v2694 = vpop.permute.xlu0 %2693
    %2695 = vrot.lane.b32.xlu0 %v250, 48
    %v2696 = vpop.permute.xlu0 %2695
    %2699 = vrot.lane.b32.xlu0 %v248, 112
    %v2700 = vpop.permute.xlu0 %2699
    %2701 = vrot.lane.b32.xlu0 %v252, 112
    %v2702 = vpop.permute.xlu0 %2701
    %2705 = vrot.lane.b32.xlu0 %v248, 96
    %v2706 = vpop.permute.xlu0 %2705
    %2707 = vrot.lane.b32.xlu0 %v252, 96
    %v2708 = vpop.permute.xlu0 %2707
    %2711 = vrot.lane.b32.xlu0 %v248, 80
    %v2712 = vpop.permute.xlu0 %2711
    %2713 = vrot.lane.b32.xlu0 %v252, 80
    %v2714 = vpop.permute.xlu0 %2713
    %2717 = vrot.lane.b32.xlu0 %v248, 64
    %v2718 = vpop.permute.xlu0 %2717
    %2719 = vrot.lane.b32.xlu0 %v252, 64
    %v2720 = vpop.permute.xlu0 %2719
    %2723 = vrot.lane.b32.xlu0 %v248, 48
    %v2724 = vpop.permute.xlu0 %2723
    %2725 = vrot.lane.b32.xlu0 %v252, 48
    %v2726 = vpop.permute.xlu0 %2725
    %2731 = vrot.lane.b32.xlu0 %v297, 112
    %v2732 = vpop.permute.xlu0 %2731
    %2733 = vrot.lane.b32.xlu0 %v300, 112
    %v2734 = vpop.permute.xlu0 %2733
    %2737 = vrot.lane.b32.xlu0 %v297, 96
    %v2738 = vpop.permute.xlu0 %2737
    %2739 = vrot.lane.b32.xlu0 %v300, 96
    %v2740 = vpop.permute.xlu0 %2739
    %2743 = vrot.lane.b32.xlu0 %v297, 80
    %v2744 = vpop.permute.xlu0 %2743
    %2745 = vrot.lane.b32.xlu0 %v300, 80
    %v2746 = vpop.permute.xlu0 %2745
    %2749 = vrot.lane.b32.xlu0 %v297, 64
    %v2750 = vpop.permute.xlu0 %2749
    %2751 = vrot.lane.b32.xlu0 %v300, 64
    %v2752 = vpop.permute.xlu0 %2751
    %2755 = vrot.lane.b32.xlu0 %v297, 48
    %v2756 = vpop.permute.xlu0 %2755
    %2757 = vrot.lane.b32.xlu0 %v300, 48
    %v2758 = vpop.permute.xlu0 %2757
    %2761 = vxpose.xlu0.b32.start [1/16] %v248, 128
    %2762 = vxpose.xlu0.b32.cont [2/16] %v252, 128
    %2763 = vxpose.xlu0.b32.cont [3/16] 0.0, 128
    %2764 = vxpose.xlu0.b32.cont [4/16] 0.0, 128
    %2765 = vxpose.xlu0.b32.cont [5/16] 0.0, 128
    %2766 = vxpose.xlu0.b32.cont [6/16] 0.0, 128
    %2767 = vxpose.xlu0.b32.cont [7/16] 0.0, 128
    %2768 = vxpose.xlu0.b32.cont [8/16] 0.0, 128
    %2769 = vxpose.xlu0.b32.cont [9/16] 0.0, 128
    %2770 = vxpose.xlu0.b32.cont [10/16] 0.0, 128
    %2771 = vxpose.xlu0.b32.cont [11/16] 0.0, 128
    %2772 = vxpose.xlu0.b32.cont [12/16] 0.0, 128
    %2773 = vxpose.xlu0.b32.cont [13/16] 0.0, 128
    %2774 = vxpose.xlu0.b32.cont [14/16] 0.0, 128
    %2775 = vxpose.xlu0.b32.cont [15/16] 0.0, 128
    %2776 = vxpose.xlu0.b32.end [16/16] 0.0, 128
    %v2777 = vpop.trf.xlu0
    %v2778 = vpop.trf.xlu0
    %v2779 = vpop.trf.xlu0
    %v2780 = vpop.trf.xlu0
    %v2781 = vpop.trf.xlu0
    %v2782 = vpop.trf.xlu0
    %v2783 = vpop.trf.xlu0
    %v2784 = vpop.trf.xlu0
    %v2785 = vpop.trf.xlu0
    %v2786 = vpop.trf.xlu0
    %v2787 = vpop.trf.xlu0
    %v2788 = vpop.trf.xlu0
    %v2789 = vpop.trf.xlu0
    %v2790 = vpop.trf.xlu0
    %v2791 = vpop.trf.xlu0
    %v2792 = vpop.trf.xlu0
    %2793 = vxpose.xlu0.b32.start [1/16] %v2700, 128
    %2794 = vxpose.xlu0.b32.cont [2/16] %v2702, 128
    %2795 = vxpose.xlu0.b32.cont [3/16] 0.0, 128
    %2796 = vxpose.xlu0.b32.cont [4/16] 0.0, 128
    %2797 = vxpose.xlu0.b32.cont [5/16] 0.0, 128
    %2798 = vxpose.xlu0.b32.cont [6/16] 0.0, 128
    %2799 = vxpose.xlu0.b32.cont [7/16] 0.0, 128
    %2800 = vxpose.xlu0.b32.cont [8/16] 0.0, 128
    %2801 = vxpose.xlu0.b32.cont [9/16] 0.0, 128
    %2802 = vxpose.xlu0.b32.cont [10/16] 0.0, 128
    %2803 = vxpose.xlu0.b32.cont [11/16] 0.0, 128
    %2804 = vxpose.xlu0.b32.cont [12/16] 0.0, 128
    %2805 = vxpose.xlu0.b32.cont [13/16] 0.0, 128
    %2806 = vxpose.xlu0.b32.cont [14/16] 0.0, 128
    %2807 = vxpose.xlu0.b32.cont [15/16] 0.0, 128
    %2808 = vxpose.xlu0.b32.end [16/16] 0.0, 128
    %v2809 = vpop.trf.xlu0
    %v2810 = vpop.trf.xlu0
    %v2811 = vpop.trf.xlu0
    %v2812 = vpop.trf.xlu0
    %v2813 = vpop.trf.xlu0
    %v2814 = vpop.trf.xlu0
    %v2815 = vpop.trf.xlu0
    %v2816 = vpop.trf.xlu0
    %v2817 = vpop.trf.xlu0
    %v2818 = vpop.trf.xlu0
    %v2819 = vpop.trf.xlu0
    %v2820 = vpop.trf.xlu0
    %v2821 = vpop.trf.xlu0
    %v2822 = vpop.trf.xlu0
    %v2823 = vpop.trf.xlu0
    %v2824 = vpop.trf.xlu0
    %2825 = vxpose.xlu0.b32.start [1/16] %v2706, 128
    %2826 = vxpose.xlu0.b32.cont [2/16] %v2708, 128
    %2827 = vxpose.xlu0.b32.cont [3/16] 0.0, 128
    %2828 = vxpose.xlu0.b32.cont [4/16] 0.0, 128
    %2829 = vxpose.xlu0.b32.cont [5/16] 0.0, 128
    %2830 = vxpose.xlu0.b32.cont [6/16] 0.0, 128
    %2831 = vxpose.xlu0.b32.cont [7/16] 0.0, 128
    %2832 = vxpose.xlu0.b32.cont [8/16] 0.0, 128
    %2833 = vxpose.xlu0.b32.cont [9/16] 0.0, 128
    %2834 = vxpose.xlu0.b32.cont [10/16] 0.0, 128
    %2835 = vxpose.xlu0.b32.cont [11/16] 0.0, 128
    %2836 = vxpose.xlu0.b32.cont [12/16] 0.0, 128
    %2837 = vxpose.xlu0.b32.cont [13/16] 0.0, 128
    %2838 = vxpose.xlu0.b32.cont [14/16] 0.0, 128
    %2839 = vxpose.xlu0.b32.cont [15/16] 0.0, 128
    %2840 = vxpose.xlu0.b32.end [16/16] 0.0, 128
    %v2841 = vpop.trf.xlu0
    %v2842 = vpop.trf.xlu0
    %v2843 = vpop.trf.xlu0
    %v2844 = vpop.trf.xlu0
    %v2845 = vpop.trf.xlu0
    %v2846 = vpop.trf.xlu0
    %v2847 = vpop.trf.xlu0
    %v2848 = vpop.trf.xlu0
    %v2849 = vpop.trf.xlu0
    %v2850 = vpop.trf.xlu0
    %v2851 = vpop.trf.xlu0
    %v2852 = vpop.trf.xlu0
    %v2853 = vpop.trf.xlu0
    %v2854 = vpop.trf.xlu0
    %v2855 = vpop.trf.xlu0
    %v2856 = vpop.trf.xlu0
    %2857 = vxpose.xlu0.b32.start [1/16] %v2712, 128
    %2858 = vxpose.xlu0.b32.cont [2/16] %v2714, 128
    %2859 = vxpose.xlu0.b32.cont [3/16] 0.0, 128
    %2860 = vxpose.xlu0.b32.cont [4/16] 0.0, 128
    %2861 = vxpose.xlu0.b32.cont [5/16] 0.0, 128
    %2862 = vxpose.xlu0.b32.cont [6/16] 0.0, 128
    %2863 = vxpose.xlu0.b32.cont [7/16] 0.0, 128
    %2864 = vxpose.xlu0.b32.cont [8/16] 0.0, 128
    %2865 = vxpose.xlu0.b32.cont [9/16] 0.0, 128
    %2866 = vxpose.xlu0.b32.cont [10/16] 0.0, 128
    %2867 = vxpose.xlu0.b32.cont [11/16] 0.0, 128
    %2868 = vxpose.xlu0.b32.cont [12/16] 0.0, 128
    %2869 = vxpose.xlu0.b32.cont [13/16] 0.0, 128
    %2870 = vxpose.xlu0.b32.cont [14/16] 0.0, 128
    %2871 = vxpose.xlu0.b32.cont [15/16] 0.0, 128
    %2872 = vxpose.xlu0.b32.end [16/16] 0.0, 128
    %v2873 = vpop.trf.xlu0
    %v2874 = vpop.trf.xlu0
    %v2875 = vpop.trf.xlu0
    %v2876 = vpop.trf.xlu0
    %v2877 = vpop.trf.xlu0
    %v2878 = vpop.trf.xlu0
    %v2879 = vpop.trf.xlu0
    %v2880 = vpop.trf.xlu0
    %v2881 = vpop.trf.xlu0
    %v2882 = vpop.trf.xlu0
    %v2883 = vpop.trf.xlu0
    %v2884 = vpop.trf.xlu0
    %v2885 = vpop.trf.xlu0
    %v2886 = vpop.trf.xlu0
    %v2887 = vpop.trf.xlu0
    %v2888 = vpop.trf.xlu0
    %2889 = vxpose.xlu0.b32.start [1/16] %v2718, 128
    %2890 = vxpose.xlu0.b32.cont [2/16] %v2720, 128
    %2891 = vxpose.xlu0.b32.cont [3/16] 0.0, 128
    %2892 = vxpose.xlu0.b32.cont [4/16] 0.0, 128
    %2893 = vxpose.xlu0.b32.cont [5/16] 0.0, 128
    %2894 = vxpose.xlu0.b32.cont [6/16] 0.0, 128
    %2895 = vxpose.xlu0.b32.cont [7/16] 0.0, 128
    %2896 = vxpose.xlu0.b32.cont [8/16] 0.0, 128
    %2897 = vxpose.xlu0.b32.cont [9/16] 0.0, 128
    %2898 = vxpose.xlu0.b32.cont [10/16] 0.0, 128
    %2899 = vxpose.xlu0.b32.cont [11/16] 0.0, 128
    %2900 = vxpose.xlu0.b32.cont [12/16] 0.0, 128
    %2901 = vxpose.xlu0.b32.cont [13/16] 0.0, 128
    %2902 = vxpose.xlu0.b32.cont [14/16] 0.0, 128
    %2903 = vxpose.xlu0.b32.cont [15/16] 0.0, 128
    %2904 = vxpose.xlu0.b32.end [16/16] 0.0, 128
    %v2905 = vpop.trf.xlu0
    %v2906 = vpop.trf.xlu0
    %v2907 = vpop.trf.xlu0
    %v2908 = vpop.trf.xlu0
    %v2909 = vpop.trf.xlu0
    %v2910 = vpop.trf.xlu0
    %v2911 = vpop.trf.xlu0
    %v2912 = vpop.trf.xlu0
    %v2913 = vpop.trf.xlu0
    %v2914 = vpop.trf.xlu0
    %v2915 = vpop.trf.xlu0
    %v2916 = vpop.trf.xlu0
    %v2917 = vpop.trf.xlu0
    %v2918 = vpop.trf.xlu0
    %v2919 = vpop.trf.xlu0
    %v2920 = vpop.trf.xlu0
    %2921 = vxpose.xlu0.b32.start [1/16] %v2724, 128
    %2922 = vxpose.xlu0.b32.cont [2/16] %v2726, 128
    %2923 = vxpose.xlu0.b32.cont [3/16] 0.0, 128
    %2924 = vxpose.xlu0.b32.cont [4/16] 0.0, 128
    %2925 = vxpose.xlu0.b32.cont [5/16] 0.0, 128
    %2926 = vxpose.xlu0.b32.cont [6/16] 0.0, 128
    %2927 = vxpose.xlu0.b32.cont [7/16] 0.0, 128
    %2928 = vxpose.xlu0.b32.cont [8/16] 0.0, 128
    %2929 = vxpose.xlu0.b32.cont [9/16] 0.0, 128
    %2930 = vxpose.xlu0.b32.cont [10/16] 0.0, 128
    %2931 = vxpose.xlu0.b32.cont [11/16] 0.0, 128
    %2932 = vxpose.xlu0.b32.cont [12/16] 0.0, 128
    %2933 = vxpose.xlu0.b32.cont [13/16] 0.0, 128
    %2934 = vxpose.xlu0.b32.cont [14/16] 0.0, 128
    %2935 = vxpose.xlu0.b32.cont [15/16] 0.0, 128
    %2936 = vxpose.xlu0.b32.end [16/16] 0.0, 128
    %v2937 = vpop.trf.xlu0
    %v2938 = vpop.trf.xlu0
    %v2939 = vpop.trf.xlu0
    %v2940 = vpop.trf.xlu0
    %v2941 = vpop.trf.xlu0
    %v2942 = vpop.trf.xlu0
    %v2943 = vpop.trf.xlu0
    %v2944 = vpop.trf.xlu0
    %v2945 = vpop.trf.xlu0
    %v2946 = vpop.trf.xlu0
    %v2947 = vpop.trf.xlu0
    %v2948 = vpop.trf.xlu0
    %v2949 = vpop.trf.xlu0
    %v2950 = vpop.trf.xlu0
    %v2951 = vpop.trf.xlu0
    %v2952 = vpop.trf.xlu0
    %v2953 = vsel %vm588, %v246, 0
    %v2955 = vsel %vm588, %v250, 0
    %2957 = vmatprep.subr.mxu0 0.0
    %2958 = vmatpush1.msra.mxu0 %v2777
    %2959 = vmatprep.subr.mxu0 0.0
    %2960 = vmatpush1.msra.mxu0 %v2778
    %2961 = vmatprep.subr.mxu0 0.0
    %2962 = vmatpush1.msra.mxu0 0.0
    %2963 = vmatprep.subr.mxu0 0.0
    %2964 = vmatpush1.msra.mxu0 0.0
    %2965 = vmatprep.subr.mxu0 0.0
    %2966 = vmatpush1.msra.mxu0 0.0
    %2967 = vmatprep.subr.mxu0 0.0
    %2968 = vmatpush1.msra.mxu0 0.0
    %2969 = vmatprep.subr.mxu0 0.0
    %2970 = vmatpush1.msra.mxu0 0.0
    %2971 = vmatprep.subr.mxu0 0.0
    %2972 = vmatpush1.msra.mxu0 0.0
    %2973 = vmatprep.subr.mxu0 0.0
    %2974 = vmatpush1.msra.mxu0 0.0
    %2975 = vmatprep.subr.mxu0 0.0
    %2976 = vmatpush1.msra.mxu0 0.0
    %2977 = vmatprep.subr.mxu0 0.0
    %2978 = vmatpush1.msra.mxu0 0.0
    %2979 = vmatprep.subr.mxu0 0.0
    %2980 = vmatpush1.msra.mxu0 0.0
    %2981 = vmatprep.subr.mxu0 0.0
    %2982 = vmatpush1.msra.mxu0 0.0
    %2983 = vmatprep.subr.mxu0 0.0
    %2984 = vmatpush1.msra.mxu0 0.0
    %2985 = vmatprep.subr.mxu0 0.0
    %2986 = vmatpush1.msra.mxu0 0.0
    %2987 = vmatprep.subr.mxu0 0.0
    %2988 = vmatpush1.msra.mxu0 0.0
    %2989 = vmatprep.subr.mxu0 0.0
    %2990 = vmatpush1.msra.mxu0 0.0
    %2991 = vmatprep.subr.mxu0 0.0
    %2992 = vmatpush1.msra.mxu0 0.0
    %2993 = vmatprep.subr.mxu0 0.0
    %2994 = vmatpush1.msra.mxu0 0.0
    %2995 = vmatprep.subr.mxu0 0.0
    %2996 = vmatpush1.msra.mxu0 0.0
    %2997 = vmatprep.subr.mxu0 0.0
    %2998 = vmatpush1.msra.mxu0 0.0
    %2999 = vmatprep.subr.mxu0 0.0
    %3000 = vmatpush1.msra.mxu0 0.0
    %3001 = vmatprep.subr.mxu0 0.0
    %3002 = vmatpush1.msra.mxu0 0.0
    %3003 = vmatprep.subr.mxu0 0.0
    %3004 = vmatpush1.msra.mxu0 0.0
    %3005 = vmatprep.subr.mxu0 0.0
    %3006 = vmatpush1.msra.mxu0 0.0
    %3007 = vmatprep.subr.mxu0 0.0
    %3008 = vmatpush1.msra.mxu0 0.0
    %3009 = vmatprep.subr.mxu0 0.0
    %3010 = vmatpush1.msra.mxu0 0.0
    %3011 = vmatprep.subr.mxu0 0.0
    %3012 = vmatpush1.msra.mxu0 0.0
    %3013 = vmatprep.subr.mxu0 0.0
    %3014 = vmatpush1.msra.mxu0 0.0
    %3015 = vmatprep.subr.mxu0 0.0
    %3016 = vmatpush1.msra.mxu0 0.0
    %3017 = vmatprep.subr.mxu0 0.0
    %3018 = vmatpush1.msra.mxu0 0.0
    %3019 = vmatprep.subr.mxu0 0.0
    %3020 = vmatpush1.msra.mxu0 0.0
    %3021 = vmatprep.mubr.f32.mxu0 0.0
    %3022 = vmatmul.mubr.f32.gmra.mrb[0].mxu0 %v2953
    %v3023 = vpop.f32.mrb[0].mxu0
    %v3024 = vadd.f32 0.0, %v3023
    %v3025 = vpop.f32.mrb[0].mxu0
    %3026 = vmatprep.mubr.f32.mxu0 0.0
    %3027 = vmatmul.mubr.f32.gmra.mrb[0].mxu0 %v2955
    %v3028 = vpop.f32.mrb[0].mxu0
    %v3029 = vadd.f32 0.0, %v3028
    %v3030 = vpop.f32.mrb[0].mxu0
    %3031 = vdwg.mxu0
    %v3032 = vsel %vm588, %v2678, 0
    %v3034 = vsel %vm588, %v2680, 0
    %3036 = vmatprep.subr.mxu0 0.0
    %3037 = vmatpush1.msra.mxu0 %v2809
    %3038 = vmatprep.subr.mxu0 0.0
    %3039 = vmatpush1.msra.mxu0 %v2810
    %3040 = vmatprep.subr.mxu0 0.0
    %3041 = vmatpush1.msra.mxu0 0.0
    %3042 = vmatprep.subr.mxu0 0.0
    %3043 = vmatpush1.msra.mxu0 0.0
    %3044 = vmatprep.subr.mxu0 0.0
    %3045 = vmatpush1.msra.mxu0 0.0
    %3046 = vmatprep.subr.mxu0 0.0
    %3047 = vmatpush1.msra.mxu0 0.0
    %3048 = vmatprep.subr.mxu0 0.0
    %3049 = vmatpush1.msra.mxu0 0.0
    %3050 = vmatprep.subr.mxu0 0.0
    %3051 = vmatpush1.msra.mxu0 0.0
    %3052 = vmatprep.subr.mxu0 0.0
    %3053 = vmatpush1.msra.mxu0 0.0
    %3054 = vmatprep.subr.mxu0 0.0
    %3055 = vmatpush1.msra.mxu0 0.0
    %3056 = vmatprep.subr.mxu0 0.0
    %3057 = vmatpush1.msra.mxu0 0.0
    %3058 = vmatprep.subr.mxu0 0.0
    %3059 = vmatpush1.msra.mxu0 0.0
    %3060 = vmatprep.subr.mxu0 0.0
    %3061 = vmatpush1.msra.mxu0 0.0
    %3062 = vmatprep.subr.mxu0 0.0
    %3063 = vmatpush1.msra.mxu0 0.0
    %3064 = vmatprep.subr.mxu0 0.0
    %3065 = vmatpush1.msra.mxu0 0.0
    %3066 = vmatprep.subr.mxu0 0.0
    %3067 = vmatpush1.msra.mxu0 0.0
    %3068 = vmatprep.subr.mxu0 0.0
    %3069 = vmatpush1.msra.mxu0 0.0
    %3070 = vmatprep.subr.mxu0 0.0
    %3071 = vmatpush1.msra.mxu0 0.0
    %3072 = vmatprep.subr.mxu0 0.0
    %3073 = vmatpush1.msra.mxu0 0.0
    %3074 = vmatprep.subr.mxu0 0.0
    %3075 = vmatpush1.msra.mxu0 0.0
    %3076 = vmatprep.subr.mxu0 0.0
    %3077 = vmatpush1.msra.mxu0 0.0
    %3078 = vmatprep.subr.mxu0 0.0
    %3079 = vmatpush1.msra.mxu0 0.0
    %3080 = vmatprep.subr.mxu0 0.0
    %3081 = vmatpush1.msra.mxu0 0.0
    %3082 = vmatprep.subr.mxu0 0.0
    %3083 = vmatpush1.msra.mxu0 0.0
    %3084 = vmatprep.subr.mxu0 0.0
    %3085 = vmatpush1.msra.mxu0 0.0
    %3086 = vmatprep.subr.mxu0 0.0
    %3087 = vmatpush1.msra.mxu0 0.0
    %3088 = vmatprep.subr.mxu0 0.0
    %3089 = vmatpush1.msra.mxu0 0.0
    %3090 = vmatprep.subr.mxu0 0.0
    %3091 = vmatpush1.msra.mxu0 0.0
    %3092 = vmatprep.subr.mxu0 0.0
    %3093 = vmatpush1.msra.mxu0 0.0
    %3094 = vmatprep.subr.mxu0 0.0
    %3095 = vmatpush1.msra.mxu0 0.0
    %3096 = vmatprep.subr.mxu0 0.0
    %3097 = vmatpush1.msra.mxu0 0.0
    %3098 = vmatprep.subr.mxu0 0.0
    %3099 = vmatpush1.msra.mxu0 0.0
    %3100 = vmatprep.mubr.f32.mxu0 0.0
    %3101 = vmatmul.mubr.f32.gmra.mrb[0].mxu0 %v3032
    %v3102 = vpop.f32.mrb[0].mxu0
    %v3103 = vadd.f32 0.0, %v3102
    %v3104 = vpop.f32.mrb[0].mxu0
    %3105 = vmatprep.mubr.f32.mxu0 0.0
    %3106 = vmatmul.mubr.f32.gmra.mrb[0].mxu0 %v3034
    %v3107 = vpop.f32.mrb[0].mxu0
    %v3108 = vadd.f32 0.0, %v3107
    %v3109 = vpop.f32.mrb[0].mxu0
    %3110 = vdwg.mxu0
    %v3111 = vsel %vm588, %v2682, 0
    %v3113 = vsel %vm588, %v2684, 0
    %3115 = vmatprep.subr.mxu0 0.0
    %3116 = vmatpush1.msra.mxu0 %v2841
    %3117 = vmatprep.subr.mxu0 0.0
    %3118 = vmatpush1.msra.mxu0 %v2842
    %3119 = vmatprep.subr.mxu0 0.0
    %3120 = vmatpush1.msra.mxu0 0.0
    %3121 = vmatprep.subr.mxu0 0.0
    %3122 = vmatpush1.msra.mxu0 0.0
    %3123 = vmatprep.subr.mxu0 0.0
    %3124 = vmatpush1.msra.mxu0 0.0
    %3125 = vmatprep.subr.mxu0 0.0
    %3126 = vmatpush1.msra.mxu0 0.0
    %3127 = vmatprep.subr.mxu0 0.0
    %3128 = vmatpush1.msra.mxu0 0.0
    %3129 = vmatprep.subr.mxu0 0.0
    %3130 = vmatpush1.msra.mxu0 0.0
    %3131 = vmatprep.subr.mxu0 0.0
    %3132 = vmatpush1.msra.mxu0 0.0
    %3133 = vmatprep.subr.mxu0 0.0
    %3134 = vmatpush1.msra.mxu0 0.0
    %3135 = vmatprep.subr.mxu0 0.0
    %3136 = vmatpush1.msra.mxu0 0.0
    %3137 = vmatprep.subr.mxu0 0.0
    %3138 = vmatpush1.msra.mxu0 0.0
    %3139 = vmatprep.subr.mxu0 0.0
    %3140 = vmatpush1.msra.mxu0 0.0
    %3141 = vmatprep.subr.mxu0 0.0
    %3142 = vmatpush1.msra.mxu0 0.0
    %3143 = vmatprep.subr.mxu0 0.0
    %3144 = vmatpush1.msra.mxu0 0.0
    %3145 = vmatprep.subr.mxu0 0.0
    %3146 = vmatpush1.msra.mxu0 0.0
    %3147 = vmatprep.subr.mxu0 0.0
    %3148 = vmatpush1.msra.mxu0 0.0
    %3149 = vmatprep.subr.mxu0 0.0
    %3150 = vmatpush1.msra.mxu0 0.0
    %3151 = vmatprep.subr.mxu0 0.0
    %3152 = vmatpush1.msra.mxu0 0.0
    %3153 = vmatprep.subr.mxu0 0.0
    %3154 = vmatpush1.msra.mxu0 0.0
    %3155 = vmatprep.subr.mxu0 0.0
    %3156 = vmatpush1.msra.mxu0 0.0
    %3157 = vmatprep.subr.mxu0 0.0
    %3158 = vmatpush1.msra.mxu0 0.0
    %3159 = vmatprep.subr.mxu0 0.0
    %3160 = vmatpush1.msra.mxu0 0.0
    %3161 = vmatprep.subr.mxu0 0.0
    %3162 = vmatpush1.msra.mxu0 0.0
    %3163 = vmatprep.subr.mxu0 0.0
    %3164 = vmatpush1.msra.mxu0 0.0
    %3165 = vmatprep.subr.mxu0 0.0
    %3166 = vmatpush1.msra.mxu0 0.0
    %3167 = vmatprep.subr.mxu0 0.0
    %3168 = vmatpush1.msra.mxu0 0.0
    %3169 = vmatprep.subr.mxu0 0.0
    %3170 = vmatpush1.msra.mxu0 0.0
    %3171 = vmatprep.subr.mxu0 0.0
    %3172 = vmatpush1.msra.mxu0 0.0
    %3173 = vmatprep.subr.mxu0 0.0
    %3174 = vmatpush1.msra.mxu0 0.0
    %3175 = vmatprep.subr.mxu0 0.0
    %3176 = vmatpush1.msra.mxu0 0.0
    %3177 = vmatprep.subr.mxu0 0.0
    %3178 = vmatpush1.msra.mxu0 0.0
    %3179 = vmatprep.mubr.f32.mxu0 0.0
    %3180 = vmatmul.mubr.f32.gmra.mrb[0].mxu0 %v3111
    %v3181 = vpop.f32.mrb[0].mxu0
    %v3182 = vadd.f32 0.0, %v3181
    %v3183 = vpop.f32.mrb[0].mxu0
    %3184 = vmatprep.mubr.f32.mxu0 0.0
    %3185 = vmatmul.mubr.f32.gmra.mrb[0].mxu0 %v3113
    %v3186 = vpop.f32.mrb[0].mxu0
    %v3187 = vadd.f32 0.0, %v3186
    %v3188 = vpop.f32.mrb[0].mxu0
    %3189 = vdwg.mxu0
    %v3190 = vsel %vm588, %v2686, 0
    %v3192 = vsel %vm588, %v2688, 0
    %3194 = vmatprep.subr.mxu0 0.0
    %3195 = vmatpush1.msra.mxu0 %v2873
    %3196 = vmatprep.subr.mxu0 0.0
    %3197 = vmatpush1.msra.mxu0 %v2874
    %3198 = vmatprep.subr.mxu0 0.0
    %3199 = vmatpush1.msra.mxu0 0.0
    %3200 = vmatprep.subr.mxu0 0.0
    %3201 = vmatpush1.msra.mxu0 0.0
    %3202 = vmatprep.subr.mxu0 0.0
    %3203 = vmatpush1.msra.mxu0 0.0
    %3204 = vmatprep.subr.mxu0 0.0
    %3205 = vmatpush1.msra.mxu0 0.0
    %3206 = vmatprep.subr.mxu0 0.0
    %3207 = vmatpush1.msra.mxu0 0.0
    %3208 = vmatprep.subr.mxu0 0.0
    %3209 = vmatpush1.msra.mxu0 0.0
    %3210 = vmatprep.subr.mxu0 0.0
    %3211 = vmatpush1.msra.mxu0 0.0
    %3212 = vmatprep.subr.mxu0 0.0
    %3213 = vmatpush1.msra.mxu0 0.0
    %3214 = vmatprep.subr.mxu0 0.0
    %3215 = vmatpush1.msra.mxu0 0.0
    %3216 = vmatprep.subr.mxu0 0.0
    %3217 = vmatpush1.msra.mxu0 0.0
    %3218 = vmatprep.subr.mxu0 0.0
    %3219 = vmatpush1.msra.mxu0 0.0
    %3220 = vmatprep.subr.mxu0 0.0
    %3221 = vmatpush1.msra.mxu0 0.0
    %3222 = vmatprep.subr.mxu0 0.0
    %3223 = vmatpush1.msra.mxu0 0.0
    %3224 = vmatprep.subr.mxu0 0.0
    %3225 = vmatpush1.msra.mxu0 0.0
    %3226 = vmatprep.subr.mxu0 0.0
    %3227 = vmatpush1.msra.mxu0 0.0
    %3228 = vmatprep.subr.mxu0 0.0
    %3229 = vmatpush1.msra.mxu0 0.0
    %3230 = vmatprep.subr.mxu0 0.0
    %3231 = vmatpush1.msra.mxu0 0.0
    %3232 = vmatprep.subr.mxu0 0.0
    %3233 = vmatpush1.msra.mxu0 0.0
    %3234 = vmatprep.subr.mxu0 0.0
    %3235 = vmatpush1.msra.mxu0 0.0
    %3236 = vmatprep.subr.mxu0 0.0
    %3237 = vmatpush1.msra.mxu0 0.0
    %3238 = vmatprep.subr.mxu0 0.0
    %3239 = vmatpush1.msra.mxu0 0.0
    %3240 = vmatprep.subr.mxu0 0.0
    %3241 = vmatpush1.msra.mxu0 0.0
    %3242 = vmatprep.subr.mxu0 0.0
    %3243 = vmatpush1.msra.mxu0 0.0
    %3244 = vmatprep.subr.mxu0 0.0
    %3245 = vmatpush1.msra.mxu0 0.0
    %3246 = vmatprep.subr.mxu0 0.0
    %3247 = vmatpush1.msra.mxu0 0.0
    %3248 = vmatprep.subr.mxu0 0.0
    %3249 = vmatpush1.msra.mxu0 0.0
    %3250 = vmatprep.subr.mxu0 0.0
    %3251 = vmatpush1.msra.mxu0 0.0
    %3252 = vmatprep.subr.mxu0 0.0
    %3253 = vmatpush1.msra.mxu0 0.0
    %3254 = vmatprep.subr.mxu0 0.0
    %3255 = vmatpush1.msra.mxu0 0.0
    %3256 = vmatprep.subr.mxu0 0.0
    %3257 = vmatpush1.msra.mxu0 0.0
    %3258 = vmatprep.mubr.f32.mxu0 0.0
    %3259 = vmatmul.mubr.f32.gmra.mrb[0].mxu0 %v3190
    %v3260 = vpop.f32.mrb[0].mxu0
    %v3261 = vadd.f32 0.0, %v3260
    %v3262 = vpop.f32.mrb[0].mxu0
    %3263 = vmatprep.mubr.f32.mxu0 0.0
    %3264 = vmatmul.mubr.f32.gmra.mrb[0].mxu0 %v3192
    %v3265 = vpop.f32.mrb[0].mxu0
    %v3266 = vadd.f32 0.0, %v3265
    %v3267 = vpop.f32.mrb[0].mxu0
    %3268 = vdwg.mxu0
    %v3269 = vsel %vm588, %v2690, 0
    %v3271 = vsel %vm588, %v2692, 0
    %3273 = vmatprep.subr.mxu0 0.0
    %3274 = vmatpush1.msra.mxu0 %v2905
    %3275 = vmatprep.subr.mxu0 0.0
    %3276 = vmatpush1.msra.mxu0 %v2906
    %3277 = vmatprep.subr.mxu0 0.0
    %3278 = vmatpush1.msra.mxu0 0.0
    %3279 = vmatprep.subr.mxu0 0.0
    %3280 = vmatpush1.msra.mxu0 0.0
    %3281 = vmatprep.subr.mxu0 0.0
    %3282 = vmatpush1.msra.mxu0 0.0
    %3283 = vmatprep.subr.mxu0 0.0
    %3284 = vmatpush1.msra.mxu0 0.0
    %3285 = vmatprep.subr.mxu0 0.0
    %3286 = vmatpush1.msra.mxu0 0.0
    %3287 = vmatprep.subr.mxu0 0.0
    %3288 = vmatpush1.msra.mxu0 0.0
    %3289 = vmatprep.subr.mxu0 0.0
    %3290 = vmatpush1.msra.mxu0 0.0
    %3291 = vmatprep.subr.mxu0 0.0
    %3292 = vmatpush1.msra.mxu0 0.0
    %3293 = vmatprep.subr.mxu0 0.0
    %3294 = vmatpush1.msra.mxu0 0.0
    %3295 = vmatprep.subr.mxu0 0.0
    %3296 = vmatpush1.msra.mxu0 0.0
    %3297 = vmatprep.subr.mxu0 0.0
    %3298 = vmatpush1.msra.mxu0 0.0
    %3299 = vmatprep.subr.mxu0 0.0
    %3300 = vmatpush1.msra.mxu0 0.0
    %3301 = vmatprep.subr.mxu0 0.0
    %3302 = vmatpush1.msra.mxu0 0.0
    %3303 = vmatprep.subr.mxu0 0.0
    %3304 = vmatpush1.msra.mxu0 0.0
    %3305 = vmatprep.subr.mxu0 0.0
    %3306 = vmatpush1.msra.mxu0 0.0
    %3307 = vmatprep.subr.mxu0 0.0
    %3308 = vmatpush1.msra.mxu0 0.0
    %3309 = vmatprep.subr.mxu0 0.0
    %3310 = vmatpush1.msra.mxu0 0.0
    %3311 = vmatprep.subr.mxu0 0.0
    %3312 = vmatpush1.msra.mxu0 0.0
    %3313 = vmatprep.subr.mxu0 0.0
    %3314 = vmatpush1.msra.mxu0 0.0
    %3315 = vmatprep.subr.mxu0 0.0
    %3316 = vmatpush1.msra.mxu0 0.0
    %3317 = vmatprep.subr.mxu0 0.0
    %3318 = vmatpush1.msra.mxu0 0.0
    %3319 = vmatprep.subr.mxu0 0.0
    %3320 = vmatpush1.msra.mxu0 0.0
    %3321 = vmatprep.subr.mxu0 0.0
    %3322 = vmatpush1.msra.mxu0 0.0
    %3323 = vmatprep.subr.mxu0 0.0
    %3324 = vmatpush1.msra.mxu0 0.0
    %3325 = vmatprep.subr.mxu0 0.0
    %3326 = vmatpush1.msra.mxu0 0.0
    %3327 = vmatprep.subr.mxu0 0.0
    %3328 = vmatpush1.msra.mxu0 0.0
    %3329 = vmatprep.subr.mxu0 0.0
    %3330 = vmatpush1.msra.mxu0 0.0
    %3331 = vmatprep.subr.mxu0 0.0
    %3332 = vmatpush1.msra.mxu0 0.0
    %3333 = vmatprep.subr.mxu0 0.0
    %3334 = vmatpush1.msra.mxu0 0.0
    %3335 = vmatprep.subr.mxu0 0.0
    %3336 = vmatpush1.msra.mxu0 0.0
    %3337 = vmatprep.mubr.f32.mxu0 0.0
    %3338 = vmatmul.mubr.f32.gmra.mrb[0].mxu0 %v3269
    %v3339 = vpop.f32.mrb[0].mxu0
    %v3340 = vadd.f32 0.0, %v3339
    %v3341 = vpop.f32.mrb[0].mxu0
    %3342 = vmatprep.mubr.f32.mxu0 0.0
    %3343 = vmatmul.mubr.f32.gmra.mrb[0].mxu0 %v3271
    %v3344 = vpop.f32.mrb[0].mxu0
    %v3345 = vadd.f32 0.0, %v3344
    %v3346 = vpop.f32.mrb[0].mxu0
    %3347 = vdwg.mxu0
    %v3348 = vsel %vm588, %v2694, 0
    %v3350 = vsel %vm588, %v2696, 0
    %3352 = vmatprep.subr.mxu0 0.0
    %3353 = vmatpush1.msra.mxu0 %v2937
    %3354 = vmatprep.subr.mxu0 0.0
    %3355 = vmatpush1.msra.mxu0 %v2938
    %3356 = vmatprep.subr.mxu0 0.0
    %3357 = vmatpush1.msra.mxu0 0.0
    %3358 = vmatprep.subr.mxu0 0.0
    %3359 = vmatpush1.msra.mxu0 0.0
    %3360 = vmatprep.subr.mxu0 0.0
    %3361 = vmatpush1.msra.mxu0 0.0
    %3362 = vmatprep.subr.mxu0 0.0
    %3363 = vmatpush1.msra.mxu0 0.0
    %3364 = vmatprep.subr.mxu0 0.0
    %3365 = vmatpush1.msra.mxu0 0.0
    %3366 = vmatprep.subr.mxu0 0.0
    %3367 = vmatpush1.msra.mxu0 0.0
    %3368 = vmatprep.subr.mxu0 0.0
    %3369 = vmatpush1.msra.mxu0 0.0
    %3370 = vmatprep.subr.mxu0 0.0
    %3371 = vmatpush1.msra.mxu0 0.0
    %3372 = vmatprep.subr.mxu0 0.0
    %3373 = vmatpush1.msra.mxu0 0.0
    %3374 = vmatprep.subr.mxu0 0.0
    %3375 = vmatpush1.msra.mxu0 0.0
    %3376 = vmatprep.subr.mxu0 0.0
    %3377 = vmatpush1.msra.mxu0 0.0
    %3378 = vmatprep.subr.mxu0 0.0
    %3379 = vmatpush1.msra.mxu0 0.0
    %3380 = vmatprep.subr.mxu0 0.0
    %3381 = vmatpush1.msra.mxu0 0.0
    %3382 = vmatprep.subr.mxu0 0.0
    %3383 = vmatpush1.msra.mxu0 0.0
    %3384 = vmatprep.subr.mxu0 0.0
    %3385 = vmatpush1.msra.mxu0 0.0
    %3386 = vmatprep.subr.mxu0 0.0
    %3387 = vmatpush1.msra.mxu0 0.0
    %3388 = vmatprep.subr.mxu0 0.0
    %3389 = vmatpush1.msra.mxu0 0.0
    %3390 = vmatprep.subr.mxu0 0.0
    %3391 = vmatpush1.msra.mxu0 0.0
    %3392 = vmatprep.subr.mxu0 0.0
    %3393 = vmatpush1.msra.mxu0 0.0
    %3394 = vmatprep.subr.mxu0 0.0
    %3395 = vmatpush1.msra.mxu0 0.0
    %3396 = vmatprep.subr.mxu0 0.0
    %3397 = vmatpush1.msra.mxu0 0.0
    %3398 = vmatprep.subr.mxu0 0.0
    %3399 = vmatpush1.msra.mxu0 0.0
    %3400 = vmatprep.subr.mxu0 0.0
    %3401 = vmatpush1.msra.mxu0 0.0
    %3402 = vmatprep.subr.mxu0 0.0
    %3403 = vmatpush1.msra.mxu0 0.0
    %3404 = vmatprep.subr.mxu0 0.0
    %3405 = vmatpush1.msra.mxu0 0.0
    %3406 = vmatprep.subr.mxu0 0.0
    %3407 = vmatpush1.msra.mxu0 0.0
    %3408 = vmatprep.subr.mxu0 0.0
    %3409 = vmatpush1.msra.mxu0 0.0
    %3410 = vmatprep.subr.mxu0 0.0
    %3411 = vmatpush1.msra.mxu0 0.0
    %3412 = vmatprep.subr.mxu0 0.0
    %3413 = vmatpush1.msra.mxu0 0.0
    %3414 = vmatprep.subr.mxu0 0.0
    %3415 = vmatpush1.msra.mxu0 0.0
    %3416 = vmatprep.mubr.f32.mxu0 0.0
    %3417 = vmatmul.mubr.f32.gmra.mrb[0].mxu0 %v3348
    %v3418 = vpop.f32.mrb[0].mxu0
    %v3419 = vadd.f32 0.0, %v3418
    %v3420 = vpop.f32.mrb[0].mxu0
    %3421 = vmatprep.mubr.f32.mxu0 0.0
    %3422 = vmatmul.mubr.f32.gmra.mrb[0].mxu0 %v3350
    %v3423 = vpop.f32.mrb[0].mxu0
    %v3424 = vadd.f32 0.0, %v3423
    %v3425 = vpop.f32.mrb[0].mxu0
    %3426 = vdwg.mxu0
    %v3427 = vsel %vm1065, %v3024, -1e+30
    %v3428 = vsel %vm1066, %v3029, -1e+30
    %v3429 = vsel %vm1065, %v3103, -1e+30
    %v3430 = vsel %vm1066, %v3108, -1e+30
    %v3431 = vsel %vm1065, %v3182, -1e+30
    %v3432 = vsel %vm1066, %v3187, -1e+30
    %v3433 = vsel %vm1065, %v3261, -1e+30
    %v3434 = vsel %vm1066, %v3266, -1e+30
    %v3435 = vsel %vm1065, %v3340, -1e+30
    %v3436 = vsel %vm1066, %v3345, -1e+30
    %v3437 = vsel %vm1065, %v3419, -1e+30
    %v3438 = vsel %vm1066, %v3424, -1e+30
    %v3439 = vsel %vm588, %v3427, -inf
    %3440 = vmax.xlane.f32.xlu0 %v3439
    %v3441 = vpop.xlane.xlu0 %3440
    %v3442 = vsel %vm588, %v3428, -inf
    %3443 = vmax.xlane.f32.xlu0 %v3442
    %v3444 = vpop.xlane.xlu0 %3443
    %v3445 = vsel %vm588, %v3429, -inf
    %3446 = vmax.xlane.f32.xlu0 %v3445
    %v3447 = vpop.xlane.xlu0 %3446
    %v3448 = vsel %vm588, %v3430, -inf
    %3449 = vmax.xlane.f32.xlu0 %v3448
    %v3450 = vpop.xlane.xlu0 %3449
    %v3451 = vsel %vm588, %v3431, -inf
    %3452 = vmax.xlane.f32.xlu0 %v3451
    %v3453 = vpop.xlane.xlu0 %3452
    %v3454 = vsel %vm588, %v3432, -inf
    %3455 = vmax.xlane.f32.xlu0 %v3454
    %v3456 = vpop.xlane.xlu0 %3455
    %v3457 = vsel %vm588, %v3433, -inf
    %3458 = vmax.xlane.f32.xlu0 %v3457
    %v3459 = vpop.xlane.xlu0 %3458
    %v3460 = vsel %vm588, %v3434, -inf
    %3461 = vmax.xlane.f32.xlu0 %v3460
    %v3462 = vpop.xlane.xlu0 %3461
    %v3463 = vsel %vm588, %v3435, -inf
    %3464 = vmax.xlane.f32.xlu0 %v3463
    %v3465 = vpop.xlane.xlu0 %3464
    %v3466 = vsel %vm588, %v3436, -inf
    %3467 = vmax.xlane.f32.xlu0 %v3466
    %v3468 = vpop.xlane.xlu0 %3467
    %v3469 = vsel %vm588, %v3437, -inf
    %3470 = vmax.xlane.f32.xlu0 %v3469
    %v3471 = vpop.xlane.xlu0 %3470
    %v3472 = vsel %vm588, %v3438, -inf
    %3473 = vmax.xlane.f32.xlu0 %v3472
    %v3474 = vpop.xlane.xlu0 %3473
    %v3475 = vsub.f32 %v3427, %v3441
    %v3476 = vsub.f32 %v3428, %v3444
    %v3477 = vsub.f32 %v3429, %v3447
    %v3478 = vsub.f32 %v3430, %v3450
    %v3479 = vsub.f32 %v3431, %v3453
    %v3480 = vsub.f32 %v3432, %v3456
    %v3481 = vsub.f32 %v3433, %v3459
    %v3482 = vsub.f32 %v3434, %v3462
    %v3483 = vsub.f32 %v3435, %v3465
    %v3484 = vsub.f32 %v3436, %v3468
    %v3485 = vsub.f32 %v3437, %v3471
    %v3486 = vsub.f32 %v3438, %v3474
    %v3487 = vmul.f32 %v3475, 1.442695
    %v3488 = vpow.pop %v3487
    %v3489 = vmul.f32 %v3476, 1.442695
    %v3490 = vpow.pop %v3489
    %v3491 = vmul.f32 %v3477, 1.442695
    %v3492 = vpow.pop %v3491
    %v3493 = vmul.f32 %v3478, 1.442695
    %v3494 = vpow.pop %v3493
    %v3495 = vmul.f32 %v3479, 1.442695
    %v3496 = vpow.pop %v3495
    %v3497 = vmul.f32 %v3480, 1.442695
    %v3498 = vpow.pop %v3497
    %v3499 = vmul.f32 %v3481, 1.442695
    %v3500 = vpow.pop %v3499
    %v3501 = vmul.f32 %v3482, 1.442695
    %v3502 = vpow.pop %v3501
    %v3503 = vmul.f32 %v3483, 1.442695
    %v3504 = vpow.pop %v3503
    %v3505 = vmul.f32 %v3484, 1.442695
    %v3506 = vpow.pop %v3505
    %v3507 = vmul.f32 %v3485, 1.442695
    %v3508 = vpow.pop %v3507
    %v3509 = vmul.f32 %v3486, 1.442695
    %v3510 = vpow.pop %v3509
    %v3511 = vsel %vm588, %v3488, 0.0
    %3512 = vadd.xlane.f32.xlu0 %v3511
    %v3513 = vpop.xlane.xlu0 %3512
    %v3514 = vsel %vm588, %v3490, 0.0
    %3515 = vadd.xlane.f32.xlu0 %v3514
    %v3516 = vpop.xlane.xlu0 %3515
    %v3517 = vsel %vm588, %v3492, 0.0
    %3518 = vadd.xlane.f32.xlu0 %v3517
    %v3519 = vpop.xlane.xlu0 %3518
    %v3520 = vsel %vm588, %v3494, 0.0
    %3521 = vadd.xlane.f32.xlu0 %v3520
    %v3522 = vpop.xlane.xlu0 %3521
    %v3523 = vsel %vm588, %v3496, 0.0
    %3524 = vadd.xlane.f32.xlu0 %v3523
    %v3525 = vpop.xlane.xlu0 %3524
    %v3526 = vsel %vm588, %v3498, 0.0
    %3527 = vadd.xlane.f32.xlu0 %v3526
    %v3528 = vpop.xlane.xlu0 %3527
    %v3529 = vsel %vm588, %v3500, 0.0
    %3530 = vadd.xlane.f32.xlu0 %v3529
    %v3531 = vpop.xlane.xlu0 %3530
    %v3532 = vsel %vm588, %v3502, 0.0
    %3533 = vadd.xlane.f32.xlu0 %v3532
    %v3534 = vpop.xlane.xlu0 %3533
    %v3535 = vsel %vm588, %v3504, 0.0
    %3536 = vadd.xlane.f32.xlu0 %v3535
    %v3537 = vpop.xlane.xlu0 %3536
    %v3538 = vsel %vm588, %v3506, 0.0
    %3539 = vadd.xlane.f32.xlu0 %v3538
    %v3540 = vpop.xlane.xlu0 %3539
    %v3541 = vsel %vm588, %v3508, 0.0
    %3542 = vadd.xlane.f32.xlu0 %v3541
    %v3543 = vpop.xlane.xlu0 %3542
    %v3544 = vsel %vm588, %v3510, 0.0
    %3545 = vadd.xlane.f32.xlu0 %v3544
    %v3546 = vpop.xlane.xlu0 %3545
    %v3547 = vrcp.pop %v3513
    %v3548 = vrcp.pop %v3516
    %v3549 = vrcp.pop %v3519
    %v3550 = vrcp.pop %v3522
    %v3551 = vrcp.pop %v3525
    %v3552 = vrcp.pop %v3528
    %v3553 = vrcp.pop %v3531
    %v3554 = vrcp.pop %v3534
    %v3555 = vrcp.pop %v3537
    %v3556 = vrcp.pop %v3540
    %v3557 = vrcp.pop %v3543
    %v3558 = vrcp.pop %v3546
    %v3559 = vmul.f32 %v3488, %v3547
    %v3560 = vmul.f32 %v3490, %v3548
    %v3561 = vmul.f32 %v3492, %v3549
    %v3562 = vmul.f32 %v3494, %v3550
    %v3563 = vmul.f32 %v3496, %v3551
    %v3564 = vmul.f32 %v3498, %v3552
    %v3565 = vmul.f32 %v3500, %v3553
    %v3566 = vmul.f32 %v3502, %v3554
    %v3567 = vmul.f32 %v3504, %v3555
    %v3568 = vmul.f32 %v3506, %v3556
    %v3569 = vmul.f32 %v3508, %v3557
    %v3570 = vmul.f32 %v3510, %v3558
    %3571 = vxpose.xlu0.b32.start [1/16] %v297, 128
    %3572 = vxpose.xlu0.b32.cont [2/16] %v300, 128
    %3573 = vxpose.xlu0.b32.cont [3/16] 0.0, 128
    %3574 = vxpose.xlu0.b32.cont [4/16] 0.0, 128
    %3575 = vxpose.xlu0.b32.cont [5/16] 0.0, 128
    %3576 = vxpose.xlu0.b32.cont [6/16] 0.0, 128
    %3577 = vxpose.xlu0.b32.cont [7/16] 0.0, 128
    %3578 = vxpose.xlu0.b32.cont [8/16] 0.0, 128
    %3579 = vxpose.xlu0.b32.cont [9/16] 0.0, 128
    %3580 = vxpose.xlu0.b32.cont [10/16] 0.0, 128
    %3581 = vxpose.xlu0.b32.cont [11/16] 0.0, 128
    %3582 = vxpose.xlu0.b32.cont [12/16] 0.0, 128
    %3583 = vxpose.xlu0.b32.cont [13/16] 0.0, 128
    %3584 = vxpose.xlu0.b32.cont [14/16] 0.0, 128
    %3585 = vxpose.xlu0.b32.cont [15/16] 0.0, 128
    %3586 = vxpose.xlu0.b32.end [16/16] 0.0, 128
    %v3587 = vpop.trf.xlu0
    %v3588 = vpop.trf.xlu0
    %v3589 = vpop.trf.xlu0
    %v3590 = vpop.trf.xlu0
    %v3591 = vpop.trf.xlu0
    %v3592 = vpop.trf.xlu0
    %v3593 = vpop.trf.xlu0
    %v3594 = vpop.trf.xlu0
    %v3595 = vpop.trf.xlu0
    %v3596 = vpop.trf.xlu0
    %v3597 = vpop.trf.xlu0
    %v3598 = vpop.trf.xlu0
    %v3599 = vpop.trf.xlu0
    %v3600 = vpop.trf.xlu0
    %v3601 = vpop.trf.xlu0
    %v3602 = vpop.trf.xlu0
    %3603 = vxpose.xlu0.b32.start [1/16] %v2732, 128
    %3604 = vxpose.xlu0.b32.cont [2/16] %v2734, 128
    %3605 = vxpose.xlu0.b32.cont [3/16] 0.0, 128
    %3606 = vxpose.xlu0.b32.cont [4/16] 0.0, 128
    %3607 = vxpose.xlu0.b32.cont [5/16] 0.0, 128
    %3608 = vxpose.xlu0.b32.cont [6/16] 0.0, 128
    %3609 = vxpose.xlu0.b32.cont [7/16] 0.0, 128
    %3610 = vxpose.xlu0.b32.cont [8/16] 0.0, 128
    %3611 = vxpose.xlu0.b32.cont [9/16] 0.0, 128
    %3612 = vxpose.xlu0.b32.cont [10/16] 0.0, 128
    %3613 = vxpose.xlu0.b32.cont [11/16] 0.0, 128
    %3614 = vxpose.xlu0.b32.cont [12/16] 0.0, 128
    %3615 = vxpose.xlu0.b32.cont [13/16] 0.0, 128
    %3616 = vxpose.xlu0.b32.cont [14/16] 0.0, 128
    %3617 = vxpose.xlu0.b32.cont [15/16] 0.0, 128
    %3618 = vxpose.xlu0.b32.end [16/16] 0.0, 128
    %v3619 = vpop.trf.xlu0
    %v3620 = vpop.trf.xlu0
    %v3621 = vpop.trf.xlu0
    %v3622 = vpop.trf.xlu0
    %v3623 = vpop.trf.xlu0
    %v3624 = vpop.trf.xlu0
    %v3625 = vpop.trf.xlu0
    %v3626 = vpop.trf.xlu0
    %v3627 = vpop.trf.xlu0
    %v3628 = vpop.trf.xlu0
    %v3629 = vpop.trf.xlu0
    %v3630 = vpop.trf.xlu0
    %v3631 = vpop.trf.xlu0
    %v3632 = vpop.trf.xlu0
    %v3633 = vpop.trf.xlu0
    %v3634 = vpop.trf.xlu0
    %3635 = vxpose.xlu0.b32.start [1/16] %v2738, 128
    %3636 = vxpose.xlu0.b32.cont [2/16] %v2740, 128
    %3637 = vxpose.xlu0.b32.cont [3/16] 0.0, 128
    %3638 = vxpose.xlu0.b32.cont [4/16] 0.0, 128
    %3639 = vxpose.xlu0.b32.cont [5/16] 0.0, 128
    %3640 = vxpose.xlu0.b32.cont [6/16] 0.0, 128
    %3641 = vxpose.xlu0.b32.cont [7/16] 0.0, 128
    %3642 = vxpose.xlu0.b32.cont [8/16] 0.0, 128
    %3643 = vxpose.xlu0.b32.cont [9/16] 0.0, 128
    %3644 = vxpose.xlu0.b32.cont [10/16] 0.0, 128
    %3645 = vxpose.xlu0.b32.cont [11/16] 0.0, 128
    %3646 = vxpose.xlu0.b32.cont [12/16] 0.0, 128
    %3647 = vxpose.xlu0.b32.cont [13/16] 0.0, 128
    %3648 = vxpose.xlu0.b32.cont [14/16] 0.0, 128
    %3649 = vxpose.xlu0.b32.cont [15/16] 0.0, 128
    %3650 = vxpose.xlu0.b32.end [16/16] 0.0, 128
    %v3651 = vpop.trf.xlu0
    %v3652 = vpop.trf.xlu0
    %v3653 = vpop.trf.xlu0
    %v3654 = vpop.trf.xlu0
    %v3655 = vpop.trf.xlu0
    %v3656 = vpop.trf.xlu0
    %v3657 = vpop.trf.xlu0
    %v3658 = vpop.trf.xlu0
    %v3659 = vpop.trf.xlu0
    %v3660 = vpop.trf.xlu0
    %v3661 = vpop.trf.xlu0
    %v3662 = vpop.trf.xlu0
    %v3663 = vpop.trf.xlu0
    %v3664 = vpop.trf.xlu0
    %v3665 = vpop.trf.xlu0
    %v3666 = vpop.trf.xlu0
    %3667 = vxpose.xlu0.b32.start [1/16] %v2744, 128
    %3668 = vxpose.xlu0.b32.cont [2/16] %v2746, 128
    %3669 = vxpose.xlu0.b32.cont [3/16] 0.0, 128
    %3670 = vxpose.xlu0.b32.cont [4/16] 0.0, 128
    %3671 = vxpose.xlu0.b32.cont [5/16] 0.0, 128
    %3672 = vxpose.xlu0.b32.cont [6/16] 0.0, 128
    %3673 = vxpose.xlu0.b32.cont [7/16] 0.0, 128
    %3674 = vxpose.xlu0.b32.cont [8/16] 0.0, 128
    %3675 = vxpose.xlu0.b32.cont [9/16] 0.0, 128
    %3676 = vxpose.xlu0.b32.cont [10/16] 0.0, 128
    %3677 = vxpose.xlu0.b32.cont [11/16] 0.0, 128
    %3678 = vxpose.xlu0.b32.cont [12/16] 0.0, 128
    %3679 = vxpose.xlu0.b32.cont [13/16] 0.0, 128
    %3680 = vxpose.xlu0.b32.cont [14/16] 0.0, 128
    %3681 = vxpose.xlu0.b32.cont [15/16] 0.0, 128
    %3682 = vxpose.xlu0.b32.end [16/16] 0.0, 128
    %v3683 = vpop.trf.xlu0
    %v3684 = vpop.trf.xlu0
    %v3685 = vpop.trf.xlu0
    %v3686 = vpop.trf.xlu0
    %v3687 = vpop.trf.xlu0
    %v3688 = vpop.trf.xlu0
    %v3689 = vpop.trf.xlu0
    %v3690 = vpop.trf.xlu0
    %v3691 = vpop.trf.xlu0
    %v3692 = vpop.trf.xlu0
    %v3693 = vpop.trf.xlu0
    %v3694 = vpop.trf.xlu0
    %v3695 = vpop.trf.xlu0
    %v3696 = vpop.trf.xlu0
    %v3697 = vpop.trf.xlu0
    %v3698 = vpop.trf.xlu0
    %3699 = vxpose.xlu0.b32.start [1/16] %v2750, 128
    %3700 = vxpose.xlu0.b32.cont [2/16] %v2752, 128
    %3701 = vxpose.xlu0.b32.cont [3/16] 0.0, 128
    %3702 = vxpose.xlu0.b32.cont [4/16] 0.0, 128
    %3703 = vxpose.xlu0.b32.cont [5/16] 0.0, 128
    %3704 = vxpose.xlu0.b32.cont [6/16] 0.0, 128
    %3705 = vxpose.xlu0.b32.cont [7/16] 0.0, 128
    %3706 = vxpose.xlu0.b32.cont [8/16] 0.0, 128
    %3707 = vxpose.xlu0.b32.cont [9/16] 0.0, 128
    %3708 = vxpose.xlu0.b32.cont [10/16] 0.0, 128
    %3709 = vxpose.xlu0.b32.cont [11/16] 0.0, 128
    %3710 = vxpose.xlu0.b32.cont [12/16] 0.0, 128
    %3711 = vxpose.xlu0.b32.cont [13/16] 0.0, 128
    %3712 = vxpose.xlu0.b32.cont [14/16] 0.0, 128
    %3713 = vxpose.xlu0.b32.cont [15/16] 0.0, 128
    %3714 = vxpose.xlu0.b32.end [16/16] 0.0, 128
    %v3715 = vpop.trf.xlu0
    %v3716 = vpop.trf.xlu0
    %v3717 = vpop.trf.xlu0
    %v3718 = vpop.trf.xlu0
    %v3719 = vpop.trf.xlu0
    %v3720 = vpop.trf.xlu0
    %v3721 = vpop.trf.xlu0
    %v3722 = vpop.trf.xlu0
    %v3723 = vpop.trf.xlu0
    %v3724 = vpop.trf.xlu0
    %v3725 = vpop.trf.xlu0
    %v3726 = vpop.trf.xlu0
    %v3727 = vpop.trf.xlu0
    %v3728 = vpop.trf.xlu0
    %v3729 = vpop.trf.xlu0
    %v3730 = vpop.trf.xlu0
    %3731 = vxpose.xlu0.b32.start [1/16] %v2756, 128
    %3732 = vxpose.xlu0.b32.cont [2/16] %v2758, 128
    %3733 = vxpose.xlu0.b32.cont [3/16] 0.0, 128
    %3734 = vxpose.xlu0.b32.cont [4/16] 0.0, 128
    %3735 = vxpose.xlu0.b32.cont [5/16] 0.0, 128
    %3736 = vxpose.xlu0.b32.cont [6/16] 0.0, 128
    %3737 = vxpose.xlu0.b32.cont [7/16] 0.0, 128
    %3738 = vxpose.xlu0.b32.cont [8/16] 0.0, 128
    %3739 = vxpose.xlu0.b32.cont [9/16] 0.0, 128
    %3740 = vxpose.xlu0.b32.cont [10/16] 0.0, 128
    %3741 = vxpose.xlu0.b32.cont [11/16] 0.0, 128
    %3742 = vxpose.xlu0.b32.cont [12/16] 0.0, 128
    %3743 = vxpose.xlu0.b32.cont [13/16] 0.0, 128
    %3744 = vxpose.xlu0.b32.cont [14/16] 0.0, 128
    %3745 = vxpose.xlu0.b32.cont [15/16] 0.0, 128
    %3746 = vxpose.xlu0.b32.end [16/16] 0.0, 128
    %v3747 = vpop.trf.xlu0
    %v3748 = vpop.trf.xlu0
    %v3749 = vpop.trf.xlu0
    %v3750 = vpop.trf.xlu0
    %v3751 = vpop.trf.xlu0
    %v3752 = vpop.trf.xlu0
    %v3753 = vpop.trf.xlu0
    %v3754 = vpop.trf.xlu0
    %v3755 = vpop.trf.xlu0
    %v3756 = vpop.trf.xlu0
    %v3757 = vpop.trf.xlu0
    %v3758 = vpop.trf.xlu0
    %v3759 = vpop.trf.xlu0
    %v3760 = vpop.trf.xlu0
    %v3761 = vpop.trf.xlu0
    %v3762 = vpop.trf.xlu0
    %v3764 = vsel %vm588, %v3587, 0
    %v3767 = vsel %vm588, %v3588, 0
    %v3770 = vsel %vm588, %v3559, 0
    %v3773 = vsel %vm588, %v3560, 0
    %3775 = vmatprep.subr.mxu0 0.0
    %3776 = vmatpush1.xpose.msra.mxu0 %v3770
    %3777 = vmatprep.subr.mxu0 0.0
    %3778 = vmatpush1.xpose.msra.mxu0 %v3773
    %3779 = vmatprep.subr.mxu0 0.0
    %3780 = vmatpush1.xpose.msra.mxu0 0.0
    %3781 = vmatprep.subr.mxu0 0.0
    %3782 = vmatpush1.xpose.msra.mxu0 0.0
    %3783 = vmatprep.subr.mxu0 0.0
    %3784 = vmatpush1.xpose.msra.mxu0 0.0
    %3785 = vmatprep.subr.mxu0 0.0
    %3786 = vmatpush1.xpose.msra.mxu0 0.0
    %3787 = vmatprep.subr.mxu0 0.0
    %3788 = vmatpush1.xpose.msra.mxu0 0.0
    %3789 = vmatprep.subr.mxu0 0.0
    %3790 = vmatpush1.xpose.msra.mxu0 0.0
    %3791 = vmatprep.subr.mxu0 0.0
    %3792 = vmatpush1.xpose.msra.mxu0 0.0
    %3793 = vmatprep.subr.mxu0 0.0
    %3794 = vmatpush1.xpose.msra.mxu0 0.0
    %3795 = vmatprep.subr.mxu0 0.0
    %3796 = vmatpush1.xpose.msra.mxu0 0.0
    %3797 = vmatprep.subr.mxu0 0.0
    %3798 = vmatpush1.xpose.msra.mxu0 0.0
    %3799 = vmatprep.subr.mxu0 0.0
    %3800 = vmatpush1.xpose.msra.mxu0 0.0
    %3801 = vmatprep.subr.mxu0 0.0
    %3802 = vmatpush1.xpose.msra.mxu0 0.0
    %3803 = vmatprep.subr.mxu0 0.0
    %3804 = vmatpush1.xpose.msra.mxu0 0.0
    %3805 = vmatprep.subr.mxu0 0.0
    %3806 = vmatpush1.xpose.msra.mxu0 0.0
    %3807 = vmatprep.subr.mxu0 0.0
    %3808 = vmatpush1.xpose.msra.mxu0 0.0
    %3809 = vmatprep.subr.mxu0 0.0
    %3810 = vmatpush1.xpose.msra.mxu0 0.0
    %3811 = vmatprep.subr.mxu0 0.0
    %3812 = vmatpush1.xpose.msra.mxu0 0.0
    %3813 = vmatprep.subr.mxu0 0.0
    %3814 = vmatpush1.xpose.msra.mxu0 0.0
    %3815 = vmatprep.subr.mxu0 0.0
    %3816 = vmatpush1.xpose.msra.mxu0 0.0
    %3817 = vmatprep.subr.mxu0 0.0
    %3818 = vmatpush1.xpose.msra.mxu0 0.0
    %3819 = vmatprep.subr.mxu0 0.0
    %3820 = vmatpush1.xpose.msra.mxu0 0.0
    %3821 = vmatprep.subr.mxu0 0.0
    %3822 = vmatpush1.xpose.msra.mxu0 0.0
    %3823 = vmatprep.subr.mxu0 0.0
    %3824 = vmatpush1.xpose.msra.mxu0 0.0
    %3825 = vmatprep.subr.mxu0 0.0
    %3826 = vmatpush1.xpose.msra.mxu0 0.0
    %3827 = vmatprep.subr.mxu0 0.0
    %3828 = vmatpush1.xpose.msra.mxu0 0.0
    %3829 = vmatprep.subr.mxu0 0.0
    %3830 = vmatpush1.xpose.msra.mxu0 0.0
    %3831 = vmatprep.subr.mxu0 0.0
    %3832 = vmatpush1.xpose.msra.mxu0 0.0
    %3833 = vmatprep.subr.mxu0 0.0
    %3834 = vmatpush1.xpose.msra.mxu0 0.0
    %3835 = vmatprep.subr.mxu0 0.0
    %3836 = vmatpush1.xpose.msra.mxu0 0.0
    %3837 = vmatprep.subr.mxu0 0.0
    %3838 = vmatpush1.xpose.msra.mxu0 0.0
    %3839 = vmatprep.mubr.f32.mxu0 0.0
    %3840 = vmatmul.mubr.f32.gmra.mrb[0].mxu0 %v3764
    %v3841 = vpop.f32.mrb[0].mxu0
    %v3842 = vadd.f32 0.0, %v3841
    %v3843 = vpop.f32.mrb[0].mxu0
    %3844 = vmatprep.mubr.f32.mxu0 0.0
    %3845 = vmatmul.mubr.f32.gmra.mrb[0].mxu0 %v3767
    %v3846 = vpop.f32.mrb[0].mxu0
    %v3847 = vadd.f32 0.0, %v3846
    %v3848 = vpop.f32.mrb[0].mxu0
    %3849 = vdwg.mxu0
    %v3851 = vsel %vm588, %v3619, 0
    %v3854 = vsel %vm588, %v3620, 0
    %v3857 = vsel %vm588, %v3561, 0
    %v3860 = vsel %vm588, %v3562, 0
    %3862 = vmatprep.subr.mxu0 0.0
    %3863 = vmatpush1.xpose.msra.mxu0 %v3857
    %3864 = vmatprep.subr.mxu0 0.0
    %3865 = vmatpush1.xpose.msra.mxu0 %v3860
    %3866 = vmatprep.subr.mxu0 0.0
    %3867 = vmatpush1.xpose.msra.mxu0 0.0
    %3868 = vmatprep.subr.mxu0 0.0
    %3869 = vmatpush1.xpose.msra.mxu0 0.0
    %3870 = vmatprep.subr.mxu0 0.0
    %3871 = vmatpush1.xpose.msra.mxu0 0.0
    %3872 = vmatprep.subr.mxu0 0.0
    %3873 = vmatpush1.xpose.msra.mxu0 0.0
    %3874 = vmatprep.subr.mxu0 0.0
    %3875 = vmatpush1.xpose.msra.mxu0 0.0
    %3876 = vmatprep.subr.mxu0 0.0
    %3877 = vmatpush1.xpose.msra.mxu0 0.0
    %3878 = vmatprep.subr.mxu0 0.0
    %3879 = vmatpush1.xpose.msra.mxu0 0.0
    %3880 = vmatprep.subr.mxu0 0.0
    %3881 = vmatpush1.xpose.msra.mxu0 0.0
    %3882 = vmatprep.subr.mxu0 0.0
    %3883 = vmatpush1.xpose.msra.mxu0 0.0
    %3884 = vmatprep.subr.mxu0 0.0
    %3885 = vmatpush1.xpose.msra.mxu0 0.0
    %3886 = vmatprep.subr.mxu0 0.0
    %3887 = vmatpush1.xpose.msra.mxu0 0.0
    %3888 = vmatprep.subr.mxu0 0.0
    %3889 = vmatpush1.xpose.msra.mxu0 0.0
    %3890 = vmatprep.subr.mxu0 0.0
    %3891 = vmatpush1.xpose.msra.mxu0 0.0
    %3892 = vmatprep.subr.mxu0 0.0
    %3893 = vmatpush1.xpose.msra.mxu0 0.0
    %3894 = vmatprep.subr.mxu0 0.0
    %3895 = vmatpush1.xpose.msra.mxu0 0.0
    %3896 = vmatprep.subr.mxu0 0.0
    %3897 = vmatpush1.xpose.msra.mxu0 0.0
    %3898 = vmatprep.subr.mxu0 0.0
    %3899 = vmatpush1.xpose.msra.mxu0 0.0
    %3900 = vmatprep.subr.mxu0 0.0
    %3901 = vmatpush1.xpose.msra.mxu0 0.0
    %3902 = vmatprep.subr.mxu0 0.0
    %3903 = vmatpush1.xpose.msra.mxu0 0.0
    %3904 = vmatprep.subr.mxu0 0.0
    %3905 = vmatpush1.xpose.msra.mxu0 0.0
    %3906 = vmatprep.subr.mxu0 0.0
    %3907 = vmatpush1.xpose.msra.mxu0 0.0
    %3908 = vmatprep.subr.mxu0 0.0
    %3909 = vmatpush1.xpose.msra.mxu0 0.0
    %3910 = vmatprep.subr.mxu0 0.0
    %3911 = vmatpush1.xpose.msra.mxu0 0.0
    %3912 = vmatprep.subr.mxu0 0.0
    %3913 = vmatpush1.xpose.msra.mxu0 0.0
    %3914 = vmatprep.subr.mxu0 0.0
    %3915 = vmatpush1.xpose.msra.mxu0 0.0
    %3916 = vmatprep.subr.mxu0 0.0
    %3917 = vmatpush1.xpose.msra.mxu0 0.0
    %3918 = vmatprep.subr.mxu0 0.0
    %3919 = vmatpush1.xpose.msra.mxu0 0.0
    %3920 = vmatprep.subr.mxu0 0.0
    %3921 = vmatpush1.xpose.msra.mxu0 0.0
    %3922 = vmatprep.subr.mxu0 0.0
    %3923 = vmatpush1.xpose.msra.mxu0 0.0
    %3924 = vmatprep.subr.mxu0 0.0
    %3925 = vmatpush1.xpose.msra.mxu0 0.0
    %3926 = vmatprep.mubr.f32.mxu0 0.0
    %3927 = vmatmul.mubr.f32.gmra.mrb[0].mxu0 %v3851
    %v3928 = vpop.f32.mrb[0].mxu0
    %v3929 = vadd.f32 0.0, %v3928
    %v3930 = vpop.f32.mrb[0].mxu0
    %3931 = vmatprep.mubr.f32.mxu0 0.0
    %3932 = vmatmul.mubr.f32.gmra.mrb[0].mxu0 %v3854
    %v3933 = vpop.f32.mrb[0].mxu0
    %v3934 = vadd.f32 0.0, %v3933
    %v3935 = vpop.f32.mrb[0].mxu0
    %3936 = vdwg.mxu0
    %v3938 = vsel %vm588, %v3651, 0
    %v3941 = vsel %vm588, %v3652, 0
    %v3944 = vsel %vm588, %v3563, 0
    %v3947 = vsel %vm588, %v3564, 0
    %3949 = vmatprep.subr.mxu0 0.0
    %3950 = vmatpush1.xpose.msra.mxu0 %v3944
    %3951 = vmatprep.subr.mxu0 0.0
    %3952 = vmatpush1.xpose.msra.mxu0 %v3947
    %3953 = vmatprep.subr.mxu0 0.0
    %3954 = vmatpush1.xpose.msra.mxu0 0.0
    %3955 = vmatprep.subr.mxu0 0.0
    %3956 = vmatpush1.xpose.msra.mxu0 0.0
    %3957 = vmatprep.subr.mxu0 0.0
    %3958 = vmatpush1.xpose.msra.mxu0 0.0
    %3959 = vmatprep.subr.mxu0 0.0
    %3960 = vmatpush1.xpose.msra.mxu0 0.0
    %3961 = vmatprep.subr.mxu0 0.0
    %3962 = vmatpush1.xpose.msra.mxu0 0.0
    %3963 = vmatprep.subr.mxu0 0.0
    %3964 = vmatpush1.xpose.msra.mxu0 0.0
    %3965 = vmatprep.subr.mxu0 0.0
    %3966 = vmatpush1.xpose.msra.mxu0 0.0
    %3967 = vmatprep.subr.mxu0 0.0
    %3968 = vmatpush1.xpose.msra.mxu0 0.0
    %3969 = vmatprep.subr.mxu0 0.0
    %3970 = vmatpush1.xpose.msra.mxu0 0.0
    %3971 = vmatprep.subr.mxu0 0.0
    %3972 = vmatpush1.xpose.msra.mxu0 0.0
    %3973 = vmatprep.subr.mxu0 0.0
    %3974 = vmatpush1.xpose.msra.mxu0 0.0
    %3975 = vmatprep.subr.mxu0 0.0
    %3976 = vmatpush1.xpose.msra.mxu0 0.0
    %3977 = vmatprep.subr.mxu0 0.0
    %3978 = vmatpush1.xpose.msra.mxu0 0.0
    %3979 = vmatprep.subr.mxu0 0.0
    %3980 = vmatpush1.xpose.msra.mxu0 0.0
    %3981 = vmatprep.subr.mxu0 0.0
    %3982 = vmatpush1.xpose.msra.mxu0 0.0
    %3983 = vmatprep.subr.mxu0 0.0
    %3984 = vmatpush1.xpose.msra.mxu0 0.0
    %3985 = vmatprep.subr.mxu0 0.0
    %3986 = vmatpush1.xpose.msra.mxu0 0.0
    %3987 = vmatprep.subr.mxu0 0.0
    %3988 = vmatpush1.xpose.msra.mxu0 0.0
    %3989 = vmatprep.subr.mxu0 0.0
    %3990 = vmatpush1.xpose.msra.mxu0 0.0
    %3991 = vmatprep.subr.mxu0 0.0
    %3992 = vmatpush1.xpose.msra.mxu0 0.0
    %3993 = vmatprep.subr.mxu0 0.0
    %3994 = vmatpush1.xpose.msra.mxu0 0.0
    %3995 = vmatprep.subr.mxu0 0.0
    %3996 = vmatpush1.xpose.msra.mxu0 0.0
    %3997 = vmatprep.subr.mxu0 0.0
    %3998 = vmatpush1.xpose.msra.mxu0 0.0
    %3999 = vmatprep.subr.mxu0 0.0
    %4000 = vmatpush1.xpose.msra.mxu0 0.0
    %4001 = vmatprep.subr.mxu0 0.0
    %4002 = vmatpush1.xpose.msra.mxu0 0.0
    %4003 = vmatprep.subr.mxu0 0.0
    %4004 = vmatpush1.xpose.msra.mxu0 0.0
    %4005 = vmatprep.subr.mxu0 0.0
    %4006 = vmatpush1.xpose.msra.mxu0 0.0
    %4007 = vmatprep.subr.mxu0 0.0
    %4008 = vmatpush1.xpose.msra.mxu0 0.0
    %4009 = vmatprep.subr.mxu0 0.0
    %4010 = vmatpush1.xpose.msra.mxu0 0.0
    %4011 = vmatprep.subr.mxu0 0.0
    %4012 = vmatpush1.xpose.msra.mxu0 0.0
    %4013 = vmatprep.mubr.f32.mxu0 0.0
    %4014 = vmatmul.mubr.f32.gmra.mrb[0].mxu0 %v3938
    %v4015 = vpop.f32.mrb[0].mxu0
    %v4016 = vadd.f32 0.0, %v4015
    %v4017 = vpop.f32.mrb[0].mxu0
    %4018 = vmatprep.mubr.f32.mxu0 0.0
    %4019 = vmatmul.mubr.f32.gmra.mrb[0].mxu0 %v3941
    %v4020 = vpop.f32.mrb[0].mxu0
    %v4021 = vadd.f32 0.0, %v4020
    %v4022 = vpop.f32.mrb[0].mxu0
    %4023 = vdwg.mxu0
    %v4025 = vsel %vm588, %v3683, 0
    %v4028 = vsel %vm588, %v3684, 0
    %v4031 = vsel %vm588, %v3565, 0
    %v4034 = vsel %vm588, %v3566, 0
    %4036 = vmatprep.subr.mxu0 0.0
    %4037 = vmatpush1.xpose.msra.mxu0 %v4031
    %4038 = vmatprep.subr.mxu0 0.0
    %4039 = vmatpush1.xpose.msra.mxu0 %v4034
    %4040 = vmatprep.subr.mxu0 0.0
    %4041 = vmatpush1.xpose.msra.mxu0 0.0
    %4042 = vmatprep.subr.mxu0 0.0
    %4043 = vmatpush1.xpose.msra.mxu0 0.0
    %4044 = vmatprep.subr.mxu0 0.0
    %4045 = vmatpush1.xpose.msra.mxu0 0.0
    %4046 = vmatprep.subr.mxu0 0.0
    %4047 = vmatpush1.xpose.msra.mxu0 0.0
    %4048 = vmatprep.subr.mxu0 0.0
    %4049 = vmatpush1.xpose.msra.mxu0 0.0
    %4050 = vmatprep.subr.mxu0 0.0
    %4051 = vmatpush1.xpose.msra.mxu0 0.0
    %4052 = vmatprep.subr.mxu0 0.0
    %4053 = vmatpush1.xpose.msra.mxu0 0.0
    %4054 = vmatprep.subr.mxu0 0.0
    %4055 = vmatpush1.xpose.msra.mxu0 0.0
    %4056 = vmatprep.subr.mxu0 0.0
    %4057 = vmatpush1.xpose.msra.mxu0 0.0
    %4058 = vmatprep.subr.mxu0 0.0
    %4059 = vmatpush1.xpose.msra.mxu0 0.0
    %4060 = vmatprep.subr.mxu0 0.0
    %4061 = vmatpush1.xpose.msra.mxu0 0.0
    %4062 = vmatprep.subr.mxu0 0.0
    %4063 = vmatpush1.xpose.msra.mxu0 0.0
    %4064 = vmatprep.subr.mxu0 0.0
    %4065 = vmatpush1.xpose.msra.mxu0 0.0
    %4066 = vmatprep.subr.mxu0 0.0
    %4067 = vmatpush1.xpose.msra.mxu0 0.0
    %4068 = vmatprep.subr.mxu0 0.0
    %4069 = vmatpush1.xpose.msra.mxu0 0.0
    %4070 = vmatprep.subr.mxu0 0.0
    %4071 = vmatpush1.xpose.msra.mxu0 0.0
    %4072 = vmatprep.subr.mxu0 0.0
    %4073 = vmatpush1.xpose.msra.mxu0 0.0
    %4074 = vmatprep.subr.mxu0 0.0
    %4075 = vmatpush1.xpose.msra.mxu0 0.0
    %4076 = vmatprep.subr.mxu0 0.0
    %4077 = vmatpush1.xpose.msra.mxu0 0.0
    %4078 = vmatprep.subr.mxu0 0.0
    %4079 = vmatpush1.xpose.msra.mxu0 0.0
    %4080 = vmatprep.subr.mxu0 0.0
    %4081 = vmatpush1.xpose.msra.mxu0 0.0
    %4082 = vmatprep.subr.mxu0 0.0
    %4083 = vmatpush1.xpose.msra.mxu0 0.0
    %4084 = vmatprep.subr.mxu0 0.0
    %4085 = vmatpush1.xpose.msra.mxu0 0.0
    %4086 = vmatprep.subr.mxu0 0.0
    %4087 = vmatpush1.xpose.msra.mxu0 0.0
    %4088 = vmatprep.subr.mxu0 0.0
    %4089 = vmatpush1.xpose.msra.mxu0 0.0
    %4090 = vmatprep.subr.mxu0 0.0
    %4091 = vmatpush1.xpose.msra.mxu0 0.0
    %4092 = vmatprep.subr.mxu0 0.0
    %4093 = vmatpush1.xpose.msra.mxu0 0.0
    %4094 = vmatprep.subr.mxu0 0.0
    %4095 = vmatpush1.xpose.msra.mxu0 0.0
    %4096 = vmatprep.subr.mxu0 0.0
    %4097 = vmatpush1.xpose.msra.mxu0 0.0
    %4098 = vmatprep.subr.mxu0 0.0
    %4099 = vmatpush1.xpose.msra.mxu0 0.0
    %4100 = vmatprep.mubr.f32.mxu0 0.0
    %4101 = vmatmul.mubr.f32.gmra.mrb[0].mxu0 %v4025
    %v4102 = vpop.f32.mrb[0].mxu0
    %v4103 = vadd.f32 0.0, %v4102
    %v4104 = vpop.f32.mrb[0].mxu0
    %4105 = vmatprep.mubr.f32.mxu0 0.0
    %4106 = vmatmul.mubr.f32.gmra.mrb[0].mxu0 %v4028
    %v4107 = vpop.f32.mrb[0].mxu0
    %v4108 = vadd.f32 0.0, %v4107
    %v4109 = vpop.f32.mrb[0].mxu0
    %4110 = vdwg.mxu0
    %v4112 = vsel %vm588, %v3715, 0
    %v4115 = vsel %vm588, %v3716, 0
    %v4118 = vsel %vm588, %v3567, 0
    %v4121 = vsel %vm588, %v3568, 0
    %4123 = vmatprep.subr.mxu0 0.0
    %4124 = vmatpush1.xpose.msra.mxu0 %v4118
    %4125 = vmatprep.subr.mxu0 0.0
    %4126 = vmatpush1.xpose.msra.mxu0 %v4121
    %4127 = vmatprep.subr.mxu0 0.0
    %4128 = vmatpush1.xpose.msra.mxu0 0.0
    %4129 = vmatprep.subr.mxu0 0.0
    %4130 = vmatpush1.xpose.msra.mxu0 0.0
    %4131 = vmatprep.subr.mxu0 0.0
    %4132 = vmatpush1.xpose.msra.mxu0 0.0
    %4133 = vmatprep.subr.mxu0 0.0
    %4134 = vmatpush1.xpose.msra.mxu0 0.0
    %4135 = vmatprep.subr.mxu0 0.0
    %4136 = vmatpush1.xpose.msra.mxu0 0.0
    %4137 = vmatprep.subr.mxu0 0.0
    %4138 = vmatpush1.xpose.msra.mxu0 0.0
    %4139 = vmatprep.subr.mxu0 0.0
    %4140 = vmatpush1.xpose.msra.mxu0 0.0
    %4141 = vmatprep.subr.mxu0 0.0
    %4142 = vmatpush1.xpose.msra.mxu0 0.0
    %4143 = vmatprep.subr.mxu0 0.0
    %4144 = vmatpush1.xpose.msra.mxu0 0.0
    %4145 = vmatprep.subr.mxu0 0.0
    %4146 = vmatpush1.xpose.msra.mxu0 0.0
    %4147 = vmatprep.subr.mxu0 0.0
    %4148 = vmatpush1.xpose.msra.mxu0 0.0
    %4149 = vmatprep.subr.mxu0 0.0
    %4150 = vmatpush1.xpose.msra.mxu0 0.0
    %4151 = vmatprep.subr.mxu0 0.0
    %4152 = vmatpush1.xpose.msra.mxu0 0.0
    %4153 = vmatprep.subr.mxu0 0.0
    %4154 = vmatpush1.xpose.msra.mxu0 0.0
    %4155 = vmatprep.subr.mxu0 0.0
    %4156 = vmatpush1.xpose.msra.mxu0 0.0
    %4157 = vmatprep.subr.mxu0 0.0
    %4158 = vmatpush1.xpose.msra.mxu0 0.0
    %4159 = vmatprep.subr.mxu0 0.0
    %4160 = vmatpush1.xpose.msra.mxu0 0.0
    %4161 = vmatprep.subr.mxu0 0.0
    %4162 = vmatpush1.xpose.msra.mxu0 0.0
    %4163 = vmatprep.subr.mxu0 0.0
    %4164 = vmatpush1.xpose.msra.mxu0 0.0
    %4165 = vmatprep.subr.mxu0 0.0
    %4166 = vmatpush1.xpose.msra.mxu0 0.0
    %4167 = vmatprep.subr.mxu0 0.0
    %4168 = vmatpush1.xpose.msra.mxu0 0.0
    %4169 = vmatprep.subr.mxu0 0.0
    %4170 = vmatpush1.xpose.msra.mxu0 0.0
    %4171 = vmatprep.subr.mxu0 0.0
    %4172 = vmatpush1.xpose.msra.mxu0 0.0
    %4173 = vmatprep.subr.mxu0 0.0
    %4174 = vmatpush1.xpose.msra.mxu0 0.0
    %4175 = vmatprep.subr.mxu0 0.0
    %4176 = vmatpush1.xpose.msra.mxu0 0.0
    %4177 = vmatprep.subr.mxu0 0.0
    %4178 = vmatpush1.xpose.msra.mxu0 0.0
    %4179 = vmatprep.subr.mxu0 0.0
    %4180 = vmatpush1.xpose.msra.mxu0 0.0
    %4181 = vmatprep.subr.mxu0 0.0
    %4182 = vmatpush1.xpose.msra.mxu0 0.0
    %4183 = vmatprep.subr.mxu0 0.0
    %4184 = vmatpush1.xpose.msra.mxu0 0.0
    %4185 = vmatprep.subr.mxu0 0.0
    %4186 = vmatpush1.xpose.msra.mxu0 0.0
    %4187 = vmatprep.mubr.f32.mxu0 0.0
    %4188 = vmatmul.mubr.f32.gmra.mrb[0].mxu0 %v4112
    %v4189 = vpop.f32.mrb[0].mxu0
    %v4190 = vadd.f32 0.0, %v4189
    %v4191 = vpop.f32.mrb[0].mxu0
    %4192 = vmatprep.mubr.f32.mxu0 0.0
    %4193 = vmatmul.mubr.f32.gmra.mrb[0].mxu0 %v4115
    %v4194 = vpop.f32.mrb[0].mxu0
    %v4195 = vadd.f32 0.0, %v4194
    %v4196 = vpop.f32.mrb[0].mxu0
    %4197 = vdwg.mxu0
    %v4199 = vsel %vm588, %v3747, 0
    %v4202 = vsel %vm588, %v3748, 0
    %v4205 = vsel %vm588, %v3569, 0
    %v4208 = vsel %vm588, %v3570, 0
    %4210 = vmatprep.subr.mxu0 0.0
    %4211 = vmatpush1.xpose.msra.mxu0 %v4205
    %4212 = vmatprep.subr.mxu0 0.0
    %4213 = vmatpush1.xpose.msra.mxu0 %v4208
    %4214 = vmatprep.subr.mxu0 0.0
    %4215 = vmatpush1.xpose.msra.mxu0 0.0
    %4216 = vmatprep.subr.mxu0 0.0
    %4217 = vmatpush1.xpose.msra.mxu0 0.0
    %4218 = vmatprep.subr.mxu0 0.0
    %4219 = vmatpush1.xpose.msra.mxu0 0.0
    %4220 = vmatprep.subr.mxu0 0.0
    %4221 = vmatpush1.xpose.msra.mxu0 0.0
    %4222 = vmatprep.subr.mxu0 0.0
    %4223 = vmatpush1.xpose.msra.mxu0 0.0
    %4224 = vmatprep.subr.mxu0 0.0
    %4225 = vmatpush1.xpose.msra.mxu0 0.0
    %4226 = vmatprep.subr.mxu0 0.0
    %4227 = vmatpush1.xpose.msra.mxu0 0.0
    %4228 = vmatprep.subr.mxu0 0.0
    %4229 = vmatpush1.xpose.msra.mxu0 0.0
    %4230 = vmatprep.subr.mxu0 0.0
    %4231 = vmatpush1.xpose.msra.mxu0 0.0
    %4232 = vmatprep.subr.mxu0 0.0
    %4233 = vmatpush1.xpose.msra.mxu0 0.0
    %4234 = vmatprep.subr.mxu0 0.0
    %4235 = vmatpush1.xpose.msra.mxu0 0.0
    %4236 = vmatprep.subr.mxu0 0.0
    %4237 = vmatpush1.xpose.msra.mxu0 0.0
    %4238 = vmatprep.subr.mxu0 0.0
    %4239 = vmatpush1.xpose.msra.mxu0 0.0
    %4240 = vmatprep.subr.mxu0 0.0
    %4241 = vmatpush1.xpose.msra.mxu0 0.0
    %4242 = vmatprep.subr.mxu0 0.0
    %4243 = vmatpush1.xpose.msra.mxu0 0.0
    %4244 = vmatprep.subr.mxu0 0.0
    %4245 = vmatpush1.xpose.msra.mxu0 0.0
    %4246 = vmatprep.subr.mxu0 0.0
    %4247 = vmatpush1.xpose.msra.mxu0 0.0
    %4248 = vmatprep.subr.mxu0 0.0
    %4249 = vmatpush1.xpose.msra.mxu0 0.0
    %4250 = vmatprep.subr.mxu0 0.0
    %4251 = vmatpush1.xpose.msra.mxu0 0.0
    %4252 = vmatprep.subr.mxu0 0.0
    %4253 = vmatpush1.xpose.msra.mxu0 0.0
    %4254 = vmatprep.subr.mxu0 0.0
    %4255 = vmatpush1.xpose.msra.mxu0 0.0
    %4256 = vmatprep.subr.mxu0 0.0
    %4257 = vmatpush1.xpose.msra.mxu0 0.0
    %4258 = vmatprep.subr.mxu0 0.0
    %4259 = vmatpush1.xpose.msra.mxu0 0.0
    %4260 = vmatprep.subr.mxu0 0.0
    %4261 = vmatpush1.xpose.msra.mxu0 0.0
    %4262 = vmatprep.subr.mxu0 0.0
    %4263 = vmatpush1.xpose.msra.mxu0 0.0
    %4264 = vmatprep.subr.mxu0 0.0
    %4265 = vmatpush1.xpose.msra.mxu0 0.0
    %4266 = vmatprep.subr.mxu0 0.0
    %4267 = vmatpush1.xpose.msra.mxu0 0.0
    %4268 = vmatprep.subr.mxu0 0.0
    %4269 = vmatpush1.xpose.msra.mxu0 0.0
    %4270 = vmatprep.subr.mxu0 0.0
    %4271 = vmatpush1.xpose.msra.mxu0 0.0
    %4272 = vmatprep.subr.mxu0 0.0
    %4273 = vmatpush1.xpose.msra.mxu0 0.0
    %4274 = vmatprep.mubr.f32.mxu0 0.0
    %4275 = vmatmul.mubr.f32.gmra.mrb[0].mxu0 %v4199
    %v4276 = vpop.f32.mrb[0].mxu0
    %v4277 = vadd.f32 0.0, %v4276
    %v4278 = vpop.f32.mrb[0].mxu0
    %4279 = vmatprep.mubr.f32.mxu0 0.0
    %4280 = vmatmul.mubr.f32.gmra.mrb[0].mxu0 %v4202
    %v4281 = vpop.f32.mrb[0].mxu0
    %v4282 = vadd.f32 0.0, %v4281
    %v4283 = vpop.f32.mrb[0].mxu0
    %4284 = vdwg.mxu0
    %4285 = vxpose.xlu0.b32.start [1/16] %v3842, 128
    %4286 = vxpose.xlu0.b32.cont [2/16] %v3847, 128
    %4287 = vxpose.xlu0.b32.cont [3/16] 0.0, 128
    %4288 = vxpose.xlu0.b32.cont [4/16] 0.0, 128
    %4289 = vxpose.xlu0.b32.cont [5/16] 0.0, 128
    %4290 = vxpose.xlu0.b32.cont [6/16] 0.0, 128
    %4291 = vxpose.xlu0.b32.cont [7/16] 0.0, 128
    %4292 = vxpose.xlu0.b32.cont [8/16] 0.0, 128
    %4293 = vxpose.xlu0.b32.cont [9/16] 0.0, 128
    %4294 = vxpose.xlu0.b32.cont [10/16] 0.0, 128
    %4295 = vxpose.xlu0.b32.cont [11/16] 0.0, 128
    %4296 = vxpose.xlu0.b32.cont [12/16] 0.0, 128
    %4297 = vxpose.xlu0.b32.cont [13/16] 0.0, 128
    %4298 = vxpose.xlu0.b32.cont [14/16] 0.0, 128
    %4299 = vxpose.xlu0.b32.cont [15/16] 0.0, 128
    %4300 = vxpose.xlu0.b32.end [16/16] 0.0, 128
    %v4301 = vpop.trf.xlu0
    %v4302 = vpop.trf.xlu0
    %v4303 = vpop.trf.xlu0
    %v4304 = vpop.trf.xlu0
    %v4305 = vpop.trf.xlu0
    %v4306 = vpop.trf.xlu0
    %v4307 = vpop.trf.xlu0
    %v4308 = vpop.trf.xlu0
    %v4309 = vpop.trf.xlu0
    %v4310 = vpop.trf.xlu0
    %v4311 = vpop.trf.xlu0
    %v4312 = vpop.trf.xlu0
    %v4313 = vpop.trf.xlu0
    %v4314 = vpop.trf.xlu0
    %v4315 = vpop.trf.xlu0
    %v4316 = vpop.trf.xlu0
    %4317 = vxpose.xlu0.b32.start [1/16] %v3929, 128
    %4318 = vxpose.xlu0.b32.cont [2/16] %v3934, 128
    %4319 = vxpose.xlu0.b32.cont [3/16] 0.0, 128
    %4320 = vxpose.xlu0.b32.cont [4/16] 0.0, 128
    %4321 = vxpose.xlu0.b32.cont [5/16] 0.0, 128
    %4322 = vxpose.xlu0.b32.cont [6/16] 0.0, 128
    %4323 = vxpose.xlu0.b32.cont [7/16] 0.0, 128
    %4324 = vxpose.xlu0.b32.cont [8/16] 0.0, 128
    %4325 = vxpose.xlu0.b32.cont [9/16] 0.0, 128
    %4326 = vxpose.xlu0.b32.cont [10/16] 0.0, 128
    %4327 = vxpose.xlu0.b32.cont [11/16] 0.0, 128
    %4328 = vxpose.xlu0.b32.cont [12/16] 0.0, 128
    %4329 = vxpose.xlu0.b32.cont [13/16] 0.0, 128
    %4330 = vxpose.xlu0.b32.cont [14/16] 0.0, 128
    %4331 = vxpose.xlu0.b32.cont [15/16] 0.0, 128
    %4332 = vxpose.xlu0.b32.end [16/16] 0.0, 128
    %v4333 = vpop.trf.xlu0
    %v4334 = vpop.trf.xlu0
    %v4335 = vpop.trf.xlu0
    %v4336 = vpop.trf.xlu0
    %v4337 = vpop.trf.xlu0
    %v4338 = vpop.trf.xlu0
    %v4339 = vpop.trf.xlu0
    %v4340 = vpop.trf.xlu0
    %v4341 = vpop.trf.xlu0
    %v4342 = vpop.trf.xlu0
    %v4343 = vpop.trf.xlu0
    %v4344 = vpop.trf.xlu0
    %v4345 = vpop.trf.xlu0
    %v4346 = vpop.trf.xlu0
    %v4347 = vpop.trf.xlu0
    %v4348 = vpop.trf.xlu0
    %4349 = vxpose.xlu0.b32.start [1/16] %v4016, 128
    %4350 = vxpose.xlu0.b32.cont [2/16] %v4021, 128
    %4351 = vxpose.xlu0.b32.cont [3/16] 0.0, 128
    %4352 = vxpose.xlu0.b32.cont [4/16] 0.0, 128
    %4353 = vxpose.xlu0.b32.cont [5/16] 0.0, 128
    %4354 = vxpose.xlu0.b32.cont [6/16] 0.0, 128
    %4355 = vxpose.xlu0.b32.cont [7/16] 0.0, 128
    %4356 = vxpose.xlu0.b32.cont [8/16] 0.0, 128
    %4357 = vxpose.xlu0.b32.cont [9/16] 0.0, 128
    %4358 = vxpose.xlu0.b32.cont [10/16] 0.0, 128
    %4359 = vxpose.xlu0.b32.cont [11/16] 0.0, 128
    %4360 = vxpose.xlu0.b32.cont [12/16] 0.0, 128
    %4361 = vxpose.xlu0.b32.cont [13/16] 0.0, 128
    %4362 = vxpose.xlu0.b32.cont [14/16] 0.0, 128
    %4363 = vxpose.xlu0.b32.cont [15/16] 0.0, 128
    %4364 = vxpose.xlu0.b32.end [16/16] 0.0, 128
    %v4365 = vpop.trf.xlu0
    %v4366 = vpop.trf.xlu0
    %v4367 = vpop.trf.xlu0
    %v4368 = vpop.trf.xlu0
    %v4369 = vpop.trf.xlu0
    %v4370 = vpop.trf.xlu0
    %v4371 = vpop.trf.xlu0
    %v4372 = vpop.trf.xlu0
    %v4373 = vpop.trf.xlu0
    %v4374 = vpop.trf.xlu0
    %v4375 = vpop.trf.xlu0
    %v4376 = vpop.trf.xlu0
    %v4377 = vpop.trf.xlu0
    %v4378 = vpop.trf.xlu0
    %v4379 = vpop.trf.xlu0
    %v4380 = vpop.trf.xlu0
    %4381 = vxpose.xlu0.b32.start [1/16] %v4103, 128
    %4382 = vxpose.xlu0.b32.cont [2/16] %v4108, 128
    %4383 = vxpose.xlu0.b32.cont [3/16] 0.0, 128
    %4384 = vxpose.xlu0.b32.cont [4/16] 0.0, 128
    %4385 = vxpose.xlu0.b32.cont [5/16] 0.0, 128
    %4386 = vxpose.xlu0.b32.cont [6/16] 0.0, 128
    %4387 = vxpose.xlu0.b32.cont [7/16] 0.0, 128
    %4388 = vxpose.xlu0.b32.cont [8/16] 0.0, 128
    %4389 = vxpose.xlu0.b32.cont [9/16] 0.0, 128
    %4390 = vxpose.xlu0.b32.cont [10/16] 0.0, 128
    %4391 = vxpose.xlu0.b32.cont [11/16] 0.0, 128
    %4392 = vxpose.xlu0.b32.cont [12/16] 0.0, 128
    %4393 = vxpose.xlu0.b32.cont [13/16] 0.0, 128
    %4394 = vxpose.xlu0.b32.cont [14/16] 0.0, 128
    %4395 = vxpose.xlu0.b32.cont [15/16] 0.0, 128
    %4396 = vxpose.xlu0.b32.end [16/16] 0.0, 128
    %v4397 = vpop.trf.xlu0
    %v4398 = vpop.trf.xlu0
    %v4399 = vpop.trf.xlu0
    %v4400 = vpop.trf.xlu0
    %v4401 = vpop.trf.xlu0
    %v4402 = vpop.trf.xlu0
    %v4403 = vpop.trf.xlu0
    %v4404 = vpop.trf.xlu0
    %v4405 = vpop.trf.xlu0
    %v4406 = vpop.trf.xlu0
    %v4407 = vpop.trf.xlu0
    %v4408 = vpop.trf.xlu0
    %v4409 = vpop.trf.xlu0
    %v4410 = vpop.trf.xlu0
    %v4411 = vpop.trf.xlu0
    %v4412 = vpop.trf.xlu0
    %4413 = vxpose.xlu0.b32.start [1/16] %v4190, 128
    %4414 = vxpose.xlu0.b32.cont [2/16] %v4195, 128
    %4415 = vxpose.xlu0.b32.cont [3/16] 0.0, 128
    %4416 = vxpose.xlu0.b32.cont [4/16] 0.0, 128
    %4417 = vxpose.xlu0.b32.cont [5/16] 0.0, 128
    %4418 = vxpose.xlu0.b32.cont [6/16] 0.0, 128
    %4419 = vxpose.xlu0.b32.cont [7/16] 0.0, 128
    %4420 = vxpose.xlu0.b32.cont [8/16] 0.0, 128
    %4421 = vxpose.xlu0.b32.cont [9/16] 0.0, 128
    %4422 = vxpose.xlu0.b32.cont [10/16] 0.0, 128
    %4423 = vxpose.xlu0.b32.cont [11/16] 0.0, 128
    %4424 = vxpose.xlu0.b32.cont [12/16] 0.0, 128
    %4425 = vxpose.xlu0.b32.cont [13/16] 0.0, 128
    %4426 = vxpose.xlu0.b32.cont [14/16] 0.0, 128
    %4427 = vxpose.xlu0.b32.cont [15/16] 0.0, 128
    %4428 = vxpose.xlu0.b32.end [16/16] 0.0, 128
    %v4429 = vpop.trf.xlu0
    %v4430 = vpop.trf.xlu0
    %v4431 = vpop.trf.xlu0
    %v4432 = vpop.trf.xlu0
    %v4433 = vpop.trf.xlu0
    %v4434 = vpop.trf.xlu0
    %v4435 = vpop.trf.xlu0
    %v4436 = vpop.trf.xlu0
    %v4437 = vpop.trf.xlu0
    %v4438 = vpop.trf.xlu0
    %v4439 = vpop.trf.xlu0
    %v4440 = vpop.trf.xlu0
    %v4441 = vpop.trf.xlu0
    %v4442 = vpop.trf.xlu0
    %v4443 = vpop.trf.xlu0
    %v4444 = vpop.trf.xlu0
    %4445 = vxpose.xlu0.b32.start [1/16] %v4277, 128
    %4446 = vxpose.xlu0.b32.cont [2/16] %v4282, 128
    %4447 = vxpose.xlu0.b32.cont [3/16] 0.0, 128
    %4448 = vxpose.xlu0.b32.cont [4/16] 0.0, 128
    %4449 = vxpose.xlu0.b32.cont [5/16] 0.0, 128
    %4450 = vxpose.xlu0.b32.cont [6/16] 0.0, 128
    %4451 = vxpose.xlu0.b32.cont [7/16] 0.0, 128
    %4452 = vxpose.xlu0.b32.cont [8/16] 0.0, 128
    %4453 = vxpose.xlu0.b32.cont [9/16] 0.0, 128
    %4454 = vxpose.xlu0.b32.cont [10/16] 0.0, 128
    %4455 = vxpose.xlu0.b32.cont [11/16] 0.0, 128
    %4456 = vxpose.xlu0.b32.cont [12/16] 0.0, 128
    %4457 = vxpose.xlu0.b32.cont [13/16] 0.0, 128
    %4458 = vxpose.xlu0.b32.cont [14/16] 0.0, 128
    %4459 = vxpose.xlu0.b32.cont [15/16] 0.0, 128
    %4460 = vxpose.xlu0.b32.end [16/16] 0.0, 128
    %v4461 = vpop.trf.xlu0
    %v4462 = vpop.trf.xlu0
    %v4463 = vpop.trf.xlu0
    %v4464 = vpop.trf.xlu0
    %v4465 = vpop.trf.xlu0
    %v4466 = vpop.trf.xlu0
    %v4467 = vpop.trf.xlu0
    %v4468 = vpop.trf.xlu0
    %v4469 = vpop.trf.xlu0
    %v4470 = vpop.trf.xlu0
    %v4471 = vpop.trf.xlu0
    %v4472 = vpop.trf.xlu0
    %v4473 = vpop.trf.xlu0
    %v4474 = vpop.trf.xlu0
    %v4475 = vpop.trf.xlu0
    %v4476 = vpop.trf.xlu0
    %v4477 = vcombine.low %v4301, %v4365
    %v4478 = vcombine.high %v4301, %v4365
    %v4480 = vunpack.c.l.s4 1983009808
    %v4481 = vunpack.c.0.s8 %v4480
    %v4482 = vlaneseq
    %v4483 = vshrl.u32 %v4482, 7
    %v4484 = vsub.s32 %v4481, %v4483
    %v4485 = vrot.slane %v4477, %v4484
    %v4487 = vunpack.c.l.s4 1983009808
    %v4488 = vunpack.c.0.s8 %v4487
    %v4489 = vlaneseq
    %v4490 = vshrl.u32 %v4489, 7
    %v4491 = vsub.s32 %v4488, %v4490
    %v4492 = vrot.slane %v4478, %v4491
    %v4493 = vcombine.low %v4333, %v4397
    %v4494 = vcombine.high %v4333, %v4397
    %v4496 = vunpack.c.l.s4 1983009808
    %v4497 = vunpack.c.0.s8 %v4496
    %v4498 = vlaneseq
    %v4499 = vshrl.u32 %v4498, 7
    %v4500 = vsub.s32 %v4497, %v4499
    %v4501 = vrot.slane %v4493, %v4500
    %v4503 = vunpack.c.l.s4 1983009808
    %v4504 = vunpack.c.0.s8 %v4503
    %v4505 = vlaneseq
    %v4506 = vshrl.u32 %v4505, 7
    %v4507 = vsub.s32 %v4504, %v4506
    %v4508 = vrot.slane %v4494, %v4507
    %v4509 = vcombine.high %v4429, 0.0
    %v4511 = vunpack.c.l.s4 1983009808
    %v4512 = vunpack.c.0.s8 %v4511
    %v4513 = vlaneseq
    %v4514 = vshrl.u32 %v4513, 7
    %v4515 = vsub.s32 %v4512, %v4514
    %v4516 = vrot.slane %v4429, %v4515
    %v4518 = vunpack.c.l.s4 1983009808
    %v4519 = vunpack.c.0.s8 %v4518
    %v4520 = vlaneseq
    %v4521 = vshrl.u32 %v4520, 7
    %v4522 = vsub.s32 %v4519, %v4521
    %v4523 = vrot.slane %v4509, %v4522
    %v4524 = vcombine.high %v4461, 0.0
    %v4526 = vunpack.c.l.s4 1983009808
    %v4527 = vunpack.c.0.s8 %v4526
    %v4528 = vlaneseq
    %v4529 = vshrl.u32 %v4528, 7
    %v4530 = vsub.s32 %v4527, %v4529
    %v4531 = vrot.slane %v4461, %v4530
    %v4533 = vunpack.c.l.s4 1983009808
    %v4534 = vunpack.c.0.s8 %v4533
    %v4535 = vlaneseq
    %v4536 = vshrl.u32 %v4535, 7
    %v4537 = vsub.s32 %v4534, %v4536
    %v4538 = vrot.slane %v4524, %v4537
    %v4539 = vcombine.low %v4485, %v4501
    %v4540 = vcombine.high %v4485, %v4501
    %v4542 = vunpack.c.l.s4 1934713408
    %v4543 = vunpack.c.0.s8 %v4542
    %v4544 = vlaneseq
    %v4545 = vshrl.u32 %v4544, 7
    %v4546 = vsub.s32 %v4543, %v4545
    %v4547 = vrot.slane %v4539, %v4546
    %v4549 = vunpack.c.l.s4 1934713408
    %v4550 = vunpack.c.0.s8 %v4549
    %v4551 = vlaneseq
    %v4552 = vshrl.u32 %v4551, 7
    %v4553 = vsub.s32 %v4550, %v4552
    %v4554 = vrot.slane %v4540, %v4553
    %v4555 = vcombine.low %v4492, %v4508
    %v4556 = vcombine.high %v4492, %v4508
    %v4558 = vunpack.c.l.s4 1934713408
    %v4559 = vunpack.c.0.s8 %v4558
    %v4560 = vlaneseq
    %v4561 = vshrl.u32 %v4560, 7
    %v4562 = vsub.s32 %v4559, %v4561
    %v4563 = vrot.slane %v4555, %v4562
    %v4565 = vunpack.c.l.s4 1934713408
    %v4566 = vunpack.c.0.s8 %v4565
    %v4567 = vlaneseq
    %v4568 = vshrl.u32 %v4567, 7
    %v4569 = vsub.s32 %v4566, %v4568
    %v4570 = vrot.slane %v4556, %v4569
    %v4571 = vcombine.low %v4516, %v4531
    %v4572 = vcombine.high %v4516, %v4531
    %v4574 = vunpack.c.l.s4 1934713408
    %v4575 = vunpack.c.0.s8 %v4574
    %v4576 = vlaneseq
    %v4577 = vshrl.u32 %v4576, 7
    %v4578 = vsub.s32 %v4575, %v4577
    %v4579 = vrot.slane %v4571, %v4578
    %v4581 = vunpack.c.l.s4 1934713408
    %v4582 = vunpack.c.0.s8 %v4581
    %v4583 = vlaneseq
    %v4584 = vshrl.u32 %v4583, 7
    %v4585 = vsub.s32 %v4582, %v4584
    %v4586 = vrot.slane %v4572, %v4585
    %v4587 = vcombine.low %v4523, %v4538
    %v4588 = vcombine.high %v4523, %v4538
    %v4590 = vunpack.c.l.s4 1934713408
    %v4591 = vunpack.c.0.s8 %v4590
    %v4592 = vlaneseq
    %v4593 = vshrl.u32 %v4592, 7
    %v4594 = vsub.s32 %v4591, %v4593
    %v4595 = vrot.slane %v4587, %v4594
    %v4597 = vunpack.c.l.s4 1934713408
    %v4598 = vunpack.c.0.s8 %v4597
    %v4599 = vlaneseq
    %v4600 = vshrl.u32 %v4599, 7
    %v4601 = vsub.s32 %v4598, %v4600
    %v4602 = vrot.slane %v4588, %v4601
    %v4603 = vcombine.low %v4547, %v4579
    %v4604 = vcombine.high %v4547, %v4579
    %v4605 = vcombine.low %v4554, %v4586
    %v4606 = vcombine.high %v4554, %v4586
    %v4607 = vcombine.low %v4563, %v4595
    %v4608 = vcombine.high %v4563, %v4595
    %v4609 = vcombine.low %v4570, %v4602
    %v4610 = vcombine.high %v4570, %v4602
    %v4611 = vcombine.low %v4302, %v4366
    %v4612 = vcombine.high %v4302, %v4366
    %v4614 = vunpack.c.l.s4 1983009808
    %v4615 = vunpack.c.0.s8 %v4614
    %v4616 = vlaneseq
    %v4617 = vshrl.u32 %v4616, 7
    %v4618 = vsub.s32 %v4615, %v4617
    %v4619 = vrot.slane %v4611, %v4618
    %v4621 = vunpack.c.l.s4 1983009808
    %v4622 = vunpack.c.0.s8 %v4621
    %v4623 = vlaneseq
    %v4624 = vshrl.u32 %v4623, 7
    %v4625 = vsub.s32 %v4622, %v4624
    %v4626 = vrot.slane %v4612, %v4625
    %v4627 = vcombine.low %v4334, %v4398
    %v4628 = vcombine.high %v4334, %v4398
    %v4630 = vunpack.c.l.s4 1983009808
    %v4631 = vunpack.c.0.s8 %v4630
    %v4632 = vlaneseq
    %v4633 = vshrl.u32 %v4632, 7
    %v4634 = vsub.s32 %v4631, %v4633
    %v4635 = vrot.slane %v4627, %v4634
    %v4637 = vunpack.c.l.s4 1983009808
    %v4638 = vunpack.c.0.s8 %v4637
    %v4639 = vlaneseq
    %v4640 = vshrl.u32 %v4639, 7
    %v4641 = vsub.s32 %v4638, %v4640
    %v4642 = vrot.slane %v4628, %v4641
    %v4643 = vcombine.high %v4430, 0.0
    %v4645 = vunpack.c.l.s4 1983009808
    %v4646 = vunpack.c.0.s8 %v4645
    %v4647 = vlaneseq
    %v4648 = vshrl.u32 %v4647, 7
    %v4649 = vsub.s32 %v4646, %v4648
    %v4650 = vrot.slane %v4430, %v4649
    %v4652 = vunpack.c.l.s4 1983009808
    %v4653 = vunpack.c.0.s8 %v4652
    %v4654 = vlaneseq
    %v4655 = vshrl.u32 %v4654, 7
    %v4656 = vsub.s32 %v4653, %v4655
    %v4657 = vrot.slane %v4643, %v4656
    %v4658 = vcombine.high %v4462, 0.0
    %v4660 = vunpack.c.l.s4 1983009808
    %v4661 = vunpack.c.0.s8 %v4660
    %v4662 = vlaneseq
    %v4663 = vshrl.u32 %v4662, 7
    %v4664 = vsub.s32 %v4661, %v4663
    %v4665 = vrot.slane %v4462, %v4664
    %v4667 = vunpack.c.l.s4 1983009808
    %v4668 = vunpack.c.0.s8 %v4667
    %v4669 = vlaneseq
    %v4670 = vshrl.u32 %v4669, 7
    %v4671 = vsub.s32 %v4668, %v4670
    %v4672 = vrot.slane %v4658, %v4671
    %v4673 = vcombine.low %v4619, %v4635
    %v4674 = vcombine.high %v4619, %v4635
    %v4676 = vunpack.c.l.s4 1934713408
    %v4677 = vunpack.c.0.s8 %v4676
    %v4678 = vlaneseq
    %v4679 = vshrl.u32 %v4678, 7
    %v4680 = vsub.s32 %v4677, %v4679
    %v4681 = vrot.slane %v4673, %v4680
    %v4683 = vunpack.c.l.s4 1934713408
    %v4684 = vunpack.c.0.s8 %v4683
    %v4685 = vlaneseq
    %v4686 = vshrl.u32 %v4685, 7
    %v4687 = vsub.s32 %v4684, %v4686
    %v4688 = vrot.slane %v4674, %v4687
    %v4689 = vcombine.low %v4626, %v4642
    %v4690 = vcombine.high %v4626, %v4642
    %v4692 = vunpack.c.l.s4 1934713408
    %v4693 = vunpack.c.0.s8 %v4692
    %v4694 = vlaneseq
    %v4695 = vshrl.u32 %v4694, 7
    %v4696 = vsub.s32 %v4693, %v4695
    %v4697 = vrot.slane %v4689, %v4696
    %v4699 = vunpack.c.l.s4 1934713408
    %v4700 = vunpack.c.0.s8 %v4699
    %v4701 = vlaneseq
    %v4702 = vshrl.u32 %v4701, 7
    %v4703 = vsub.s32 %v4700, %v4702
    %v4704 = vrot.slane %v4690, %v4703
    %v4705 = vcombine.low %v4650, %v4665
    %v4706 = vcombine.high %v4650, %v4665
    %v4708 = vunpack.c.l.s4 1934713408
    %v4709 = vunpack.c.0.s8 %v4708
    %v4710 = vlaneseq
    %v4711 = vshrl.u32 %v4710, 7
    %v4712 = vsub.s32 %v4709, %v4711
    %v4713 = vrot.slane %v4705, %v4712
    %v4715 = vunpack.c.l.s4 1934713408
    %v4716 = vunpack.c.0.s8 %v4715
    %v4717 = vlaneseq
    %v4718 = vshrl.u32 %v4717, 7
    %v4719 = vsub.s32 %v4716, %v4718
    %v4720 = vrot.slane %v4706, %v4719
    %v4721 = vcombine.low %v4657, %v4672
    %v4722 = vcombine.high %v4657, %v4672
    %v4724 = vunpack.c.l.s4 1934713408
    %v4725 = vunpack.c.0.s8 %v4724
    %v4726 = vlaneseq
    %v4727 = vshrl.u32 %v4726, 7
    %v4728 = vsub.s32 %v4725, %v4727
    %v4729 = vrot.slane %v4721, %v4728
    %v4731 = vunpack.c.l.s4 1934713408
    %v4732 = vunpack.c.0.s8 %v4731
    %v4733 = vlaneseq
    %v4734 = vshrl.u32 %v4733, 7
    %v4735 = vsub.s32 %v4732, %v4734
    %v4736 = vrot.slane %v4722, %v4735
    %v4737 = vcombine.low %v4681, %v4713
    %v4738 = vcombine.high %v4681, %v4713
    %v4739 = vcombine.low %v4688, %v4720
    %v4740 = vcombine.high %v4688, %v4720
    %v4741 = vcombine.low %v4697, %v4729
    %v4742 = vcombine.high %v4697, %v4729
    %v4743 = vcombine.low %v4704, %v4736
    %v4744 = vcombine.high %v4704, %v4736
    %v4745 = vcombine.low %v4603, %v4605
    %v4746 = vcombine.high %v4603, %v4605
    %v4748 = vunpack.c.l.s4 1983009808
    %v4749 = vunpack.c.0.s8 %v4748
    %v4750 = vlaneseq
    %v4751 = vshrl.u32 %v4750, 7
    %v4752 = vsub.s32 %v4749, %v4751
    %v4753 = vrot.slane %v4745, %v4752
    %v4755 = vunpack.c.l.s4 1983009808
    %v4756 = vunpack.c.0.s8 %v4755
    %v4757 = vlaneseq
    %v4758 = vshrl.u32 %v4757, 7
    %v4759 = vsub.s32 %v4756, %v4758
    %v4760 = vrot.slane %v4746, %v4759
    %v4761 = vcombine.low %v4604, %v4606
    %v4762 = vcombine.high %v4604, %v4606
    %v4764 = vunpack.c.l.s4 1983009808
    %v4765 = vunpack.c.0.s8 %v4764
    %v4766 = vlaneseq
    %v4767 = vshrl.u32 %v4766, 7
    %v4768 = vsub.s32 %v4765, %v4767
    %v4769 = vrot.slane %v4761, %v4768
    %v4771 = vunpack.c.l.s4 1983009808
    %v4772 = vunpack.c.0.s8 %v4771
    %v4773 = vlaneseq
    %v4774 = vshrl.u32 %v4773, 7
    %v4775 = vsub.s32 %v4772, %v4774
    %v4776 = vrot.slane %v4762, %v4775
    %v4777 = vcombine.low %v4607, %v4609
    %v4778 = vcombine.high %v4607, %v4609
    %v4780 = vunpack.c.l.s4 1983009808
    %v4781 = vunpack.c.0.s8 %v4780
    %v4782 = vlaneseq
    %v4783 = vshrl.u32 %v4782, 7
    %v4784 = vsub.s32 %v4781, %v4783
    %v4785 = vrot.slane %v4777, %v4784
    %v4787 = vunpack.c.l.s4 1983009808
    %v4788 = vunpack.c.0.s8 %v4787
    %v4789 = vlaneseq
    %v4790 = vshrl.u32 %v4789, 7
    %v4791 = vsub.s32 %v4788, %v4790
    %v4792 = vrot.slane %v4778, %v4791
    %v4793 = vcombine.low %v4608, %v4610
    %v4794 = vcombine.high %v4608, %v4610
    %v4796 = vunpack.c.l.s4 1983009808
    %v4797 = vunpack.c.0.s8 %v4796
    %v4798 = vlaneseq
    %v4799 = vshrl.u32 %v4798, 7
    %v4800 = vsub.s32 %v4797, %v4799
    %v4801 = vrot.slane %v4793, %v4800
    %v4803 = vunpack.c.l.s4 1983009808
    %v4804 = vunpack.c.0.s8 %v4803
    %v4805 = vlaneseq
    %v4806 = vshrl.u32 %v4805, 7
    %v4807 = vsub.s32 %v4804, %v4806
    %v4808 = vrot.slane %v4794, %v4807
    %v4809 = vcombine.low %v4753, %v4769
    %v4810 = vcombine.high %v4753, %v4769
    %v4812 = vunpack.c.l.s4 1934713408
    %v4813 = vunpack.c.0.s8 %v4812
    %v4814 = vlaneseq
    %v4815 = vshrl.u32 %v4814, 7
    %v4816 = vsub.s32 %v4813, %v4815
    %v4817 = vrot.slane %v4809, %v4816
    %v4819 = vunpack.c.l.s4 1934713408
    %v4820 = vunpack.c.0.s8 %v4819
    %v4821 = vlaneseq
    %v4822 = vshrl.u32 %v4821, 7
    %v4823 = vsub.s32 %v4820, %v4822
    %v4824 = vrot.slane %v4810, %v4823
    %v4825 = vcombine.low %v4760, %v4776
    %v4827 = vunpack.c.l.s4 1934713408
    %v4828 = vunpack.c.0.s8 %v4827
    %v4829 = vlaneseq
    %v4830 = vshrl.u32 %v4829, 7
    %v4831 = vsub.s32 %v4828, %v4830
    %v4832 = vrot.slane %v4825, %v4831
    %v4833 = vcombine.low %v4785, %v4801
    %v4834 = vcombine.high %v4785, %v4801
    %v4836 = vunpack.c.l.s4 1934713408
    %v4837 = vunpack.c.0.s8 %v4836
    %v4838 = vlaneseq
    %v4839 = vshrl.u32 %v4838, 7
    %v4840 = vsub.s32 %v4837, %v4839
    %v4841 = vrot.slane %v4833, %v4840
    %v4843 = vunpack.c.l.s4 1934713408
    %v4844 = vunpack.c.0.s8 %v4843
    %v4845 = vlaneseq
    %v4846 = vshrl.u32 %v4845, 7
    %v4847 = vsub.s32 %v4844, %v4846
    %v4848 = vrot.slane %v4834, %v4847
    %v4849 = vcombine.low %v4792, %v4808
    %v4851 = vunpack.c.l.s4 1934713408
    %v4852 = vunpack.c.0.s8 %v4851
    %v4853 = vlaneseq
    %v4854 = vshrl.u32 %v4853, 7
    %v4855 = vsub.s32 %v4852, %v4854
    %v4856 = vrot.slane %v4849, %v4855
    %v4857 = vcombine.low %v4817, %v4841
    %v4858 = vcombine.high %v4817, %v4841
    %v4859 = vcombine.low %v4824, %v4848
    %v4860 = vcombine.high %v4824, %v4848
    %v4861 = vcombine.low %v4832, %v4856
    %v4862 = vcombine.high %v4832, %v4856
    %v4863 = vcombine.low %v4737, %v4739
    %v4864 = vcombine.high %v4737, %v4739
    %v4866 = vunpack.c.l.s4 1983009808
    %v4867 = vunpack.c.0.s8 %v4866
    %v4868 = vlaneseq
    %v4869 = vshrl.u32 %v4868, 7
    %v4870 = vsub.s32 %v4867, %v4869
    %v4871 = vrot.slane %v4863, %v4870
    %v4873 = vunpack.c.l.s4 1983009808
    %v4874 = vunpack.c.0.s8 %v4873
    %v4875 = vlaneseq
    %v4876 = vshrl.u32 %v4875, 7
    %v4877 = vsub.s32 %v4874, %v4876
    %v4878 = vrot.slane %v4864, %v4877
    %v4879 = vcombine.low %v4738, %v4740
    %v4880 = vcombine.high %v4738, %v4740
    %v4882 = vunpack.c.l.s4 1983009808
    %v4883 = vunpack.c.0.s8 %v4882
    %v4884 = vlaneseq
    %v4885 = vshrl.u32 %v4884, 7
    %v4886 = vsub.s32 %v4883, %v4885
    %v4887 = vrot.slane %v4879, %v4886
    %v4889 = vunpack.c.l.s4 1983009808
    %v4890 = vunpack.c.0.s8 %v4889
    %v4891 = vlaneseq
    %v4892 = vshrl.u32 %v4891, 7
    %v4893 = vsub.s32 %v4890, %v4892
    %v4894 = vrot.slane %v4880, %v4893
    %v4895 = vcombine.low %v4741, %v4743
    %v4896 = vcombine.high %v4741, %v4743
    %v4898 = vunpack.c.l.s4 1983009808
    %v4899 = vunpack.c.0.s8 %v4898
    %v4900 = vlaneseq
    %v4901 = vshrl.u32 %v4900, 7
    %v4902 = vsub.s32 %v4899, %v4901
    %v4903 = vrot.slane %v4895, %v4902
    %v4905 = vunpack.c.l.s4 1983009808
    %v4906 = vunpack.c.0.s8 %v4905
    %v4907 = vlaneseq
    %v4908 = vshrl.u32 %v4907, 7
    %v4909 = vsub.s32 %v4906, %v4908
    %v4910 = vrot.slane %v4896, %v4909
    %v4911 = vcombine.low %v4742, %v4744
    %v4912 = vcombine.high %v4742, %v4744
    %v4914 = vunpack.c.l.s4 1983009808
    %v4915 = vunpack.c.0.s8 %v4914
    %v4916 = vlaneseq
    %v4917 = vshrl.u32 %v4916, 7
    %v4918 = vsub.s32 %v4915, %v4917
    %v4919 = vrot.slane %v4911, %v4918
    %v4921 = vunpack.c.l.s4 1983009808
    %v4922 = vunpack.c.0.s8 %v4921
    %v4923 = vlaneseq
    %v4924 = vshrl.u32 %v4923, 7
    %v4925 = vsub.s32 %v4922, %v4924
    %v4926 = vrot.slane %v4912, %v4925
    %v4927 = vcombine.low %v4871, %v4887
    %v4928 = vcombine.high %v4871, %v4887
    %v4930 = vunpack.c.l.s4 1934713408
    %v4931 = vunpack.c.0.s8 %v4930
    %v4932 = vlaneseq
    %v4933 = vshrl.u32 %v4932, 7
    %v4934 = vsub.s32 %v4931, %v4933
    %v4935 = vrot.slane %v4927, %v4934
    %v4937 = vunpack.c.l.s4 1934713408
    %v4938 = vunpack.c.0.s8 %v4937
    %v4939 = vlaneseq
    %v4940 = vshrl.u32 %v4939, 7
    %v4941 = vsub.s32 %v4938, %v4940
    %v4942 = vrot.slane %v4928, %v4941
    %v4943 = vcombine.low %v4878, %v4894
    %v4945 = vunpack.c.l.s4 1934713408
    %v4946 = vunpack.c.0.s8 %v4945
    %v4947 = vlaneseq
    %v4948 = vshrl.u32 %v4947, 7
    %v4949 = vsub.s32 %v4946, %v4948
    %v4950 = vrot.slane %v4943, %v4949
    %v4951 = vcombine.low %v4903, %v4919
    %v4952 = vcombine.high %v4903, %v4919
    %v4954 = vunpack.c.l.s4 1934713408
    %v4955 = vunpack.c.0.s8 %v4954
    %v4956 = vlaneseq
    %v4957 = vshrl.u32 %v4956, 7
    %v4958 = vsub.s32 %v4955, %v4957
    %v4959 = vrot.slane %v4951, %v4958
    %v4961 = vunpack.c.l.s4 1934713408
    %v4962 = vunpack.c.0.s8 %v4961
    %v4963 = vlaneseq
    %v4964 = vshrl.u32 %v4963, 7
    %v4965 = vsub.s32 %v4962, %v4964
    %v4966 = vrot.slane %v4952, %v4965
    %v4967 = vcombine.low %v4910, %v4926
    %v4969 = vunpack.c.l.s4 1934713408
    %v4970 = vunpack.c.0.s8 %v4969
    %v4971 = vlaneseq
    %v4972 = vshrl.u32 %v4971, 7
    %v4973 = vsub.s32 %v4970, %v4972
    %v4974 = vrot.slane %v4967, %v4973
    %v4975 = vcombine.low %v4935, %v4959
    %v4976 = vcombine.high %v4935, %v4959
    %v4977 = vcombine.low %v4942, %v4966
    %v4978 = vcombine.high %v4942, %v4966
    %v4979 = vcombine.low %v4950, %v4974
    %v4980 = vcombine.high %v4950, %v4974
    %4983 = vrot.lane.b32.xlu0 %v4858, 16
    %v4984 = vpop.permute.xlu0 %4983
    %4985 = vrot.lane.b32.xlu0 %v4976, 16
    %v4986 = vpop.permute.xlu0 %4985
    %4991 = vrot.lane.b32.xlu0 %v4859, 32
    %v4992 = vpop.permute.xlu0 %4991
    %4993 = vrot.lane.b32.xlu0 %v4977, 32
    %v4994 = vpop.permute.xlu0 %4993
    %4999 = vrot.lane.b32.xlu0 %v4860, 48
    %v5000 = vpop.permute.xlu0 %4999
    %5001 = vrot.lane.b32.xlu0 %v4978, 48
    %v5002 = vpop.permute.xlu0 %5001
    %5007 = vrot.lane.b32.xlu0 %v4861, 64
    %v5008 = vpop.permute.xlu0 %5007
    %5009 = vrot.lane.b32.xlu0 %v4979, 64
    %v5010 = vpop.permute.xlu0 %5009
    %5015 = vrot.lane.b32.xlu0 %v4862, 80
    %v5016 = vpop.permute.xlu0 %5015
    %5017 = vrot.lane.b32.xlu0 %v4980, 80
    %v5018 = vpop.permute.xlu0 %5017
    %v5021 = vsel %vm588, %v4857, %v4984
    %v5022 = vsel %vm588, %v4975, %v4986
    %v5023 = vsel %vm2663, %v5021, %v4992
    %v5024 = vsel %vm2663, %v5022, %v4994
    %v5025 = vsel %vm2666, %v5023, %v5000
    %v5026 = vsel %vm2666, %v5024, %v5002
    %v5027 = vsel %vm2669, %v5025, %v5008
    %v5028 = vsel %vm2669, %v5026, %v5010
    %v5029 = vsel %vm2672, %v5027, %v5016
    %v5030 = vsel %vm2672, %v5028, %v5018
    %v5031 = vpack.c.bf16 %v2674, %v2673
    %v5032 = vpack.c.bf16 %v5030, %v5029
    %v5033 = vld [vmem:[#allocation7] sm:$0xf]
    %v5034 = vld [vmem:[#allocation7 + $0x4] sm:$0xf]
    %v5035 = vld [vmem:[#allocation7 + $0x8] sm:$0xf]
    %v5036 = vld [vmem:[#allocation7 + $0xc] sm:$0xf]
    %v5037 = vld [vmem:[#allocation7 + $0x10] sm:$0xf]
    %v5038 = vld [vmem:[#allocation7 + $0x14] sm:$0xf]
    %v5039 = vld [vmem:[#allocation7 + $0x18] sm:$0xf]
    %v5040 = vld [vmem:[#allocation7 + $0x1c] sm:$0xf]
    %v5041 = vld [vmem:[#allocation7 + $0x20] sm:$0xf]
    %v5042 = vld [vmem:[#allocation7 + $0x24] sm:$0xf]
    %v5043 = vld [vmem:[#allocation7 + $0x28] sm:$0xf]
    %v5044 = vld [vmem:[#allocation7 + $0x2c] sm:$0xf]
    %v5045 = vld [vmem:[%s3] sm:$0x1]
    %v5047 = vlaneseq
    %v5048 = vshrl.u32 %v5047, 7
    %v5049 = vsub.s32 0, %v5048
    %v5050 = vrot.slane %v5045, %v5049
    %v5064 = vunpack.c.l.b16 %v5033
    %v5065 = vunpack.c.l.b16 %v5034
    %v5066 = vunpack.c.l.b16 %v5035
    %v5067 = vunpack.c.l.b16 %v5036
    %v5068 = vunpack.c.l.b16 %v5037
    %v5069 = vunpack.c.l.b16 %v5038
    %v5070 = vunpack.c.l.b16 %v5039
    %v5071 = vunpack.c.l.b16 %v5040
    %v5072 = vunpack.c.l.b16 %v5041
    %v5073 = vunpack.c.l.b16 %v5042
    %v5074 = vunpack.c.l.b16 %v5043
    %v5075 = vunpack.c.l.b16 %v5044
    %v5076 = vpack.c.b16 %v5065, %v5064
    %v5077 = vpack.c.b16 %v5067, %v5066
    %v5078 = vpack.c.b16 %v5069, %v5068
    %v5079 = vpack.c.b16 %v5071, %v5070
    %v5080 = vpack.c.b16 %v5073, %v5072
    %v5081 = vpack.c.b16 %v5075, %v5074
    %v5089 = vsel %vm194, %v5031, 0
    %v5092 = vsel %vm194, %v5032, 0
    %5094 = vmatprep.subr.bf16.mxu0 0
    %5095 = vmatpush1.bf16.msra.mxu0 %v5076
    %5096 = vmatprep.subr.bf16.mxu0 0
    %5097 = vmatpush1.bf16.msra.mxu0 %v5077
    %5098 = vmatprep.subr.bf16.mxu0 0
    %5099 = vmatpush1.bf16.msra.mxu0 %v5078
    %5100 = vmatprep.subr.bf16.mxu0 0
    %5101 = vmatpush1.bf16.msra.mxu0 %v5079
    %5102 = vmatprep.subr.bf16.mxu0 0
    %5103 = vmatpush1.bf16.msra.mxu0 %v5080
    %5104 = vmatprep.subr.bf16.mxu0 0
    %5105 = vmatpush1.bf16.msra.mxu0 %v5081
    %5106 = vmatprep.subr.bf16.mxu0 0
    %5107 = vmatpush1.bf16.msra.mxu0 0
    %5108 = vmatprep.subr.bf16.mxu0 0
    %5109 = vmatpush1.bf16.msra.mxu0 0
    %5110 = vmatprep.subr.bf16.mxu0 0
    %5111 = vmatpush1.bf16.msra.mxu0 0
    %5112 = vmatprep.subr.bf16.mxu0 0
    %5113 = vmatpush1.bf16.msra.mxu0 0
    %5114 = vmatprep.subr.bf16.mxu0 0
    %5115 = vmatpush1.bf16.msra.mxu0 0
    %5116 = vmatprep.subr.bf16.mxu0 0
    %5117 = vmatpush1.bf16.msra.mxu0 0
    %5118 = vmatprep.subr.bf16.mxu0 0
    %5119 = vmatpush1.bf16.msra.mxu0 0
    %5120 = vmatprep.subr.bf16.mxu0 0
    %5121 = vmatpush1.bf16.msra.mxu0 0
    %5122 = vmatprep.subr.bf16.mxu0 0
    %5123 = vmatpush1.bf16.msra.mxu0 0
    %5124 = vmatprep.subr.bf16.mxu0 0
    %5125 = vmatpush1.bf16.msra.mxu0 0
    %5126 = vmatprep.mubr.bf16.mxu0 0
    %5127 = vmatmul.mubr.bf16.gmra.mrb[0].mxu0 %v5089
    %v5128 = vpop.f32.mrb[0].mxu0
    %v5129 = vadd.f32 %v5050, %v5128
    %v5130 = vpop.f32.mrb[0].mxu0
    %v5131 = vpop.f32.mrb[0].mxu0
    %v5132 = vadd.f32 %v5050, %v5131
    %v5133 = vpop.f32.mrb[0].mxu0
    %5134 = vmatprep.mubr.bf16.mxu0 0
    %5135 = vmatmul.mubr.bf16.gmra.mrb[0].mxu0 %v5092
    %v5136 = vpop.f32.mrb[0].mxu0
    %v5137 = vadd.f32 %v5050, %v5136
    %v5138 = vpop.f32.mrb[0].mxu0
    %v5139 = vpop.f32.mrb[0].mxu0
    %v5140 = vadd.f32 %v5050, %v5139
    %v5141 = vpop.f32.mrb[0].mxu0
    %5142 = vdwg.mxu0
    %5143 = vst [vmem:[#allocation8] sm:$0xff] %v5129
    %5144 = vst [vmem:[#allocation8 + $0x8] sm:$0xff] %v5132
    %5145 = vst [vmem:[#allocation8 + $0x10] sm:$0xff] %v5137
    %5146 = vst [vmem:[#allocation8 + $0x18] sm:$0xff] %v5140
    // Predicated region
    $region30: #{tpu_custom_call.1} parent=1 // pred_check
      _
    $region31: #{tpu_custom_call.1} parent=1 // pred_check_branch
      %5148 = sbr.rel (0) target = $region33
    $region32: #{tpu_custom_call.1} parent=1 // pred_region
      %s5150 = ssub.s32 512, 512
      %5151 = vsyncadd [#allocation4], %s5150
      %s5152 = sshll.u32 [#allocation8], 4
      %s5153 = int_to_ptr.vmem [resolvable:$true] %s5152
      %5158 = dma.vmem_to_hbm [thread:$0]  %s5153, 512, %s4, [#allocation4], 128, 128, 8
    $region33: #{tpu_custom_call.1} parent=1 // pred_fallthru
      _
    // Predicated region
    $region34: #{tpu_custom_call.1} parent=1 // pred_check
      _
    $region35: #{tpu_custom_call.1} parent=1 // pred_check_branch
      %5160 = sbr.rel (0) target = $region37
    $region36: #{tpu_custom_call.1} parent=1 // pred_region
      %5161 = dma.done [#allocation4], 512
    $region37: #{tpu_custom_call.1} parent=1 // pred_fallthru
      _
    %5162 = vsyncpa [#allocation3], 1
    %5163 = vsyncpa [#allocation6], 1
    %5164 = vsyncpa [#allocation4], 1

</llo_original>
